<compile_context>
chip_gen: v6e
topology: v6e:2x2x1
jax: 0.10.0
libtpu: 0.0.40
codegen_flags: <defaults>
</compile_context>

<pallas_src>
import functools

import jax
import jax.numpy as jnp
from jax.experimental import pallas as pl
from jax.experimental.pallas import tpu as pltpu

# logical (PyTorch) dims
D_IN = 784
D_H = 400
D_Z = 40

# lane-padded dims used inside the kernel
D_H_P = 512            # 400 -> 512
D_Z_P = 128            # 40  -> 128
D_HEAD = 2 * D_Z_P     # fused [mu | var] head, lane-dense 256 wide


def _round_up(n, m):
    return ((n + m - 1) // m) * m


def _vae_generator_kernel(
    x_ref, eps_ref,
    w1_ref, b1_ref,
    wh_ref, bh_ref,
    w3_ref, b3_ref,
    w4_ref, b4_ref,
    recon_ref, head_ref,
):
    bf16 = jnp.bfloat16

    # encoder: h1 = relu(x @ W1 + b1)                  (bb,784) x (784,512)
    x = x_ref[...].astype(bf16)
    h1 = jnp.dot(x, w1_ref[...], preferred_element_type=jnp.float32) + b1_ref[...]
    h1 = jnp.maximum(h1, 0.0)

    # fused heads: [mu | var] = h1 @ [W21|W22] + [b21|b22]   (bb,512) x (512,256)
    head = jnp.dot(h1.astype(bf16), wh_ref[...],
                   preferred_element_type=jnp.float32) + bh_ref[...]
    head_ref[...] = head

    mu = head[:, :D_Z_P]     # padded lanes of mu/var are exactly zero
    var = head[:, D_Z_P:]
    # reparameterization; matches the PyTorch module: z = e.mul(var).add(mu)
    # (var is used directly as a scale, no exp(0.5*logvar) in the original)
    z = eps_ref[...] * var + mu

    # decoder: h3 = relu(z @ W3 + b3) ; recon = tanh(h3 @ W4 + b4)
    h3 = jnp.dot(z.astype(bf16), w3_ref[...],
                 preferred_element_type=jnp.float32) + b3_ref[...]
    h3 = jnp.maximum(h3, 0.0)
    recon = jnp.tanh(
        jnp.dot(h3.astype(bf16), w4_ref[...],
                preferred_element_type=jnp.float32) + b4_ref[...])
    recon_ref[...] = recon


@functools.partial(jax.jit, static_argnames=("block_b",))
def generator_forward(x, eps, packed_params, *, block_b=256):
    """VAE Generator forward. Returns (recon, mu, var) in logical shapes."""
    B = x.shape[0]
    bb = min(block_b, _round_up(B, 8))   # rows per grid step (multiple of 8)
    Bp = _round_up(B, bb)                # padded batch
    grid = Bp // bb

    xp = jnp.pad(x, ((0, Bp - B), (0, 0))) if Bp != B else x
    epsp = jnp.pad(eps, ((0, Bp - B), (0, D_Z_P - D_Z)))

    w1p, b1p, whp, bhp, w3p, b3p, w4p, b4p = packed_params

    def batch_spec(feat):
        return pl.BlockSpec((bb, feat), lambda i: (i, 0))

    def const_spec(arr):
        return pl.BlockSpec(arr.shape, lambda i: (0, 0))

    grid_spec = pltpu.PrefetchScalarGridSpec(
        num_scalar_prefetch=0,
        grid=(grid,),
        in_specs=[
            batch_spec(D_IN),      # x
            batch_spec(D_Z_P),     # eps (lane-padded)
            const_spec(w1p), const_spec(b1p),
            const_spec(whp), const_spec(bhp),
            const_spec(w3p), const_spec(b3p),
            const_spec(w4p), const_spec(b4p),
        ],
        out_specs=[
            batch_spec(D_IN),      # recon
            batch_spec(D_HEAD),    # fused [mu | var]
        ],
    )

    flops = 2 * Bp * (D_IN * D_H_P + D_H_P * D_HEAD + D_Z_P * D_H_P + D_H_P * D_IN)
    in_bytes = sum(a.size * a.dtype.itemsize
                   for a in (xp, epsp, w1p, b1p, whp, bhp, w3p, b3p, w4p, b4p))
    out_bytes = Bp * (D_IN + D_HEAD) * 4

    recon_p, head = pl.pallas_call(
        _vae_generator_kernel,
        out_shape=(
            jax.ShapeDtypeStruct((Bp, D_IN), jnp.float32),
            jax.ShapeDtypeStruct((Bp, D_HEAD), jnp.float32),
        ),
        grid_spec=grid_spec,
        compiler_params=pltpu.CompilerParams(
            dimension_semantics=("parallel",),
        ),
        cost_estimate=pl.CostEstimate(
            flops=flops,
            transcendentals=Bp * D_IN,
            bytes_accessed=in_bytes + out_bytes,
        ),
    )(xp, epsp, w1p, b1p, whp, bhp, w3p, b3p, w4p, b4p)

    recon = recon_p[:B]
    mu = head[:B, :D_Z]
    var = head[:B, D_Z_P:D_Z_P + D_Z]
    return recon, mu, var


def init_params(key):
    """torch.nn.Linear-like uniform init; weights stored (in, out)."""
    def linear(key, fan_in, fan_out):
        kw, kb = jax.random.split(key)
        bound = 1.0 / jnp.sqrt(fan_in)
        w = jax.random.uniform(kw, (fan_in, fan_out), jnp.float32, -bound, bound)
        b = jax.random.uniform(kb, (1, fan_out), jnp.float32, -bound, bound)
        return w, b

    k1, k21, k22, k3, k4 = jax.random.split(key, 5)
    w1, b1 = linear(k1, D_IN, D_H)
    w21, b21 = linear(k21, D_H, D_Z)
    w22, b22 = linear(k22, D_H, D_Z)
    w3, b3 = linear(k3, D_Z, D_H)
    w4, b4 = linear(k4, D_H, D_IN)
    return (w1, b1, w21, b21, w22, b22, w3, b3, w4, b4)


def pack_params(params):
    """Pad feature dims to lane multiples, fuse the mu/var heads, and cast the
    matmul weights to bf16 (biases stay f32). Done once, outside the kernel."""
    w1, b1, w21, b21, w22, b22, w3, b3, w4, b4 = params

    def pad2(a, rows, cols):
        return jnp.pad(a, ((0, rows - a.shape[0]), (0, cols - a.shape[1])))

    w1p = pad2(w1, D_IN, D_H_P).astype(jnp.bfloat16)      # (784, 512)
    b1p = pad2(b1, 1, D_H_P)                              # (1, 512) f32

    wh = jnp.zeros((D_H_P, D_HEAD), jnp.float32)
    wh = wh.at[:D_H, :D_Z].set(w21).at[:D_H, D_Z_P:D_Z_P + D_Z].set(w22)
    bh = jnp.zeros((1, D_HEAD), jnp.float32)
    bh = bh.at[:, :D_Z].set(b21).at[:, D_Z_P:D_Z_P + D_Z].set(b22)
    whp = wh.astype(jnp.bfloat16)                         # (512, 256)

    w3p = pad2(w3, D_Z_P, D_H_P).astype(jnp.bfloat16)     # (128, 512)
    b3p = pad2(b3, 1, D_H_P)                              # (1, 512) f32
    w4p = pad2(w4, D_H_P, D_IN).astype(jnp.bfloat16)      # (512, 784)
    b4p = pad2(b4, 1, D_IN)                               # (1, 784) f32
    return (w1p, b1p, whp, bh, w3p, b3p, w4p, b4p)


def reference_forward_f32(x, eps, params):
    """Pure-f32 reference (the original PyTorch math)."""
    w1, b1, w21, b21, w22, b22, w3, b3, w4, b4 = params
    h1 = jnp.maximum(x @ w1 + b1, 0.0)
    mu = h1 @ w21 + b21
    var = h1 @ w22 + b22
    z = eps * var + mu
    h3 = jnp.maximum(z @ w3 + b3, 0.0)
    recon = jnp.tanh(h3 @ w4 + b4)
    return recon, mu, var


def reference_forward_bf16(x, eps, params):
    """Mirrors the kernel's bf16-operand / f32-accumulate matmuls."""
    w1, b1, w21, b21, w22, b22, w3, b3, w4, b4 = params

    def dot(a, b):
        return jnp.dot(a.astype(jnp.bfloat16), b.astype(jnp.bfloat16),
                       preferred_element_type=jnp.float32)

    h1 = jnp.maximum(dot(x, w1) + b1, 0.0)
    mu = dot(h1, w21) + b21
    var = dot(h1, w22) + b22
    z = eps * var + mu
    h3 = jnp.maximum(dot(z, w3) + b3, 0.0)
    recon = jnp.tanh(dot(h3, w4) + b4)
    return recon, mu, var


if __name__ == "__main__":
    key = jax.random.PRNGKey(0)
    k_params, k_x, k_eps, k_x2, k_eps2 = jax.random.split(key, 5)

    params = init_params(k_params)
    packed = pack_params(params)

    # small batch -> single grid step
    B = 8
    x = jax.random.uniform(k_x, (B, D_IN), jnp.float32)       # "images" in [0,1)
    eps = jax.random.normal(k_eps, (B, D_Z), jnp.float32)     # torch.randn(B, 40)

    recon, mu, var = generator_forward(x, eps, packed)
    jax.block_until_ready((recon, mu, var))
    this_batch_size = x.shape[0]    # 4th return value of the PyTorch forward

    r_bf, mu_bf, var_bf = reference_forward_bf16(x, eps, params)
    assert jnp.allclose(recon, r_bf, atol=2e-3, rtol=2e-3)
    assert jnp.allclose(mu, mu_bf, atol=2e-3, rtol=2e-3)
    assert jnp.allclose(var, var_bf, atol=2e-3, rtol=2e-3)

    r32, mu32, var32 = reference_forward_f32(x, eps, params)
    assert jnp.allclose(recon, r32, atol=5e-2, rtol=5e-2)
    assert jnp.allclose(mu, mu32, atol=5e-2, rtol=5e-2)
    assert jnp.allclose(var, var32, atol=5e-2, rtol=5e-2)

    assert recon.shape == (B, D_IN) and mu.shape == (B, D_Z) and var.shape == (B, D_Z)
    assert this_batch_size == B

    # multi-step grid with batch padding: B=24, tile=16 -> padded to 32, 2 steps
    B2 = 24
    x2 = jax.random.uniform(k_x2, (B2, D_IN), jnp.float32)
    eps2 = jax.random.normal(k_eps2, (B2, D_Z), jnp.float32)
    recon2, mu2, var2 = generator_forward(x2, eps2, packed, block_b=16)
    jax.block_until_ready((recon2, mu2, var2))
    r2, m2, v2 = reference_forward_bf16(x2, eps2, params)
    assert jnp.allclose(recon2, r2, atol=2e-3, rtol=2e-3)
    assert jnp.allclose(mu2, m2, atol=2e-3, rtol=2e-3)
    assert jnp.allclose(var2, v2, atol=2e-3, rtol=2e-3)
    assert recon2.shape == (B2, D_IN) and mu2.shape == (B2, D_Z)

    print("KERNEL_OK")
</pallas_src>

<mosaic_0001>
module attributes {stable_mosaic.version = 11 : i64} {
  func.func @_vae_generator_kernel(%arg0: i32, %arg1: memref<8x784xf32, #tpu.memory_space<vmem>>, %arg2: memref<8x128xf32, #tpu.memory_space<vmem>>, %arg3: memref<784x512xbf16, #tpu.memory_space<vmem>>, %arg4: memref<1x512xf32, #tpu.memory_space<vmem>>, %arg5: memref<512x256xbf16, #tpu.memory_space<vmem>>, %arg6: memref<1x256xf32, #tpu.memory_space<vmem>>, %arg7: memref<128x512xbf16, #tpu.memory_space<vmem>>, %arg8: memref<1x512xf32, #tpu.memory_space<vmem>>, %arg9: memref<512x784xbf16, #tpu.memory_space<vmem>>, %arg10: memref<1x784xf32, #tpu.memory_space<vmem>>, %arg11: memref<8x784xf32, #tpu.memory_space<vmem>>, %arg12: memref<8x256xf32, #tpu.memory_space<vmem>>) attributes {dimension_semantics = [#tpu.dimension_semantics<parallel>], iteration_bounds = array<i64: 1>, scalar_prefetch = 0 : i64, scratch_operands = 0 : i64, tpu.core_type = #tpu.core_type<tc>, window_params = [{transform_indices = @transform_0, window_bounds = array<i64: 8, 784>}, {transform_indices = @transform_1, window_bounds = array<i64: 8, 128>}, {pipeline_mode = #tpu.pipeline_mode<synchronous>, transform_indices = @transform_2, window_bounds = array<i64: 784, 512>}, {pipeline_mode = #tpu.pipeline_mode<synchronous>, transform_indices = @transform_3, window_bounds = array<i64: 1, 512>}, {pipeline_mode = #tpu.pipeline_mode<synchronous>, transform_indices = @transform_4, window_bounds = array<i64: 512, 256>}, {pipeline_mode = #tpu.pipeline_mode<synchronous>, transform_indices = @transform_5, window_bounds = array<i64: 1, 256>}, {pipeline_mode = #tpu.pipeline_mode<synchronous>, transform_indices = @transform_6, window_bounds = array<i64: 128, 512>}, {pipeline_mode = #tpu.pipeline_mode<synchronous>, transform_indices = @transform_7, window_bounds = array<i64: 1, 512>}, {pipeline_mode = #tpu.pipeline_mode<synchronous>, transform_indices = @transform_8, window_bounds = array<i64: 512, 784>}, {pipeline_mode = #tpu.pipeline_mode<synchronous>, transform_indices = @transform_9, window_bounds = array<i64: 1, 784>}, {transform_indices = @transform_10, window_bounds = array<i64: 8, 784>}, {transform_indices = @transform_11, window_bounds = array<i64: 8, 256>}]} {
    %c0 = arith.constant 0 : index
    %c0_0 = arith.constant 0 : index
    %0 = vector.load %arg1[%c0, %c0_0] : memref<8x784xf32, #tpu.memory_space<vmem>>, vector<8x784xf32>
    %1 = arith.truncf %0 : vector<8x784xf32> to vector<8x784xbf16>
    %c0_1 = arith.constant 0 : index
    %c0_2 = arith.constant 0 : index
    %2 = vector.load %arg3[%c0_1, %c0_2] : memref<784x512xbf16, #tpu.memory_space<vmem>>, vector<784x512xbf16>
    %cst = arith.constant dense<0.000000e+00> : vector<8x512xf32>
    %3 = tpu.matmul %1, %2, %cst {dimension_numbers = #tpu.dot_dimension_numbers<[1], [0], [0], [1], [0, 0, 1, 1], [], []>} : vector<8x784xbf16>, vector<784x512xbf16>, vector<8x512xf32> -> vector<8x512xf32>
    %c0_3 = arith.constant 0 : index
    %c0_4 = arith.constant 0 : index
    %4 = vector.load %arg4[%c0_3, %c0_4] : memref<1x512xf32, #tpu.memory_space<vmem>>, vector<1x512xf32>
    %5 = vector.broadcast %4 : vector<1x512xf32> to vector<8x512xf32>
    %6 = arith.addf %3, %5 : vector<8x512xf32>
    %cst_5 = arith.constant 0.000000e+00 : f32
    %7 = vector.broadcast %cst_5 : f32 to vector<8x512xf32>
    %8 = arith.maximumf %6, %7 : vector<8x512xf32>
    %9 = arith.truncf %8 : vector<8x512xf32> to vector<8x512xbf16>
    %c0_6 = arith.constant 0 : index
    %c0_7 = arith.constant 0 : index
    %10 = vector.load %arg5[%c0_6, %c0_7] : memref<512x256xbf16, #tpu.memory_space<vmem>>, vector<512x256xbf16>
    %cst_8 = arith.constant dense<0.000000e+00> : vector<8x256xf32>
    %11 = tpu.matmul %9, %10, %cst_8 {dimension_numbers = #tpu.dot_dimension_numbers<[1], [0], [0], [1], [0, 0, 1, 1], [], []>} : vector<8x512xbf16>, vector<512x256xbf16>, vector<8x256xf32> -> vector<8x256xf32>
    %c0_9 = arith.constant 0 : index
    %c0_10 = arith.constant 0 : index
    %12 = vector.load %arg6[%c0_9, %c0_10] : memref<1x256xf32, #tpu.memory_space<vmem>>, vector<1x256xf32>
    %13 = vector.broadcast %12 : vector<1x256xf32> to vector<8x256xf32>
    %14 = arith.addf %11, %13 : vector<8x256xf32>
    %c0_11 = arith.constant 0 : index
    %c0_12 = arith.constant 0 : index
    %15 = vector.load %arg12[%c0_11, %c0_12] : memref<8x256xf32, #tpu.memory_space<vmem>>, vector<8x256xf32>
    tpu.vector_store %arg12[%c0_11, %c0_12], %14 {strides = array<i32>} : memref<8x256xf32, #tpu.memory_space<vmem>>, vector<8x256xf32>,
    %16 = vector.extract_strided_slice %14 {offsets = [0, 0], sizes = [8, 128], strides = [1, 1]} : vector<8x256xf32> to vector<8x128xf32>
    %17 = vector.extract_strided_slice %14 {offsets = [0, 128], sizes = [8, 128], strides = [1, 1]} : vector<8x256xf32> to vector<8x128xf32>
    %c0_13 = arith.constant 0 : index
    %c0_14 = arith.constant 0 : index
    %18 = vector.load %arg2[%c0_13, %c0_14] : memref<8x128xf32, #tpu.memory_space<vmem>>, vector<8x128xf32>
    %19 = arith.mulf %18, %17 : vector<8x128xf32>
    %20 = arith.addf %19, %16 : vector<8x128xf32>
    %21 = arith.truncf %20 : vector<8x128xf32> to vector<8x128xbf16>
    %c0_15 = arith.constant 0 : index
    %c0_16 = arith.constant 0 : index
    %22 = vector.load %arg7[%c0_15, %c0_16] : memref<128x512xbf16, #tpu.memory_space<vmem>>, vector<128x512xbf16>
    %cst_17 = arith.constant dense<0.000000e+00> : vector<8x512xf32>
    %23 = tpu.matmul %21, %22, %cst_17 {dimension_numbers = #tpu.dot_dimension_numbers<[1], [0], [0], [1], [0, 0, 1, 1], [], []>} : vector<8x128xbf16>, vector<128x512xbf16>, vector<8x512xf32> -> vector<8x512xf32>
    %c0_18 = arith.constant 0 : index
    %c0_19 = arith.constant 0 : index
    %24 = vector.load %arg8[%c0_18, %c0_19] : memref<1x512xf32, #tpu.memory_space<vmem>>, vector<1x512xf32>
    %25 = vector.broadcast %24 : vector<1x512xf32> to vector<8x512xf32>
    %26 = arith.addf %23, %25 : vector<8x512xf32>
    %cst_20 = arith.constant 0.000000e+00 : f32
    %27 = vector.broadcast %cst_20 : f32 to vector<8x512xf32>
    %28 = arith.maximumf %26, %27 : vector<8x512xf32>
    %29 = arith.truncf %28 : vector<8x512xf32> to vector<8x512xbf16>
    %c0_21 = arith.constant 0 : index
    %c0_22 = arith.constant 0 : index
    %30 = vector.load %arg9[%c0_21, %c0_22] : memref<512x784xbf16, #tpu.memory_space<vmem>>, vector<512x784xbf16>
    %cst_23 = arith.constant dense<0.000000e+00> : vector<8x784xf32>
    %31 = tpu.matmul %29, %30, %cst_23 {dimension_numbers = #tpu.dot_dimension_numbers<[1], [0], [0], [1], [0, 0, 1, 1], [], []>} : vector<8x512xbf16>, vector<512x784xbf16>, vector<8x784xf32> -> vector<8x784xf32>
    %c0_24 = arith.constant 0 : index
    %c0_25 = arith.constant 0 : index
    %32 = vector.load %arg10[%c0_24, %c0_25] : memref<1x784xf32, #tpu.memory_space<vmem>>, vector<1x784xf32>
    %33 = vector.broadcast %32 : vector<1x784xf32> to vector<8x784xf32>
    %34 = arith.addf %31, %33 : vector<8x784xf32>
    %35 = math.tanh %34 : vector<8x784xf32>
    %c0_26 = arith.constant 0 : index
    %c0_27 = arith.constant 0 : index
    %36 = vector.load %arg11[%c0_26, %c0_27] : memref<8x784xf32, #tpu.memory_space<vmem>>, vector<8x784xf32>
    tpu.vector_store %arg11[%c0_26, %c0_27], %35 {strides = array<i32>} : memref<8x784xf32, #tpu.memory_space<vmem>>, vector<8x784xf32>,
    return
  }
  func.func @transform_0(%arg0: i32) -> (i32, i32) {
    %c0_i32 = arith.constant 0 : i32
    %c0_i32_0 = arith.constant 0 : i32
    return %arg0, %c0_i32 : i32, i32
  }
  func.func @transform_1(%arg0: i32) -> (i32, i32) {
    %c0_i32 = arith.constant 0 : i32
    %c0_i32_0 = arith.constant 0 : i32
    return %arg0, %c0_i32 : i32, i32
  }
  func.func @transform_2(%arg0: i32) -> (i32, i32) {
    %c0_i32 = arith.constant 0 : i32
    %c0_i32_0 = arith.constant 0 : i32
    %c0_i32_1 = arith.constant 0 : i32
    return %c0_i32, %c0_i32_0 : i32, i32
  }
  func.func @transform_3(%arg0: i32) -> (i32, i32) {
    %c0_i32 = arith.constant 0 : i32
    %c0_i32_0 = arith.constant 0 : i32
    %c0_i32_1 = arith.constant 0 : i32
    return %c0_i32, %c0_i32_0 : i32, i32
  }
  func.func @transform_4(%arg0: i32) -> (i32, i32) {
    %c0_i32 = arith.constant 0 : i32
    %c0_i32_0 = arith.constant 0 : i32
    %c0_i32_1 = arith.constant 0 : i32
    return %c0_i32, %c0_i32_0 : i32, i32
  }
  func.func @transform_5(%arg0: i32) -> (i32, i32) {
    %c0_i32 = arith.constant 0 : i32
    %c0_i32_0 = arith.constant 0 : i32
    %c0_i32_1 = arith.constant 0 : i32
    return %c0_i32, %c0_i32_0 : i32, i32
  }
  func.func @transform_6(%arg0: i32) -> (i32, i32) {
    %c0_i32 = arith.constant 0 : i32
    %c0_i32_0 = arith.constant 0 : i32
    %c0_i32_1 = arith.constant 0 : i32
    return %c0_i32, %c0_i32_0 : i32, i32
  }
  func.func @transform_7(%arg0: i32) -> (i32, i32) {
    %c0_i32 = arith.constant 0 : i32
    %c0_i32_0 = arith.constant 0 : i32
    %c0_i32_1 = arith.constant 0 : i32
    return %c0_i32, %c0_i32_0 : i32, i32
  }
  func.func @transform_8(%arg0: i32) -> (i32, i32) {
    %c0_i32 = arith.constant 0 : i32
    %c0_i32_0 = arith.constant 0 : i32
    %c0_i32_1 = arith.constant 0 : i32
    return %c0_i32, %c0_i32_0 : i32, i32
  }
  func.func @transform_9(%arg0: i32) -> (i32, i32) {
    %c0_i32 = arith.constant 0 : i32
    %c0_i32_0 = arith.constant 0 : i32
    %c0_i32_1 = arith.constant 0 : i32
    return %c0_i32, %c0_i32_0 : i32, i32
  }
  func.func @transform_10(%arg0: i32) -> (i32, i32) {
    %c0_i32 = arith.constant 0 : i32
    %c0_i32_0 = arith.constant 0 : i32
    return %arg0, %c0_i32 : i32, i32
  }
  func.func @transform_11(%arg0: i32) -> (i32, i32) {
    %c0_i32 = arith.constant 0 : i32
    %c0_i32_0 = arith.constant 0 : i32
    return %arg0, %c0_i32 : i32, i32
  }
}

</mosaic_0001>

<llo_original>
// kernel: generator_forward.1
$region0: #{generator_forward.1}
  #allocation0 [shape = 'u32[]', space=smem, size = 0x4, offset = 0x4, fixed_abs, tag = 'smem constant byte address 0x4 - core index']
  #allocation1 [shape = 'u32[144,128]{1,0:T(1,128)}', space=vmem, size = 0x12000, scoped, tag = 'internal scratch']
  %s0 = inlined_call_operand.vmem [shape: f32[8,784], index: 0, kind: input, shape index: {}]
  %s1 = inlined_call_operand.vmem [shape: f32[8,128], index: 1, kind: input, shape index: {}]
  %s2 = inlined_call_operand.vmem [shape: bf16[784,512], index: 2, kind: input, shape index: {}]
  %s3 = inlined_call_operand.vmem [shape: f32[1,512], index: 3, kind: input, shape index: {}]
  %s4 = inlined_call_operand.vmem [shape: bf16[512,256], index: 4, kind: input, shape index: {}]
  %s5 = inlined_call_operand.vmem [shape: f32[1,256], index: 5, kind: input, shape index: {}]
  %s6 = inlined_call_operand.vmem [shape: bf16[128,512], index: 6, kind: input, shape index: {}]
  %s7 = inlined_call_operand.vmem [shape: f32[1,512], index: 7, kind: input, shape index: {}]
  %s8 = inlined_call_operand.vmem [shape: bf16[512,784], index: 8, kind: input, shape index: {}]
  %s9 = inlined_call_operand.vmem [shape: f32[1,784], index: 9, kind: input, shape index: {}]
  %s10 = inlined_call_operand.hbm [shape: f32[8,784], index: 10, kind: output, shape index: {0}]
  %s11 = inlined_call_operand.vmem [shape: f32[8,256], index: 11, kind: output, shape index: {1}]
  %12 = xla_tuple %s10, %s11
  %s13 = sld [smem:[#allocation0]]
  $region58: #{generator_forward.1} parent=0
    _
  %s15 = ssub.s32 1, %s13
  %s16 = scalar_select 0, %s15, %s13
  $region1: #{generator_forward.1} parent=0
    #allocation2 [shape = 'u8[28672]{0}', space=vmem, size = 0x7000, scoped, tag = 'output window, operand 0, single buffered']
    #allocation3 [shape = 's32[1]{0}', space=sflag, size = 0x4, scoped, tag = 'scoped memory for generator_forward.1']
    %17 = vsyncpa [#allocation3], 0
    // Predicated region
    $region2: #{generator_forward.1} parent=1 // pred_check
      _
    $region3: #{generator_forward.1} parent=1 // pred_check_branch
      %19 = sbr.rel (0) target = $region5
    $region4: #{generator_forward.1} parent=1 // pred_region
      _
    $region5: #{generator_forward.1} parent=1 // pred_fallthru
      _
    // Predicated region
    $region6: #{generator_forward.1} parent=1 // pred_check
      _
    $region7: #{generator_forward.1} parent=1 // pred_check_branch
      %21 = sbr.rel (0) target = $region9
    $region8: #{generator_forward.1} parent=1 // pred_region
      _
    $region9: #{generator_forward.1} parent=1 // pred_fallthru
      _
    // Predicated region
    $region10: #{generator_forward.1} parent=1 // pred_check
      _
    $region11: #{generator_forward.1} parent=1 // pred_check_branch
      %23 = sbr.rel (0) target = $region13
    $region12: #{generator_forward.1} parent=1 // pred_region
      _
    $region13: #{generator_forward.1} parent=1 // pred_fallthru
      _
    // Predicated region
    $region14: #{generator_forward.1} parent=1 // pred_check
      _
    $region15: #{generator_forward.1} parent=1 // pred_check_branch
      %25 = sbr.rel (0) target = $region17
    $region16: #{generator_forward.1} parent=1 // pred_region
      _
    $region17: #{generator_forward.1} parent=1 // pred_fallthru
      _
    // Predicated region
    $region18: #{generator_forward.1} parent=1 // pred_check
      _
    $region19: #{generator_forward.1} parent=1 // pred_check_branch
      %27 = sbr.rel (0) target = $region21
    $region20: #{generator_forward.1} parent=1 // pred_region
      _
    $region21: #{generator_forward.1} parent=1 // pred_fallthru
      _
    // Predicated region
    $region22: #{generator_forward.1} parent=1 // pred_check
      _
    $region23: #{generator_forward.1} parent=1 // pred_check_branch
      %29 = sbr.rel (0) target = $region25
    $region24: #{generator_forward.1} parent=1 // pred_region
      _
    $region25: #{generator_forward.1} parent=1 // pred_fallthru
      _
    // Predicated region
    $region26: #{generator_forward.1} parent=1 // pred_check
      _
    $region27: #{generator_forward.1} parent=1 // pred_check_branch
      %31 = sbr.rel (0) target = $region29
    $region28: #{generator_forward.1} parent=1 // pred_region
      _
    $region29: #{generator_forward.1} parent=1 // pred_fallthru
      _
    // Predicated region
    $region30: #{generator_forward.1} parent=1 // pred_check
      _
    $region31: #{generator_forward.1} parent=1 // pred_check_branch
      %33 = sbr.rel (0) target = $region33
    $region32: #{generator_forward.1} parent=1 // pred_region
      _
    $region33: #{generator_forward.1} parent=1 // pred_fallthru
      _
    // Predicated region
    $region34: #{generator_forward.1} parent=1 // pred_check
      _
    $region35: #{generator_forward.1} parent=1 // pred_check_branch
      %35 = sbr.rel (0) target = $region37
    $region36: #{generator_forward.1} parent=1 // pred_region
      _
    $region37: #{generator_forward.1} parent=1 // pred_fallthru
      _
    // Predicated region
    $region38: #{generator_forward.1} parent=1 // pred_check
      _
    $region39: #{generator_forward.1} parent=1 // pred_check_branch
      %37 = sbr.rel (0) target = $region41
    $region40: #{generator_forward.1} parent=1 // pred_region
      _
    $region41: #{generator_forward.1} parent=1 // pred_fallthru
      _
    %v39 = vld [vmem:[%s0] sm:$0xff]
    %v40 = vld [vmem:[%s0 + $0x8] sm:$0xff]
    %v41 = vld [vmem:[%s0 + $0x10] sm:$0xff]
    %v42 = vld [vmem:[%s0 + $0x18] sm:$0xff]
    %v43 = vld [vmem:[%s0 + $0x20] sm:$0xff]
    %v44 = vld [vmem:[%s0 + $0x28] sm:$0xff]
    %v45 = vld [vmem:[%s0 + $0x30] sm:$0xff]
    %v46 = vpack.c.bf16 %v39, %v39
    %v47 = vpack.c.bf16 %v40, %v40
    %v48 = vpack.c.bf16 %v41, %v41
    %v49 = vpack.c.bf16 %v42, %v42
    %v50 = vpack.c.bf16 %v43, %v43
    %v51 = vpack.c.bf16 %v44, %v44
    %v52 = vpack.c.bf16 %v45, %v45
    %v53 = vld [vmem:[%s2] sm:$0xff]
    %v54 = vld [vmem:[%s2 + $0x8] sm:$0xff]
    %v55 = vld [vmem:[%s2 + $0x10] sm:$0xff]
    %v56 = vld [vmem:[%s2 + $0x18] sm:$0xff]
    %v57 = vld [vmem:[%s2 + $0x20] sm:$0xff]
    %v58 = vld [vmem:[%s2 + $0x28] sm:$0xff]
    %v59 = vld [vmem:[%s2 + $0x30] sm:$0xff]
    %v60 = vld [vmem:[%s2 + $0x38] sm:$0xff]
    %v61 = vld [vmem:[%s2 + $0x40] sm:$0xff]
    %v62 = vld [vmem:[%s2 + $0x48] sm:$0xff]
    %v63 = vld [vmem:[%s2 + $0x50] sm:$0xff]
    %v64 = vld [vmem:[%s2 + $0x58] sm:$0xff]
    %v65 = vld [vmem:[%s2 + $0x60] sm:$0xff]
    %v66 = vld [vmem:[%s2 + $0x68] sm:$0xff]
    %v67 = vld [vmem:[%s2 + $0x70] sm:$0xff]
    %v68 = vld [vmem:[%s2 + $0x78] sm:$0xff]
    %v69 = vld [vmem:[%s2 + $0x80] sm:$0xff]
    %v70 = vld [vmem:[%s2 + $0x88] sm:$0xff]
    %v71 = vld [vmem:[%s2 + $0x90] sm:$0xff]
    %v72 = vld [vmem:[%s2 + $0x98] sm:$0xff]
    %v73 = vld [vmem:[%s2 + $0xa0] sm:$0xff]
    %v74 = vld [vmem:[%s2 + $0xa8] sm:$0xff]
    %v75 = vld [vmem:[%s2 + $0xb0] sm:$0xff]
    %v76 = vld [vmem:[%s2 + $0xb8] sm:$0xff]
    %v77 = vld [vmem:[%s2 + $0xc0] sm:$0xff]
    %v78 = vld [vmem:[%s2 + $0xc8] sm:$0xff]
    %v79 = vld [vmem:[%s2 + $0xd0] sm:$0xff]
    %v80 = vld [vmem:[%s2 + $0xd8] sm:$0xff]
    %v81 = vld [vmem:[%s2 + $0xe0] sm:$0xff]
    %v82 = vld [vmem:[%s2 + $0xe8] sm:$0xff]
    %v83 = vld [vmem:[%s2 + $0xf0] sm:$0xff]
    %v84 = vld [vmem:[%s2 + $0xf8] sm:$0xff]
    %v85 = vld [vmem:[%s2 + $0x100] sm:$0xff]
    %v86 = vld [vmem:[%s2 + $0x108] sm:$0xff]
    %v87 = vld [vmem:[%s2 + $0x110] sm:$0xff]
    %v88 = vld [vmem:[%s2 + $0x118] sm:$0xff]
    %v89 = vld [vmem:[%s2 + $0x120] sm:$0xff]
    %v90 = vld [vmem:[%s2 + $0x128] sm:$0xff]
    %v91 = vld [vmem:[%s2 + $0x130] sm:$0xff]
    %v92 = vld [vmem:[%s2 + $0x138] sm:$0xff]
    %v93 = vld [vmem:[%s2 + $0x140] sm:$0xff]
    %v94 = vld [vmem:[%s2 + $0x148] sm:$0xff]
    %v95 = vld [vmem:[%s2 + $0x150] sm:$0xff]
    %v96 = vld [vmem:[%s2 + $0x158] sm:$0xff]
    %v97 = vld [vmem:[%s2 + $0x160] sm:$0xff]
    %v98 = vld [vmem:[%s2 + $0x168] sm:$0xff]
    %v99 = vld [vmem:[%s2 + $0x170] sm:$0xff]
    %v100 = vld [vmem:[%s2 + $0x178] sm:$0xff]
    %v101 = vld [vmem:[%s2 + $0x180] sm:$0xff]
    %v102 = vld [vmem:[%s2 + $0x188] sm:$0xff]
    %v103 = vld [vmem:[%s2 + $0x190] sm:$0xff]
    %v104 = vld [vmem:[%s2 + $0x198] sm:$0xff]
    %v105 = vld [vmem:[%s2 + $0x1a0] sm:$0xff]
    %v106 = vld [vmem:[%s2 + $0x1a8] sm:$0xff]
    %v107 = vld [vmem:[%s2 + $0x1b0] sm:$0xff]
    %v108 = vld [vmem:[%s2 + $0x1b8] sm:$0xff]
    %v109 = vld [vmem:[%s2 + $0x1c0] sm:$0xff]
    %v110 = vld [vmem:[%s2 + $0x1c8] sm:$0xff]
    %v111 = vld [vmem:[%s2 + $0x1d0] sm:$0xff]
    %v112 = vld [vmem:[%s2 + $0x1d8] sm:$0xff]
    %v113 = vld [vmem:[%s2 + $0x1e0] sm:$0xff]
    %v114 = vld [vmem:[%s2 + $0x1e8] sm:$0xff]
    %v115 = vld [vmem:[%s2 + $0x1f0] sm:$0xff]
    %v116 = vld [vmem:[%s2 + $0x1f8] sm:$0xff]
    %v117 = vld [vmem:[%s2 + $0x200] sm:$0xff]
    %v118 = vld [vmem:[%s2 + $0x208] sm:$0xff]
    %v119 = vld [vmem:[%s2 + $0x210] sm:$0xff]
    %v120 = vld [vmem:[%s2 + $0x218] sm:$0xff]
    %v121 = vld [vmem:[%s2 + $0x220] sm:$0xff]
    %v122 = vld [vmem:[%s2 + $0x228] sm:$0xff]
    %v123 = vld [vmem:[%s2 + $0x230] sm:$0xff]
    %v124 = vld [vmem:[%s2 + $0x238] sm:$0xff]
    %v125 = vld [vmem:[%s2 + $0x240] sm:$0xff]
    %v126 = vld [vmem:[%s2 + $0x248] sm:$0xff]
    %v127 = vld [vmem:[%s2 + $0x250] sm:$0xff]
    %v128 = vld [vmem:[%s2 + $0x258] sm:$0xff]
    %v129 = vld [vmem:[%s2 + $0x260] sm:$0xff]
    %v130 = vld [vmem:[%s2 + $0x268] sm:$0xff]
    %v131 = vld [vmem:[%s2 + $0x270] sm:$0xff]
    %v132 = vld [vmem:[%s2 + $0x278] sm:$0xff]
    %v133 = vld [vmem:[%s2 + $0x280] sm:$0xff]
    %v134 = vld [vmem:[%s2 + $0x288] sm:$0xff]
    %v135 = vld [vmem:[%s2 + $0x290] sm:$0xff]
    %v136 = vld [vmem:[%s2 + $0x298] sm:$0xff]
    %v137 = vld [vmem:[%s2 + $0x2a0] sm:$0xff]
    %v138 = vld [vmem:[%s2 + $0x2a8] sm:$0xff]
    %v139 = vld [vmem:[%s2 + $0x2b0] sm:$0xff]
    %v140 = vld [vmem:[%s2 + $0x2b8] sm:$0xff]
    %v141 = vld [vmem:[%s2 + $0x2c0] sm:$0xff]
    %v142 = vld [vmem:[%s2 + $0x2c8] sm:$0xff]
    %v143 = vld [vmem:[%s2 + $0x2d0] sm:$0xff]
    %v144 = vld [vmem:[%s2 + $0x2d8] sm:$0xff]
    %v145 = vld [vmem:[%s2 + $0x2e0] sm:$0xff]
    %v146 = vld [vmem:[%s2 + $0x2e8] sm:$0xff]
    %v147 = vld [vmem:[%s2 + $0x2f0] sm:$0xff]
    %v148 = vld [vmem:[%s2 + $0x2f8] sm:$0xff]
    %v149 = vld [vmem:[%s2 + $0x300] sm:$0xff]
    %v150 = vld [vmem:[%s2 + $0x308] sm:$0xff]
    %v151 = vld [vmem:[%s2 + $0x310] sm:$0xff]
    %v152 = vld [vmem:[%s2 + $0x318] sm:$0xff]
    %v153 = vld [vmem:[%s2 + $0x320] sm:$0xff]
    %v154 = vld [vmem:[%s2 + $0x328] sm:$0xff]
    %v155 = vld [vmem:[%s2 + $0x330] sm:$0xff]
    %v156 = vld [vmem:[%s2 + $0x338] sm:$0xff]
    %v157 = vld [vmem:[%s2 + $0x340] sm:$0xff]
    %v158 = vld [vmem:[%s2 + $0x348] sm:$0xff]
    %v159 = vld [vmem:[%s2 + $0x350] sm:$0xff]
    %v160 = vld [vmem:[%s2 + $0x358] sm:$0xff]
    %v161 = vld [vmem:[%s2 + $0x360] sm:$0xff]
    %v162 = vld [vmem:[%s2 + $0x368] sm:$0xff]
    %v163 = vld [vmem:[%s2 + $0x370] sm:$0xff]
    %v164 = vld [vmem:[%s2 + $0x378] sm:$0xff]
    %v165 = vld [vmem:[%s2 + $0x380] sm:$0xff]
    %v166 = vld [vmem:[%s2 + $0x388] sm:$0xff]
    %v167 = vld [vmem:[%s2 + $0x390] sm:$0xff]
    %v168 = vld [vmem:[%s2 + $0x398] sm:$0xff]
    %v169 = vld [vmem:[%s2 + $0x3a0] sm:$0xff]
    %v170 = vld [vmem:[%s2 + $0x3a8] sm:$0xff]
    %v171 = vld [vmem:[%s2 + $0x3b0] sm:$0xff]
    %v172 = vld [vmem:[%s2 + $0x3b8] sm:$0xff]
    %v173 = vld [vmem:[%s2 + $0x3c0] sm:$0xff]
    %v174 = vld [vmem:[%s2 + $0x3c8] sm:$0xff]
    %v175 = vld [vmem:[%s2 + $0x3d0] sm:$0xff]
    %v176 = vld [vmem:[%s2 + $0x3d8] sm:$0xff]
    %v177 = vld [vmem:[%s2 + $0x3e0] sm:$0xff]
    %v178 = vld [vmem:[%s2 + $0x3e8] sm:$0xff]
    %v179 = vld [vmem:[%s2 + $0x3f0] sm:$0xff]
    %v180 = vld [vmem:[%s2 + $0x3f8] sm:$0xff]
    %v181 = vld [vmem:[%s2 + $0x400] sm:$0xff]
    %v182 = vld [vmem:[%s2 + $0x408] sm:$0xff]
    %v183 = vld [vmem:[%s2 + $0x410] sm:$0xff]
    %v184 = vld [vmem:[%s2 + $0x418] sm:$0xff]
    %v185 = vld [vmem:[%s2 + $0x420] sm:$0xff]
    %v186 = vld [vmem:[%s2 + $0x428] sm:$0xff]
    %v187 = vld [vmem:[%s2 + $0x430] sm:$0xff]
    %v188 = vld [vmem:[%s2 + $0x438] sm:$0xff]
    %v189 = vld [vmem:[%s2 + $0x440] sm:$0xff]
    %v190 = vld [vmem:[%s2 + $0x448] sm:$0xff]
    %v191 = vld [vmem:[%s2 + $0x450] sm:$0xff]
    %v192 = vld [vmem:[%s2 + $0x458] sm:$0xff]
    %v193 = vld [vmem:[%s2 + $0x460] sm:$0xff]
    %v194 = vld [vmem:[%s2 + $0x468] sm:$0xff]
    %v195 = vld [vmem:[%s2 + $0x470] sm:$0xff]
    %v196 = vld [vmem:[%s2 + $0x478] sm:$0xff]
    %v197 = vld [vmem:[%s2 + $0x480] sm:$0xff]
    %v198 = vld [vmem:[%s2 + $0x488] sm:$0xff]
    %v199 = vld [vmem:[%s2 + $0x490] sm:$0xff]
    %v200 = vld [vmem:[%s2 + $0x498] sm:$0xff]
    %v201 = vld [vmem:[%s2 + $0x4a0] sm:$0xff]
    %v202 = vld [vmem:[%s2 + $0x4a8] sm:$0xff]
    %v203 = vld [vmem:[%s2 + $0x4b0] sm:$0xff]
    %v204 = vld [vmem:[%s2 + $0x4b8] sm:$0xff]
    %v205 = vld [vmem:[%s2 + $0x4c0] sm:$0xff]
    %v206 = vld [vmem:[%s2 + $0x4c8] sm:$0xff]
    %v207 = vld [vmem:[%s2 + $0x4d0] sm:$0xff]
    %v208 = vld [vmem:[%s2 + $0x4d8] sm:$0xff]
    %v209 = vld [vmem:[%s2 + $0x4e0] sm:$0xff]
    %v210 = vld [vmem:[%s2 + $0x4e8] sm:$0xff]
    %v211 = vld [vmem:[%s2 + $0x4f0] sm:$0xff]
    %v212 = vld [vmem:[%s2 + $0x4f8] sm:$0xff]
    %v213 = vld [vmem:[%s2 + $0x500] sm:$0xff]
    %v214 = vld [vmem:[%s2 + $0x508] sm:$0xff]
    %v215 = vld [vmem:[%s2 + $0x510] sm:$0xff]
    %v216 = vld [vmem:[%s2 + $0x518] sm:$0xff]
    %v217 = vld [vmem:[%s2 + $0x520] sm:$0xff]
    %v218 = vld [vmem:[%s2 + $0x528] sm:$0xff]
    %v219 = vld [vmem:[%s2 + $0x530] sm:$0xff]
    %v220 = vld [vmem:[%s2 + $0x538] sm:$0xff]
    %v221 = vld [vmem:[%s2 + $0x540] sm:$0xff]
    %v222 = vld [vmem:[%s2 + $0x548] sm:$0xff]
    %v223 = vld [vmem:[%s2 + $0x550] sm:$0xff]
    %v224 = vld [vmem:[%s2 + $0x558] sm:$0xff]
    %v225 = vld [vmem:[%s2 + $0x560] sm:$0xff]
    %v226 = vld [vmem:[%s2 + $0x568] sm:$0xff]
    %v227 = vld [vmem:[%s2 + $0x570] sm:$0xff]
    %v228 = vld [vmem:[%s2 + $0x578] sm:$0xff]
    %v229 = vld [vmem:[%s2 + $0x580] sm:$0xff]
    %v230 = vld [vmem:[%s2 + $0x588] sm:$0xff]
    %v231 = vld [vmem:[%s2 + $0x590] sm:$0xff]
    %v232 = vld [vmem:[%s2 + $0x598] sm:$0xff]
    %v233 = vld [vmem:[%s2 + $0x5a0] sm:$0xff]
    %v234 = vld [vmem:[%s2 + $0x5a8] sm:$0xff]
    %v235 = vld [vmem:[%s2 + $0x5b0] sm:$0xff]
    %v236 = vld [vmem:[%s2 + $0x5b8] sm:$0xff]
    %v237 = vld [vmem:[%s2 + $0x5c0] sm:$0xff]
    %v238 = vld [vmem:[%s2 + $0x5c8] sm:$0xff]
    %v239 = vld [vmem:[%s2 + $0x5d0] sm:$0xff]
    %v240 = vld [vmem:[%s2 + $0x5d8] sm:$0xff]
    %v241 = vld [vmem:[%s2 + $0x5e0] sm:$0xff]
    %v242 = vld [vmem:[%s2 + $0x5e8] sm:$0xff]
    %v243 = vld [vmem:[%s2 + $0x5f0] sm:$0xff]
    %v244 = vld [vmem:[%s2 + $0x5f8] sm:$0xff]
    %v245 = vld [vmem:[%s2 + $0x600] sm:$0xff]
    %v246 = vld [vmem:[%s2 + $0x608] sm:$0xff]
    %v247 = vld [vmem:[%s2 + $0x610] sm:$0xff]
    %v248 = vld [vmem:[%s2 + $0x618] sm:$0xff]
    %v249 = vld [vmem:[%s3] sm:$0xf]
    %v251 = vlaneseq
    %v252 = vshrl.u32 %v251, 7
    %v253 = vsub.s32 0, %v252
    %v254 = vrot.slane %v249, %v253
    %v255 = vlaneseq
    %v256 = vshrl.u32 %v255, 7
    %v257 = vsub.s32 1, %v256
    %v258 = vrot.slane %v249, %v257
    %v259 = vlaneseq
    %v260 = vshrl.u32 %v259, 7
    %v261 = vsub.s32 2, %v260
    %v262 = vrot.slane %v249, %v261
    %v263 = vlaneseq
    %v264 = vshrl.u32 %v263, 7
    %v265 = vsub.s32 3, %v264
    %v266 = vrot.slane %v249, %v265
    %v467 = vunpack.c.l.b16 %v53
    %v468 = vunpack.c.h.b16 %v53
    %v469 = vunpack.c.l.b16 %v54
    %v470 = vunpack.c.h.b16 %v54
    %v471 = vunpack.c.l.b16 %v55
    %v472 = vunpack.c.h.b16 %v55
    %v473 = vunpack.c.l.b16 %v56
    %v474 = vunpack.c.h.b16 %v56
    %v475 = vunpack.c.l.b16 %v57
    %v476 = vunpack.c.h.b16 %v57
    %v477 = vunpack.c.l.b16 %v58
    %v478 = vunpack.c.h.b16 %v58
    %v479 = vunpack.c.l.b16 %v59
    %v480 = vunpack.c.h.b16 %v59
    %v481 = vunpack.c.l.b16 %v60
    %v482 = vunpack.c.h.b16 %v60
    %v483 = vunpack.c.l.b16 %v61
    %v484 = vunpack.c.h.b16 %v61
    %v485 = vunpack.c.l.b16 %v62
    %v486 = vunpack.c.h.b16 %v62
    %v487 = vunpack.c.l.b16 %v63
    %v488 = vunpack.c.h.b16 %v63
    %v489 = vunpack.c.l.b16 %v64
    %v490 = vunpack.c.h.b16 %v64
    %v491 = vunpack.c.l.b16 %v65
    %v492 = vunpack.c.h.b16 %v65
    %v493 = vunpack.c.l.b16 %v66
    %v494 = vunpack.c.h.b16 %v66
    %v495 = vunpack.c.l.b16 %v67
    %v496 = vunpack.c.h.b16 %v67
    %v497 = vunpack.c.l.b16 %v68
    %v498 = vunpack.c.h.b16 %v68
    %v499 = vunpack.c.l.b16 %v69
    %v500 = vunpack.c.h.b16 %v69
    %v501 = vunpack.c.l.b16 %v70
    %v502 = vunpack.c.h.b16 %v70
    %v503 = vunpack.c.l.b16 %v71
    %v504 = vunpack.c.h.b16 %v71
    %v505 = vunpack.c.l.b16 %v72
    %v506 = vunpack.c.h.b16 %v72
    %v507 = vunpack.c.l.b16 %v73
    %v508 = vunpack.c.h.b16 %v73
    %v509 = vunpack.c.l.b16 %v74
    %v510 = vunpack.c.h.b16 %v74
    %v511 = vunpack.c.l.b16 %v75
    %v512 = vunpack.c.h.b16 %v75
    %v513 = vunpack.c.l.b16 %v76
    %v514 = vunpack.c.h.b16 %v76
    %v515 = vunpack.c.l.b16 %v77
    %v516 = vunpack.c.h.b16 %v77
    %v517 = vunpack.c.l.b16 %v78
    %v518 = vunpack.c.h.b16 %v78
    %v519 = vunpack.c.l.b16 %v79
    %v520 = vunpack.c.h.b16 %v79
    %v521 = vunpack.c.l.b16 %v80
    %v522 = vunpack.c.h.b16 %v80
    %v523 = vunpack.c.l.b16 %v81
    %v524 = vunpack.c.h.b16 %v81
    %v525 = vunpack.c.l.b16 %v82
    %v526 = vunpack.c.h.b16 %v82
    %v527 = vunpack.c.l.b16 %v83
    %v528 = vunpack.c.h.b16 %v83
    %v529 = vunpack.c.l.b16 %v84
    %v530 = vunpack.c.h.b16 %v84
    %v531 = vunpack.c.l.b16 %v85
    %v532 = vunpack.c.h.b16 %v85
    %v533 = vunpack.c.l.b16 %v86
    %v534 = vunpack.c.h.b16 %v86
    %v535 = vunpack.c.l.b16 %v87
    %v536 = vunpack.c.h.b16 %v87
    %v537 = vunpack.c.l.b16 %v88
    %v538 = vunpack.c.h.b16 %v88
    %v539 = vunpack.c.l.b16 %v89
    %v540 = vunpack.c.h.b16 %v89
    %v541 = vunpack.c.l.b16 %v90
    %v542 = vunpack.c.h.b16 %v90
    %v543 = vunpack.c.l.b16 %v91
    %v544 = vunpack.c.h.b16 %v91
    %v545 = vunpack.c.l.b16 %v92
    %v546 = vunpack.c.h.b16 %v92
    %v547 = vunpack.c.l.b16 %v93
    %v548 = vunpack.c.h.b16 %v93
    %v549 = vunpack.c.l.b16 %v94
    %v550 = vunpack.c.h.b16 %v94
    %v551 = vunpack.c.l.b16 %v95
    %v552 = vunpack.c.h.b16 %v95
    %v553 = vunpack.c.l.b16 %v96
    %v554 = vunpack.c.h.b16 %v96
    %v555 = vunpack.c.l.b16 %v97
    %v556 = vunpack.c.h.b16 %v97
    %v557 = vunpack.c.l.b16 %v98
    %v558 = vunpack.c.h.b16 %v98
    %v559 = vunpack.c.l.b16 %v99
    %v560 = vunpack.c.h.b16 %v99
    %v561 = vunpack.c.l.b16 %v100
    %v562 = vunpack.c.h.b16 %v100
    %v563 = vunpack.c.l.b16 %v101
    %v564 = vunpack.c.h.b16 %v101
    %v565 = vunpack.c.l.b16 %v102
    %v566 = vunpack.c.h.b16 %v102
    %v567 = vunpack.c.l.b16 %v103
    %v568 = vunpack.c.h.b16 %v103
    %v569 = vunpack.c.l.b16 %v104
    %v570 = vunpack.c.h.b16 %v104
    %v571 = vunpack.c.l.b16 %v105
    %v572 = vunpack.c.h.b16 %v105
    %v573 = vunpack.c.l.b16 %v106
    %v574 = vunpack.c.h.b16 %v106
    %v575 = vunpack.c.l.b16 %v107
    %v576 = vunpack.c.h.b16 %v107
    %v577 = vunpack.c.l.b16 %v108
    %v578 = vunpack.c.h.b16 %v108
    %v579 = vunpack.c.l.b16 %v109
    %v580 = vunpack.c.h.b16 %v109
    %v581 = vunpack.c.l.b16 %v110
    %v582 = vunpack.c.h.b16 %v110
    %v583 = vunpack.c.l.b16 %v111
    %v584 = vunpack.c.h.b16 %v111
    %v585 = vunpack.c.l.b16 %v112
    %v586 = vunpack.c.h.b16 %v112
    %v587 = vunpack.c.l.b16 %v113
    %v588 = vunpack.c.h.b16 %v113
    %v589 = vunpack.c.l.b16 %v114
    %v590 = vunpack.c.h.b16 %v114
    %v591 = vunpack.c.l.b16 %v115
    %v592 = vunpack.c.h.b16 %v115
    %v593 = vunpack.c.l.b16 %v116
    %v594 = vunpack.c.h.b16 %v116
    %v595 = vunpack.c.l.b16 %v117
    %v596 = vunpack.c.h.b16 %v117
    %v597 = vunpack.c.l.b16 %v118
    %v598 = vunpack.c.h.b16 %v118
    %v599 = vunpack.c.l.b16 %v119
    %v600 = vunpack.c.h.b16 %v119
    %v601 = vunpack.c.l.b16 %v120
    %v602 = vunpack.c.h.b16 %v120
    %v603 = vunpack.c.l.b16 %v121
    %v604 = vunpack.c.h.b16 %v121
    %v605 = vunpack.c.l.b16 %v122
    %v606 = vunpack.c.h.b16 %v122
    %v607 = vunpack.c.l.b16 %v123
    %v608 = vunpack.c.h.b16 %v123
    %v609 = vunpack.c.l.b16 %v124
    %v610 = vunpack.c.h.b16 %v124
    %v611 = vunpack.c.l.b16 %v125
    %v612 = vunpack.c.h.b16 %v125
    %v613 = vunpack.c.l.b16 %v126
    %v614 = vunpack.c.h.b16 %v126
    %v615 = vunpack.c.l.b16 %v127
    %v616 = vunpack.c.h.b16 %v127
    %v617 = vunpack.c.l.b16 %v128
    %v618 = vunpack.c.h.b16 %v128
    %v619 = vunpack.c.l.b16 %v129
    %v620 = vunpack.c.h.b16 %v129
    %v621 = vunpack.c.l.b16 %v130
    %v622 = vunpack.c.h.b16 %v130
    %v623 = vunpack.c.l.b16 %v131
    %v624 = vunpack.c.h.b16 %v131
    %v625 = vunpack.c.l.b16 %v132
    %v626 = vunpack.c.h.b16 %v132
    %v627 = vunpack.c.l.b16 %v133
    %v628 = vunpack.c.h.b16 %v133
    %v629 = vunpack.c.l.b16 %v134
    %v630 = vunpack.c.h.b16 %v134
    %v631 = vunpack.c.l.b16 %v135
    %v632 = vunpack.c.h.b16 %v135
    %v633 = vunpack.c.l.b16 %v136
    %v634 = vunpack.c.h.b16 %v136
    %v635 = vunpack.c.l.b16 %v137
    %v636 = vunpack.c.h.b16 %v137
    %v637 = vunpack.c.l.b16 %v138
    %v638 = vunpack.c.h.b16 %v138
    %v639 = vunpack.c.l.b16 %v139
    %v640 = vunpack.c.h.b16 %v139
    %v641 = vunpack.c.l.b16 %v140
    %v642 = vunpack.c.h.b16 %v140
    %v643 = vunpack.c.l.b16 %v141
    %v644 = vunpack.c.h.b16 %v141
    %v645 = vunpack.c.l.b16 %v142
    %v646 = vunpack.c.h.b16 %v142
    %v647 = vunpack.c.l.b16 %v143
    %v648 = vunpack.c.h.b16 %v143
    %v649 = vunpack.c.l.b16 %v144
    %v650 = vunpack.c.h.b16 %v144
    %v651 = vunpack.c.l.b16 %v145
    %v652 = vunpack.c.h.b16 %v145
    %v653 = vunpack.c.l.b16 %v146
    %v654 = vunpack.c.h.b16 %v146
    %v655 = vunpack.c.l.b16 %v147
    %v656 = vunpack.c.h.b16 %v147
    %v657 = vunpack.c.l.b16 %v148
    %v658 = vunpack.c.h.b16 %v148
    %v659 = vunpack.c.l.b16 %v149
    %v660 = vunpack.c.h.b16 %v149
    %v661 = vunpack.c.l.b16 %v150
    %v662 = vunpack.c.h.b16 %v150
    %v663 = vunpack.c.l.b16 %v151
    %v664 = vunpack.c.h.b16 %v151
    %v665 = vunpack.c.l.b16 %v152
    %v666 = vunpack.c.h.b16 %v152
    %v667 = vunpack.c.l.b16 %v153
    %v668 = vunpack.c.h.b16 %v153
    %v669 = vunpack.c.l.b16 %v154
    %v670 = vunpack.c.h.b16 %v154
    %v671 = vunpack.c.l.b16 %v155
    %v672 = vunpack.c.h.b16 %v155
    %v673 = vunpack.c.l.b16 %v156
    %v674 = vunpack.c.h.b16 %v156
    %v675 = vunpack.c.l.b16 %v157
    %v676 = vunpack.c.h.b16 %v157
    %v677 = vunpack.c.l.b16 %v158
    %v678 = vunpack.c.h.b16 %v158
    %v679 = vunpack.c.l.b16 %v159
    %v680 = vunpack.c.h.b16 %v159
    %v681 = vunpack.c.l.b16 %v160
    %v682 = vunpack.c.h.b16 %v160
    %v683 = vunpack.c.l.b16 %v161
    %v684 = vunpack.c.h.b16 %v161
    %v685 = vunpack.c.l.b16 %v162
    %v686 = vunpack.c.h.b16 %v162
    %v687 = vunpack.c.l.b16 %v163
    %v688 = vunpack.c.h.b16 %v163
    %v689 = vunpack.c.l.b16 %v164
    %v690 = vunpack.c.h.b16 %v164
    %v691 = vunpack.c.l.b16 %v165
    %v692 = vunpack.c.h.b16 %v165
    %v693 = vunpack.c.l.b16 %v166
    %v694 = vunpack.c.h.b16 %v166
    %v695 = vunpack.c.l.b16 %v167
    %v696 = vunpack.c.h.b16 %v167
    %v697 = vunpack.c.l.b16 %v168
    %v698 = vunpack.c.h.b16 %v168
    %v699 = vunpack.c.l.b16 %v169
    %v700 = vunpack.c.h.b16 %v169
    %v701 = vunpack.c.l.b16 %v170
    %v702 = vunpack.c.h.b16 %v170
    %v703 = vunpack.c.l.b16 %v171
    %v704 = vunpack.c.h.b16 %v171
    %v705 = vunpack.c.l.b16 %v172
    %v706 = vunpack.c.h.b16 %v172
    %v707 = vunpack.c.l.b16 %v173
    %v708 = vunpack.c.h.b16 %v173
    %v709 = vunpack.c.l.b16 %v174
    %v710 = vunpack.c.h.b16 %v174
    %v711 = vunpack.c.l.b16 %v175
    %v712 = vunpack.c.h.b16 %v175
    %v713 = vunpack.c.l.b16 %v176
    %v714 = vunpack.c.h.b16 %v176
    %v715 = vunpack.c.l.b16 %v177
    %v716 = vunpack.c.h.b16 %v177
    %v717 = vunpack.c.l.b16 %v178
    %v718 = vunpack.c.h.b16 %v178
    %v719 = vunpack.c.l.b16 %v179
    %v720 = vunpack.c.h.b16 %v179
    %v721 = vunpack.c.l.b16 %v180
    %v722 = vunpack.c.h.b16 %v180
    %v723 = vunpack.c.l.b16 %v181
    %v724 = vunpack.c.h.b16 %v181
    %v725 = vunpack.c.l.b16 %v182
    %v726 = vunpack.c.h.b16 %v182
    %v727 = vunpack.c.l.b16 %v183
    %v728 = vunpack.c.h.b16 %v183
    %v729 = vunpack.c.l.b16 %v184
    %v730 = vunpack.c.h.b16 %v184
    %v731 = vunpack.c.l.b16 %v185
    %v732 = vunpack.c.h.b16 %v185
    %v733 = vunpack.c.l.b16 %v186
    %v734 = vunpack.c.h.b16 %v186
    %v735 = vunpack.c.l.b16 %v187
    %v736 = vunpack.c.h.b16 %v187
    %v737 = vunpack.c.l.b16 %v188
    %v738 = vunpack.c.h.b16 %v188
    %v739 = vunpack.c.l.b16 %v189
    %v740 = vunpack.c.h.b16 %v189
    %v741 = vunpack.c.l.b16 %v190
    %v742 = vunpack.c.h.b16 %v190
    %v743 = vunpack.c.l.b16 %v191
    %v744 = vunpack.c.h.b16 %v191
    %v745 = vunpack.c.l.b16 %v192
    %v746 = vunpack.c.h.b16 %v192
    %v747 = vunpack.c.l.b16 %v193
    %v748 = vunpack.c.h.b16 %v193
    %v749 = vunpack.c.l.b16 %v194
    %v750 = vunpack.c.h.b16 %v194
    %v751 = vunpack.c.l.b16 %v195
    %v752 = vunpack.c.h.b16 %v195
    %v753 = vunpack.c.l.b16 %v196
    %v754 = vunpack.c.h.b16 %v196
    %v755 = vunpack.c.l.b16 %v197
    %v756 = vunpack.c.h.b16 %v197
    %v757 = vunpack.c.l.b16 %v198
    %v758 = vunpack.c.h.b16 %v198
    %v759 = vunpack.c.l.b16 %v199
    %v760 = vunpack.c.h.b16 %v199
    %v761 = vunpack.c.l.b16 %v200
    %v762 = vunpack.c.h.b16 %v200
    %v763 = vunpack.c.l.b16 %v201
    %v764 = vunpack.c.h.b16 %v201
    %v765 = vunpack.c.l.b16 %v202
    %v766 = vunpack.c.h.b16 %v202
    %v767 = vunpack.c.l.b16 %v203
    %v768 = vunpack.c.h.b16 %v203
    %v769 = vunpack.c.l.b16 %v204
    %v770 = vunpack.c.h.b16 %v204
    %v771 = vunpack.c.l.b16 %v205
    %v772 = vunpack.c.h.b16 %v205
    %v773 = vunpack.c.l.b16 %v206
    %v774 = vunpack.c.h.b16 %v206
    %v775 = vunpack.c.l.b16 %v207
    %v776 = vunpack.c.h.b16 %v207
    %v777 = vunpack.c.l.b16 %v208
    %v778 = vunpack.c.h.b16 %v208
    %v779 = vunpack.c.l.b16 %v209
    %v780 = vunpack.c.h.b16 %v209
    %v781 = vunpack.c.l.b16 %v210
    %v782 = vunpack.c.h.b16 %v210
    %v783 = vunpack.c.l.b16 %v211
    %v784 = vunpack.c.h.b16 %v211
    %v785 = vunpack.c.l.b16 %v212
    %v786 = vunpack.c.h.b16 %v212
    %v787 = vunpack.c.l.b16 %v213
    %v788 = vunpack.c.h.b16 %v213
    %v789 = vunpack.c.l.b16 %v214
    %v790 = vunpack.c.h.b16 %v214
    %v791 = vunpack.c.l.b16 %v215
    %v792 = vunpack.c.h.b16 %v215
    %v793 = vunpack.c.l.b16 %v216
    %v794 = vunpack.c.h.b16 %v216
    %v795 = vunpack.c.l.b16 %v217
    %v796 = vunpack.c.h.b16 %v217
    %v797 = vunpack.c.l.b16 %v218
    %v798 = vunpack.c.h.b16 %v218
    %v799 = vunpack.c.l.b16 %v219
    %v800 = vunpack.c.h.b16 %v219
    %v801 = vunpack.c.l.b16 %v220
    %v802 = vunpack.c.h.b16 %v220
    %v803 = vunpack.c.l.b16 %v221
    %v804 = vunpack.c.h.b16 %v221
    %v805 = vunpack.c.l.b16 %v222
    %v806 = vunpack.c.h.b16 %v222
    %v807 = vunpack.c.l.b16 %v223
    %v808 = vunpack.c.h.b16 %v223
    %v809 = vunpack.c.l.b16 %v224
    %v810 = vunpack.c.h.b16 %v224
    %v811 = vunpack.c.l.b16 %v225
    %v812 = vunpack.c.h.b16 %v225
    %v813 = vunpack.c.l.b16 %v226
    %v814 = vunpack.c.h.b16 %v226
    %v815 = vunpack.c.l.b16 %v227
    %v816 = vunpack.c.h.b16 %v227
    %v817 = vunpack.c.l.b16 %v228
    %v818 = vunpack.c.h.b16 %v228
    %v819 = vunpack.c.l.b16 %v229
    %v820 = vunpack.c.h.b16 %v229
    %v821 = vunpack.c.l.b16 %v230
    %v822 = vunpack.c.h.b16 %v230
    %v823 = vunpack.c.l.b16 %v231
    %v824 = vunpack.c.h.b16 %v231
    %v825 = vunpack.c.l.b16 %v232
    %v826 = vunpack.c.h.b16 %v232
    %v827 = vunpack.c.l.b16 %v233
    %v828 = vunpack.c.h.b16 %v233
    %v829 = vunpack.c.l.b16 %v234
    %v830 = vunpack.c.h.b16 %v234
    %v831 = vunpack.c.l.b16 %v235
    %v832 = vunpack.c.h.b16 %v235
    %v833 = vunpack.c.l.b16 %v236
    %v834 = vunpack.c.h.b16 %v236
    %v835 = vunpack.c.l.b16 %v237
    %v836 = vunpack.c.h.b16 %v237
    %v837 = vunpack.c.l.b16 %v238
    %v838 = vunpack.c.h.b16 %v238
    %v839 = vunpack.c.l.b16 %v239
    %v840 = vunpack.c.h.b16 %v239
    %v841 = vunpack.c.l.b16 %v240
    %v842 = vunpack.c.h.b16 %v240
    %v843 = vunpack.c.l.b16 %v241
    %v844 = vunpack.c.h.b16 %v241
    %v845 = vunpack.c.l.b16 %v242
    %v846 = vunpack.c.h.b16 %v242
    %v847 = vunpack.c.l.b16 %v243
    %v848 = vunpack.c.h.b16 %v243
    %v849 = vunpack.c.l.b16 %v244
    %v850 = vunpack.c.h.b16 %v244
    %v851 = vunpack.c.l.b16 %v245
    %v852 = vunpack.c.h.b16 %v245
    %v853 = vunpack.c.l.b16 %v246
    %v854 = vunpack.c.h.b16 %v246
    %v855 = vunpack.c.l.b16 %v247
    %v856 = vunpack.c.h.b16 %v247
    %v857 = vunpack.c.l.b16 %v248
    %v858 = vunpack.c.h.b16 %v248
    %v859 = vpack.c.b16 %v471, %v467
    %v860 = vpack.c.b16 %v472, %v468
    %v861 = vpack.c.b16 %v473, %v469
    %v862 = vpack.c.b16 %v474, %v470
    %v863 = vpack.c.b16 %v479, %v475
    %v864 = vpack.c.b16 %v480, %v476
    %v865 = vpack.c.b16 %v481, %v477
    %v866 = vpack.c.b16 %v482, %v478
    %v867 = vpack.c.b16 %v487, %v483
    %v868 = vpack.c.b16 %v488, %v484
    %v869 = vpack.c.b16 %v489, %v485
    %v870 = vpack.c.b16 %v490, %v486
    %v871 = vpack.c.b16 %v495, %v491
    %v872 = vpack.c.b16 %v496, %v492
    %v873 = vpack.c.b16 %v497, %v493
    %v874 = vpack.c.b16 %v498, %v494
    %v875 = vpack.c.b16 %v503, %v499
    %v876 = vpack.c.b16 %v504, %v500
    %v877 = vpack.c.b16 %v505, %v501
    %v878 = vpack.c.b16 %v506, %v502
    %v879 = vpack.c.b16 %v511, %v507
    %v880 = vpack.c.b16 %v512, %v508
    %v881 = vpack.c.b16 %v513, %v509
    %v882 = vpack.c.b16 %v514, %v510
    %v883 = vpack.c.b16 %v519, %v515
    %v884 = vpack.c.b16 %v520, %v516
    %v885 = vpack.c.b16 %v521, %v517
    %v886 = vpack.c.b16 %v522, %v518
    %v887 = vpack.c.b16 %v527, %v523
    %v888 = vpack.c.b16 %v528, %v524
    %v889 = vpack.c.b16 %v529, %v525
    %v890 = vpack.c.b16 %v530, %v526
    %v891 = vpack.c.b16 %v535, %v531
    %v892 = vpack.c.b16 %v536, %v532
    %v893 = vpack.c.b16 %v537, %v533
    %v894 = vpack.c.b16 %v538, %v534
    %v895 = vpack.c.b16 %v543, %v539
    %v896 = vpack.c.b16 %v544, %v540
    %v897 = vpack.c.b16 %v545, %v541
    %v898 = vpack.c.b16 %v546, %v542
    %v899 = vpack.c.b16 %v551, %v547
    %v900 = vpack.c.b16 %v552, %v548
    %v901 = vpack.c.b16 %v553, %v549
    %v902 = vpack.c.b16 %v554, %v550
    %v903 = vpack.c.b16 %v559, %v555
    %v904 = vpack.c.b16 %v560, %v556
    %v905 = vpack.c.b16 %v561, %v557
    %v906 = vpack.c.b16 %v562, %v558
    %v907 = vpack.c.b16 %v567, %v563
    %v908 = vpack.c.b16 %v568, %v564
    %v909 = vpack.c.b16 %v569, %v565
    %v910 = vpack.c.b16 %v570, %v566
    %v911 = vpack.c.b16 %v575, %v571
    %v912 = vpack.c.b16 %v576, %v572
    %v913 = vpack.c.b16 %v577, %v573
    %v914 = vpack.c.b16 %v578, %v574
    %v915 = vpack.c.b16 %v583, %v579
    %v916 = vpack.c.b16 %v584, %v580
    %v917 = vpack.c.b16 %v585, %v581
    %v918 = vpack.c.b16 %v586, %v582
    %v919 = vpack.c.b16 %v591, %v587
    %v920 = vpack.c.b16 %v592, %v588
    %v921 = vpack.c.b16 %v593, %v589
    %v922 = vpack.c.b16 %v594, %v590
    %v923 = vpack.c.b16 %v599, %v595
    %v924 = vpack.c.b16 %v600, %v596
    %v925 = vpack.c.b16 %v601, %v597
    %v926 = vpack.c.b16 %v602, %v598
    %v927 = vpack.c.b16 %v607, %v603
    %v928 = vpack.c.b16 %v608, %v604
    %v929 = vpack.c.b16 %v609, %v605
    %v930 = vpack.c.b16 %v610, %v606
    %v931 = vpack.c.b16 %v615, %v611
    %v932 = vpack.c.b16 %v616, %v612
    %v933 = vpack.c.b16 %v617, %v613
    %v934 = vpack.c.b16 %v618, %v614
    %v935 = vpack.c.b16 %v623, %v619
    %v936 = vpack.c.b16 %v624, %v620
    %v937 = vpack.c.b16 %v625, %v621
    %v938 = vpack.c.b16 %v626, %v622
    %v939 = vpack.c.b16 %v631, %v627
    %v940 = vpack.c.b16 %v632, %v628
    %v941 = vpack.c.b16 %v633, %v629
    %v942 = vpack.c.b16 %v634, %v630
    %v943 = vpack.c.b16 %v639, %v635
    %v944 = vpack.c.b16 %v640, %v636
    %v945 = vpack.c.b16 %v641, %v637
    %v946 = vpack.c.b16 %v642, %v638
    %v947 = vpack.c.b16 %v647, %v643
    %v948 = vpack.c.b16 %v648, %v644
    %v949 = vpack.c.b16 %v649, %v645
    %v950 = vpack.c.b16 %v650, %v646
    %v951 = vpack.c.b16 %v655, %v651
    %v952 = vpack.c.b16 %v656, %v652
    %v953 = vpack.c.b16 %v657, %v653
    %v954 = vpack.c.b16 %v658, %v654
    %v955 = vpack.c.b16 %v663, %v659
    %v956 = vpack.c.b16 %v664, %v660
    %v957 = vpack.c.b16 %v665, %v661
    %v958 = vpack.c.b16 %v666, %v662
    %v959 = vpack.c.b16 %v671, %v667
    %v960 = vpack.c.b16 %v672, %v668
    %v961 = vpack.c.b16 %v673, %v669
    %v962 = vpack.c.b16 %v674, %v670
    %v963 = vpack.c.b16 %v679, %v675
    %v964 = vpack.c.b16 %v680, %v676
    %v965 = vpack.c.b16 %v681, %v677
    %v966 = vpack.c.b16 %v682, %v678
    %v967 = vpack.c.b16 %v687, %v683
    %v968 = vpack.c.b16 %v688, %v684
    %v969 = vpack.c.b16 %v689, %v685
    %v970 = vpack.c.b16 %v690, %v686
    %v971 = vpack.c.b16 %v695, %v691
    %v972 = vpack.c.b16 %v696, %v692
    %v973 = vpack.c.b16 %v697, %v693
    %v974 = vpack.c.b16 %v698, %v694
    %v975 = vpack.c.b16 %v703, %v699
    %v976 = vpack.c.b16 %v704, %v700
    %v977 = vpack.c.b16 %v705, %v701
    %v978 = vpack.c.b16 %v706, %v702
    %v979 = vpack.c.b16 %v711, %v707
    %v980 = vpack.c.b16 %v712, %v708
    %v981 = vpack.c.b16 %v713, %v709
    %v982 = vpack.c.b16 %v714, %v710
    %v983 = vpack.c.b16 %v719, %v715
    %v984 = vpack.c.b16 %v720, %v716
    %v985 = vpack.c.b16 %v721, %v717
    %v986 = vpack.c.b16 %v722, %v718
    %v987 = vpack.c.b16 %v727, %v723
    %v988 = vpack.c.b16 %v728, %v724
    %v989 = vpack.c.b16 %v729, %v725
    %v990 = vpack.c.b16 %v730, %v726
    %v991 = vpack.c.b16 %v735, %v731
    %v992 = vpack.c.b16 %v736, %v732
    %v993 = vpack.c.b16 %v737, %v733
    %v994 = vpack.c.b16 %v738, %v734
    %v995 = vpack.c.b16 %v743, %v739
    %v996 = vpack.c.b16 %v744, %v740
    %v997 = vpack.c.b16 %v745, %v741
    %v998 = vpack.c.b16 %v746, %v742
    %v999 = vpack.c.b16 %v751, %v747
    %v1000 = vpack.c.b16 %v752, %v748
    %v1001 = vpack.c.b16 %v753, %v749
    %v1002 = vpack.c.b16 %v754, %v750
    %v1003 = vpack.c.b16 %v759, %v755
    %v1004 = vpack.c.b16 %v760, %v756
    %v1005 = vpack.c.b16 %v761, %v757
    %v1006 = vpack.c.b16 %v762, %v758
    %v1007 = vpack.c.b16 %v767, %v763
    %v1008 = vpack.c.b16 %v768, %v764
    %v1009 = vpack.c.b16 %v769, %v765
    %v1010 = vpack.c.b16 %v770, %v766
    %v1011 = vpack.c.b16 %v775, %v771
    %v1012 = vpack.c.b16 %v776, %v772
    %v1013 = vpack.c.b16 %v777, %v773
    %v1014 = vpack.c.b16 %v778, %v774
    %v1015 = vpack.c.b16 %v783, %v779
    %v1016 = vpack.c.b16 %v784, %v780
    %v1017 = vpack.c.b16 %v785, %v781
    %v1018 = vpack.c.b16 %v786, %v782
    %v1019 = vpack.c.b16 %v791, %v787
    %v1020 = vpack.c.b16 %v792, %v788
    %v1021 = vpack.c.b16 %v793, %v789
    %v1022 = vpack.c.b16 %v794, %v790
    %v1023 = vpack.c.b16 %v799, %v795
    %v1024 = vpack.c.b16 %v800, %v796
    %v1025 = vpack.c.b16 %v801, %v797
    %v1026 = vpack.c.b16 %v802, %v798
    %v1027 = vpack.c.b16 %v807, %v803
    %v1028 = vpack.c.b16 %v808, %v804
    %v1029 = vpack.c.b16 %v809, %v805
    %v1030 = vpack.c.b16 %v810, %v806
    %v1031 = vpack.c.b16 %v815, %v811
    %v1032 = vpack.c.b16 %v816, %v812
    %v1033 = vpack.c.b16 %v817, %v813
    %v1034 = vpack.c.b16 %v818, %v814
    %v1035 = vpack.c.b16 %v823, %v819
    %v1036 = vpack.c.b16 %v824, %v820
    %v1037 = vpack.c.b16 %v825, %v821
    %v1038 = vpack.c.b16 %v826, %v822
    %v1039 = vpack.c.b16 %v831, %v827
    %v1040 = vpack.c.b16 %v832, %v828
    %v1041 = vpack.c.b16 %v833, %v829
    %v1042 = vpack.c.b16 %v834, %v830
    %v1043 = vpack.c.b16 %v839, %v835
    %v1044 = vpack.c.b16 %v840, %v836
    %v1045 = vpack.c.b16 %v841, %v837
    %v1046 = vpack.c.b16 %v842, %v838
    %v1047 = vpack.c.b16 %v847, %v843
    %v1048 = vpack.c.b16 %v848, %v844
    %v1049 = vpack.c.b16 %v849, %v845
    %v1050 = vpack.c.b16 %v850, %v846
    %v1051 = vpack.c.b16 %v855, %v851
    %v1052 = vpack.c.b16 %v856, %v852
    %v1053 = vpack.c.b16 %v857, %v853
    %v1054 = vpack.c.b16 %v858, %v854
    %vm1251 = vcmask 130048
    %v1253 = vsel %vm1251, %v52, 0
    %1255 = vmatprep.subr.bf16.mxu0 %v888
    %1256 = vmatpush1.bf16.msra.mxu0 %v887
    %1257 = vmatprep.subr.bf16.mxu0 %v884
    %1258 = vmatpush1.bf16.msra.mxu0 %v883
    %1259 = vmatprep.subr.bf16.mxu0 %v880
    %1260 = vmatpush1.bf16.msra.mxu0 %v879
    %1261 = vmatprep.subr.bf16.mxu0 %v876
    %1262 = vmatpush1.bf16.msra.mxu0 %v875
    %1263 = vmatprep.subr.bf16.mxu0 %v872
    %1264 = vmatpush1.bf16.msra.mxu0 %v871
    %1265 = vmatprep.subr.bf16.mxu0 %v868
    %1266 = vmatpush1.bf16.msra.mxu0 %v867
    %1267 = vmatprep.subr.bf16.mxu0 %v864
    %1268 = vmatpush1.bf16.msra.mxu0 %v863
    %1269 = vmatprep.subr.bf16.mxu0 %v860
    %1270 = vmatpush1.bf16.msra.mxu0 %v859
    %1271 = vmatprep.subr.bf16.mxu0 %v920
    %1272 = vmatpush2.bf16.msra.mxu0 %v919
    %1273 = vmatprep.subr.bf16.mxu0 %v916
    %1274 = vmatpush2.bf16.msra.mxu0 %v915
    %1275 = vmatprep.subr.bf16.mxu0 %v912
    %1276 = vmatpush2.bf16.msra.mxu0 %v911
    %1277 = vmatprep.subr.bf16.mxu0 %v908
    %1278 = vmatpush2.bf16.msra.mxu0 %v907
    %1279 = vmatprep.subr.bf16.mxu0 %v904
    %1280 = vmatpush2.bf16.msra.mxu0 %v903
    %1281 = vmatprep.subr.bf16.mxu0 %v900
    %1282 = vmatpush2.bf16.msra.mxu0 %v899
    %1283 = vmatprep.subr.bf16.mxu0 %v896
    %1284 = vmatpush2.bf16.msra.mxu0 %v895
    %1285 = vmatprep.subr.bf16.mxu0 %v892
    %1286 = vmatpush2.bf16.msra.mxu0 %v891
    %1287 = vmatprep.mubr.bf16.mxu0 %v47
    %1288 = vmatmul.mubr.bf16.gmra.mxu0 %v46
    %v1289 = vpop.f32.mrf.mxu0
    %v1290 = vadd.f32 %v254, %v1289
    %v1291 = vpop.f32.mrf.mxu0
    %v1292 = vadd.f32 %v258, %v1291
    %v1293 = vpop.f32.mrf.mxu0
    %v1294 = vpop.f32.mrf.mxu0
    %1295 = vdwg.mxu0
    %1296 = vmatprep.subr.bf16.mxu0 %v952
    %1297 = vmatpush1.bf16.msra.mxu0 %v951
    %1298 = vmatprep.subr.bf16.mxu0 %v948
    %1299 = vmatpush1.bf16.msra.mxu0 %v947
    %1300 = vmatprep.subr.bf16.mxu0 %v944
    %1301 = vmatpush1.bf16.msra.mxu0 %v943
    %1302 = vmatprep.subr.bf16.mxu0 %v940
    %1303 = vmatpush1.bf16.msra.mxu0 %v939
    %1304 = vmatprep.subr.bf16.mxu0 %v936
    %1305 = vmatpush1.bf16.msra.mxu0 %v935
    %1306 = vmatprep.subr.bf16.mxu0 %v932
    %1307 = vmatpush1.bf16.msra.mxu0 %v931
    %1308 = vmatprep.subr.bf16.mxu0 %v928
    %1309 = vmatpush1.bf16.msra.mxu0 %v927
    %1310 = vmatprep.subr.bf16.mxu0 %v924
    %1311 = vmatpush1.bf16.msra.mxu0 %v923
    %1312 = vmatprep.subr.bf16.mxu0 %v984
    %1313 = vmatpush2.bf16.msra.mxu0 %v983
    %1314 = vmatprep.subr.bf16.mxu0 %v980
    %1315 = vmatpush2.bf16.msra.mxu0 %v979
    %1316 = vmatprep.subr.bf16.mxu0 %v976
    %1317 = vmatpush2.bf16.msra.mxu0 %v975
    %1318 = vmatprep.subr.bf16.mxu0 %v972
    %1319 = vmatpush2.bf16.msra.mxu0 %v971
    %1320 = vmatprep.subr.bf16.mxu0 %v968
    %1321 = vmatpush2.bf16.msra.mxu0 %v967
    %1322 = vmatprep.subr.bf16.mxu0 %v964
    %1323 = vmatpush2.bf16.msra.mxu0 %v963
    %1324 = vmatprep.subr.bf16.mxu0 %v960
    %1325 = vmatpush2.bf16.msra.mxu0 %v959
    %1326 = vmatprep.subr.bf16.mxu0 %v956
    %1327 = vmatpush2.bf16.msra.mxu0 %v955
    %1328 = vmatprep.mubr.bf16.mxu0 %v49
    %1329 = vmatmul.mubr.bf16.gmra.mxu0 %v48
    %v1330 = vpop.f32.mrf.mxu0
    %v1331 = vadd.f32 %v1290, %v1330
    %v1332 = vpop.f32.mrf.mxu0
    %v1333 = vadd.f32 %v1292, %v1332
    %v1334 = vpop.f32.mrf.mxu0
    %v1335 = vpop.f32.mrf.mxu0
    %1336 = vdwg.mxu0
    %1337 = vmatprep.subr.bf16.mxu0 %v1016
    %1338 = vmatpush1.bf16.msra.mxu0 %v1015
    %1339 = vmatprep.subr.bf16.mxu0 %v1012
    %1340 = vmatpush1.bf16.msra.mxu0 %v1011
    %1341 = vmatprep.subr.bf16.mxu0 %v1008
    %1342 = vmatpush1.bf16.msra.mxu0 %v1007
    %1343 = vmatprep.subr.bf16.mxu0 %v1004
    %1344 = vmatpush1.bf16.msra.mxu0 %v1003
    %1345 = vmatprep.subr.bf16.mxu0 %v1000
    %1346 = vmatpush1.bf16.msra.mxu0 %v999
    %1347 = vmatprep.subr.bf16.mxu0 %v996
    %1348 = vmatpush1.bf16.msra.mxu0 %v995
    %1349 = vmatprep.subr.bf16.mxu0 %v992
    %1350 = vmatpush1.bf16.msra.mxu0 %v991
    %1351 = vmatprep.subr.bf16.mxu0 %v988
    %1352 = vmatpush1.bf16.msra.mxu0 %v987
    %1353 = vmatprep.subr.bf16.mxu0 %v1048
    %1354 = vmatpush2.bf16.msra.mxu0 %v1047
    %1355 = vmatprep.subr.bf16.mxu0 %v1044
    %1356 = vmatpush2.bf16.msra.mxu0 %v1043
    %1357 = vmatprep.subr.bf16.mxu0 %v1040
    %1358 = vmatpush2.bf16.msra.mxu0 %v1039
    %1359 = vmatprep.subr.bf16.mxu0 %v1036
    %1360 = vmatpush2.bf16.msra.mxu0 %v1035
    %1361 = vmatprep.subr.bf16.mxu0 %v1032
    %1362 = vmatpush2.bf16.msra.mxu0 %v1031
    %1363 = vmatprep.subr.bf16.mxu0 %v1028
    %1364 = vmatpush2.bf16.msra.mxu0 %v1027
    %1365 = vmatprep.subr.bf16.mxu0 %v1024
    %1366 = vmatpush2.bf16.msra.mxu0 %v1023
    %1367 = vmatprep.subr.bf16.mxu0 %v1020
    %1368 = vmatpush2.bf16.msra.mxu0 %v1019
    %1369 = vmatprep.mubr.bf16.mxu0 %v51
    %1370 = vmatmul.mubr.bf16.gmra.mxu0 %v50
    %v1371 = vpop.f32.mrf.mxu0
    %v1372 = vadd.f32 %v1331, %v1371
    %v1373 = vpop.f32.mrf.mxu0
    %v1374 = vadd.f32 %v1333, %v1373
    %v1375 = vpop.f32.mrf.mxu0
    %v1376 = vpop.f32.mrf.mxu0
    %1377 = vdwg.mxu0
    %1378 = vmatprep.subr.bf16.mxu0 0
    %1379 = vmatpush1.bf16.msra.mxu0 0
    %1380 = vmatprep.subr.bf16.mxu0 0
    %1381 = vmatpush1.bf16.msra.mxu0 0
    %1382 = vmatprep.subr.bf16.mxu0 0
    %1383 = vmatpush1.bf16.msra.mxu0 0
    %1384 = vmatprep.subr.bf16.mxu0 0
    %1385 = vmatpush1.bf16.msra.mxu0 0
    %1386 = vmatprep.subr.bf16.mxu0 0
    %1387 = vmatpush1.bf16.msra.mxu0 0
    %1388 = vmatprep.subr.bf16.mxu0 0
    %1389 = vmatpush1.bf16.msra.mxu0 0
    %1390 = vmatprep.subr.bf16.mxu0 0
    %1391 = vmatpush1.bf16.msra.mxu0 0
    %1392 = vmatprep.subr.bf16.mxu0 %v1052
    %1393 = vmatpush1.bf16.msra.mxu0 %v1051
    %1394 = vmatprep.subr.bf16.mxu0 0
    %1395 = vmatpush2.bf16.msra.mxu0 0
    %1396 = vmatprep.subr.bf16.mxu0 0
    %1397 = vmatpush2.bf16.msra.mxu0 0
    %1398 = vmatprep.subr.bf16.mxu0 0
    %1399 = vmatpush2.bf16.msra.mxu0 0
    %1400 = vmatprep.subr.bf16.mxu0 0
    %1401 = vmatpush2.bf16.msra.mxu0 0
    %1402 = vmatprep.subr.bf16.mxu0 0
    %1403 = vmatpush2.bf16.msra.mxu0 0
    %1404 = vmatprep.subr.bf16.mxu0 0
    %1405 = vmatpush2.bf16.msra.mxu0 0
    %1406 = vmatprep.subr.bf16.mxu0 0
    %1407 = vmatpush2.bf16.msra.mxu0 0
    %1408 = vmatprep.subr.bf16.mxu0 0
    %1409 = vmatpush2.bf16.msra.mxu0 0
    %1410 = vmatprep.mubr.bf16.mxu0 0
    %1411 = vmatmul.mubr.bf16.gmra.mxu0 %v1253
    %v1412 = vpop.f32.mrf.mxu0
    %v1413 = vadd.f32 %v1372, %v1412
    %v1414 = vpop.f32.mrf.mxu0
    %v1415 = vadd.f32 %v1374, %v1414
    %v1416 = vpop.f32.mrf.mxu0
    %v1417 = vpop.f32.mrf.mxu0
    %1418 = vdwg.mxu0
    %1419 = vmatprep.subr.bf16.mxu0 %v890
    %1420 = vmatpush1.bf16.msra.mxu0 %v889
    %1421 = vmatprep.subr.bf16.mxu0 %v886
    %1422 = vmatpush1.bf16.msra.mxu0 %v885
    %1423 = vmatprep.subr.bf16.mxu0 %v882
    %1424 = vmatpush1.bf16.msra.mxu0 %v881
    %1425 = vmatprep.subr.bf16.mxu0 %v878
    %1426 = vmatpush1.bf16.msra.mxu0 %v877
    %1427 = vmatprep.subr.bf16.mxu0 %v874
    %1428 = vmatpush1.bf16.msra.mxu0 %v873
    %1429 = vmatprep.subr.bf16.mxu0 %v870
    %1430 = vmatpush1.bf16.msra.mxu0 %v869
    %1431 = vmatprep.subr.bf16.mxu0 %v866
    %1432 = vmatpush1.bf16.msra.mxu0 %v865
    %1433 = vmatprep.subr.bf16.mxu0 %v862
    %1434 = vmatpush1.bf16.msra.mxu0 %v861
    %1435 = vmatprep.subr.bf16.mxu0 %v922
    %1436 = vmatpush2.bf16.msra.mxu0 %v921
    %1437 = vmatprep.subr.bf16.mxu0 %v918
    %1438 = vmatpush2.bf16.msra.mxu0 %v917
    %1439 = vmatprep.subr.bf16.mxu0 %v914
    %1440 = vmatpush2.bf16.msra.mxu0 %v913
    %1441 = vmatprep.subr.bf16.mxu0 %v910
    %1442 = vmatpush2.bf16.msra.mxu0 %v909
    %1443 = vmatprep.subr.bf16.mxu0 %v906
    %1444 = vmatpush2.bf16.msra.mxu0 %v905
    %1445 = vmatprep.subr.bf16.mxu0 %v902
    %1446 = vmatpush2.bf16.msra.mxu0 %v901
    %1447 = vmatprep.subr.bf16.mxu0 %v898
    %1448 = vmatpush2.bf16.msra.mxu0 %v897
    %1449 = vmatprep.subr.bf16.mxu0 %v894
    %1450 = vmatpush2.bf16.msra.mxu0 %v893
    %1451 = vmatprep.mubr.bf16.mxu0 %v47
    %1452 = vmatmul.mubr.bf16.gmra.mxu0 %v46
    %v1453 = vpop.f32.mrf.mxu0
    %v1454 = vadd.f32 %v262, %v1453
    %v1455 = vpop.f32.mrf.mxu0
    %v1456 = vadd.f32 %v266, %v1455
    %v1457 = vpop.f32.mrf.mxu0
    %v1458 = vpop.f32.mrf.mxu0
    %1459 = vdwg.mxu0
    %1460 = vmatprep.subr.bf16.mxu0 %v954
    %1461 = vmatpush1.bf16.msra.mxu0 %v953
    %1462 = vmatprep.subr.bf16.mxu0 %v950
    %1463 = vmatpush1.bf16.msra.mxu0 %v949
    %1464 = vmatprep.subr.bf16.mxu0 %v946
    %1465 = vmatpush1.bf16.msra.mxu0 %v945
    %1466 = vmatprep.subr.bf16.mxu0 %v942
    %1467 = vmatpush1.bf16.msra.mxu0 %v941
    %1468 = vmatprep.subr.bf16.mxu0 %v938
    %1469 = vmatpush1.bf16.msra.mxu0 %v937
    %1470 = vmatprep.subr.bf16.mxu0 %v934
    %1471 = vmatpush1.bf16.msra.mxu0 %v933
    %1472 = vmatprep.subr.bf16.mxu0 %v930
    %1473 = vmatpush1.bf16.msra.mxu0 %v929
    %1474 = vmatprep.subr.bf16.mxu0 %v926
    %1475 = vmatpush1.bf16.msra.mxu0 %v925
    %1476 = vmatprep.subr.bf16.mxu0 %v986
    %1477 = vmatpush2.bf16.msra.mxu0 %v985
    %1478 = vmatprep.subr.bf16.mxu0 %v982
    %1479 = vmatpush2.bf16.msra.mxu0 %v981
    %1480 = vmatprep.subr.bf16.mxu0 %v978
    %1481 = vmatpush2.bf16.msra.mxu0 %v977
    %1482 = vmatprep.subr.bf16.mxu0 %v974
    %1483 = vmatpush2.bf16.msra.mxu0 %v973
    %1484 = vmatprep.subr.bf16.mxu0 %v970
    %1485 = vmatpush2.bf16.msra.mxu0 %v969
    %1486 = vmatprep.subr.bf16.mxu0 %v966
    %1487 = vmatpush2.bf16.msra.mxu0 %v965
    %1488 = vmatprep.subr.bf16.mxu0 %v962
    %1489 = vmatpush2.bf16.msra.mxu0 %v961
    %1490 = vmatprep.subr.bf16.mxu0 %v958
    %1491 = vmatpush2.bf16.msra.mxu0 %v957
    %1492 = vmatprep.mubr.bf16.mxu0 %v49
    %1493 = vmatmul.mubr.bf16.gmra.mxu0 %v48
    %v1494 = vpop.f32.mrf.mxu0
    %v1495 = vadd.f32 %v1454, %v1494
    %v1496 = vpop.f32.mrf.mxu0
    %v1497 = vadd.f32 %v1456, %v1496
    %v1498 = vpop.f32.mrf.mxu0
    %v1499 = vpop.f32.mrf.mxu0
    %1500 = vdwg.mxu0
    %1501 = vmatprep.subr.bf16.mxu0 %v1018
    %1502 = vmatpush1.bf16.msra.mxu0 %v1017
    %1503 = vmatprep.subr.bf16.mxu0 %v1014
    %1504 = vmatpush1.bf16.msra.mxu0 %v1013
    %1505 = vmatprep.subr.bf16.mxu0 %v1010
    %1506 = vmatpush1.bf16.msra.mxu0 %v1009
    %1507 = vmatprep.subr.bf16.mxu0 %v1006
    %1508 = vmatpush1.bf16.msra.mxu0 %v1005
    %1509 = vmatprep.subr.bf16.mxu0 %v1002
    %1510 = vmatpush1.bf16.msra.mxu0 %v1001
    %1511 = vmatprep.subr.bf16.mxu0 %v998
    %1512 = vmatpush1.bf16.msra.mxu0 %v997
    %1513 = vmatprep.subr.bf16.mxu0 %v994
    %1514 = vmatpush1.bf16.msra.mxu0 %v993
    %1515 = vmatprep.subr.bf16.mxu0 %v990
    %1516 = vmatpush1.bf16.msra.mxu0 %v989
    %1517 = vmatprep.subr.bf16.mxu0 %v1050
    %1518 = vmatpush2.bf16.msra.mxu0 %v1049
    %1519 = vmatprep.subr.bf16.mxu0 %v1046
    %1520 = vmatpush2.bf16.msra.mxu0 %v1045
    %1521 = vmatprep.subr.bf16.mxu0 %v1042
    %1522 = vmatpush2.bf16.msra.mxu0 %v1041
    %1523 = vmatprep.subr.bf16.mxu0 %v1038
    %1524 = vmatpush2.bf16.msra.mxu0 %v1037
    %1525 = vmatprep.subr.bf16.mxu0 %v1034
    %1526 = vmatpush2.bf16.msra.mxu0 %v1033
    %1527 = vmatprep.subr.bf16.mxu0 %v1030
    %1528 = vmatpush2.bf16.msra.mxu0 %v1029
    %1529 = vmatprep.subr.bf16.mxu0 %v1026
    %1530 = vmatpush2.bf16.msra.mxu0 %v1025
    %1531 = vmatprep.subr.bf16.mxu0 %v1022
    %1532 = vmatpush2.bf16.msra.mxu0 %v1021
    %1533 = vmatprep.mubr.bf16.mxu0 %v51
    %1534 = vmatmul.mubr.bf16.gmra.mxu0 %v50
    %v1535 = vpop.f32.mrf.mxu0
    %v1536 = vadd.f32 %v1495, %v1535
    %v1537 = vpop.f32.mrf.mxu0
    %v1538 = vadd.f32 %v1497, %v1537
    %v1539 = vpop.f32.mrf.mxu0
    %v1540 = vpop.f32.mrf.mxu0
    %1541 = vdwg.mxu0
    %1542 = vmatprep.subr.bf16.mxu0 0
    %1543 = vmatpush1.bf16.msra.mxu0 0
    %1544 = vmatprep.subr.bf16.mxu0 0
    %1545 = vmatpush1.bf16.msra.mxu0 0
    %1546 = vmatprep.subr.bf16.mxu0 0
    %1547 = vmatpush1.bf16.msra.mxu0 0
    %1548 = vmatprep.subr.bf16.mxu0 0
    %1549 = vmatpush1.bf16.msra.mxu0 0
    %1550 = vmatprep.subr.bf16.mxu0 0
    %1551 = vmatpush1.bf16.msra.mxu0 0
    %1552 = vmatprep.subr.bf16.mxu0 0
    %1553 = vmatpush1.bf16.msra.mxu0 0
    %1554 = vmatprep.subr.bf16.mxu0 0
    %1555 = vmatpush1.bf16.msra.mxu0 0
    %1556 = vmatprep.subr.bf16.mxu0 %v1054
    %1557 = vmatpush1.bf16.msra.mxu0 %v1053
    %1558 = vmatprep.subr.bf16.mxu0 0
    %1559 = vmatpush2.bf16.msra.mxu0 0
    %1560 = vmatprep.subr.bf16.mxu0 0
    %1561 = vmatpush2.bf16.msra.mxu0 0
    %1562 = vmatprep.subr.bf16.mxu0 0
    %1563 = vmatpush2.bf16.msra.mxu0 0
    %1564 = vmatprep.subr.bf16.mxu0 0
    %1565 = vmatpush2.bf16.msra.mxu0 0
    %1566 = vmatprep.subr.bf16.mxu0 0
    %1567 = vmatpush2.bf16.msra.mxu0 0
    %1568 = vmatprep.subr.bf16.mxu0 0
    %1569 = vmatpush2.bf16.msra.mxu0 0
    %1570 = vmatprep.subr.bf16.mxu0 0
    %1571 = vmatpush2.bf16.msra.mxu0 0
    %1572 = vmatprep.subr.bf16.mxu0 0
    %1573 = vmatpush2.bf16.msra.mxu0 0
    %1574 = vmatprep.mubr.bf16.mxu0 0
    %1575 = vmatmul.mubr.bf16.gmra.mxu0 %v1253
    %v1576 = vpop.f32.mrf.mxu0
    %v1577 = vadd.f32 %v1536, %v1576
    %v1578 = vpop.f32.mrf.mxu0
    %v1579 = vadd.f32 %v1538, %v1578
    %v1580 = vpop.f32.mrf.mxu0
    %v1581 = vpop.f32.mrf.mxu0
    %1582 = vdwg.mxu0
    %v1583 = vmax.f32 %v1413, 0.0
    %v1584 = vmax.f32 %v1415, 0.0
    %v1585 = vmax.f32 %v1577, 0.0
    %v1586 = vmax.f32 %v1579, 0.0
    %v1587 = vpack.c.bf16 %v1583, %v1583
    %v1588 = vpack.c.bf16 %v1584, %v1584
    %v1589 = vpack.c.bf16 %v1585, %v1585
    %v1590 = vpack.c.bf16 %v1586, %v1586
    %v1591 = vld [vmem:[%s4] sm:$0xff]
    %v1592 = vld [vmem:[%s4 + $0x8] sm:$0xff]
    %v1593 = vld [vmem:[%s4 + $0x10] sm:$0xff]
    %v1594 = vld [vmem:[%s4 + $0x18] sm:$0xff]
    %v1595 = vld [vmem:[%s4 + $0x20] sm:$0xff]
    %v1596 = vld [vmem:[%s4 + $0x28] sm:$0xff]
    %v1597 = vld [vmem:[%s4 + $0x30] sm:$0xff]
    %v1598 = vld [vmem:[%s4 + $0x38] sm:$0xff]
    %v1599 = vld [vmem:[%s4 + $0x40] sm:$0xff]
    %v1600 = vld [vmem:[%s4 + $0x48] sm:$0xff]
    %v1601 = vld [vmem:[%s4 + $0x50] sm:$0xff]
    %v1602 = vld [vmem:[%s4 + $0x58] sm:$0xff]
    %v1603 = vld [vmem:[%s4 + $0x60] sm:$0xff]
    %v1604 = vld [vmem:[%s4 + $0x68] sm:$0xff]
    %v1605 = vld [vmem:[%s4 + $0x70] sm:$0xff]
    %v1606 = vld [vmem:[%s4 + $0x78] sm:$0xff]
    %v1607 = vld [vmem:[%s4 + $0x80] sm:$0xff]
    %v1608 = vld [vmem:[%s4 + $0x88] sm:$0xff]
    %v1609 = vld [vmem:[%s4 + $0x90] sm:$0xff]
    %v1610 = vld [vmem:[%s4 + $0x98] sm:$0xff]
    %v1611 = vld [vmem:[%s4 + $0xa0] sm:$0xff]
    %v1612 = vld [vmem:[%s4 + $0xa8] sm:$0xff]
    %v1613 = vld [vmem:[%s4 + $0xb0] sm:$0xff]
    %v1614 = vld [vmem:[%s4 + $0xb8] sm:$0xff]
    %v1615 = vld [vmem:[%s4 + $0xc0] sm:$0xff]
    %v1616 = vld [vmem:[%s4 + $0xc8] sm:$0xff]
    %v1617 = vld [vmem:[%s4 + $0xd0] sm:$0xff]
    %v1618 = vld [vmem:[%s4 + $0xd8] sm:$0xff]
    %v1619 = vld [vmem:[%s4 + $0xe0] sm:$0xff]
    %v1620 = vld [vmem:[%s4 + $0xe8] sm:$0xff]
    %v1621 = vld [vmem:[%s4 + $0xf0] sm:$0xff]
    %v1622 = vld [vmem:[%s4 + $0xf8] sm:$0xff]
    %v1623 = vld [vmem:[%s4 + $0x100] sm:$0xff]
    %v1624 = vld [vmem:[%s4 + $0x108] sm:$0xff]
    %v1625 = vld [vmem:[%s4 + $0x110] sm:$0xff]
    %v1626 = vld [vmem:[%s4 + $0x118] sm:$0xff]
    %v1627 = vld [vmem:[%s4 + $0x120] sm:$0xff]
    %v1628 = vld [vmem:[%s4 + $0x128] sm:$0xff]
    %v1629 = vld [vmem:[%s4 + $0x130] sm:$0xff]
    %v1630 = vld [vmem:[%s4 + $0x138] sm:$0xff]
    %v1631 = vld [vmem:[%s4 + $0x140] sm:$0xff]
    %v1632 = vld [vmem:[%s4 + $0x148] sm:$0xff]
    %v1633 = vld [vmem:[%s4 + $0x150] sm:$0xff]
    %v1634 = vld [vmem:[%s4 + $0x158] sm:$0xff]
    %v1635 = vld [vmem:[%s4 + $0x160] sm:$0xff]
    %v1636 = vld [vmem:[%s4 + $0x168] sm:$0xff]
    %v1637 = vld [vmem:[%s4 + $0x170] sm:$0xff]
    %v1638 = vld [vmem:[%s4 + $0x178] sm:$0xff]
    %v1639 = vld [vmem:[%s4 + $0x180] sm:$0xff]
    %v1640 = vld [vmem:[%s4 + $0x188] sm:$0xff]
    %v1641 = vld [vmem:[%s4 + $0x190] sm:$0xff]
    %v1642 = vld [vmem:[%s4 + $0x198] sm:$0xff]
    %v1643 = vld [vmem:[%s4 + $0x1a0] sm:$0xff]
    %v1644 = vld [vmem:[%s4 + $0x1a8] sm:$0xff]
    %v1645 = vld [vmem:[%s4 + $0x1b0] sm:$0xff]
    %v1646 = vld [vmem:[%s4 + $0x1b8] sm:$0xff]
    %v1647 = vld [vmem:[%s4 + $0x1c0] sm:$0xff]
    %v1648 = vld [vmem:[%s4 + $0x1c8] sm:$0xff]
    %v1649 = vld [vmem:[%s4 + $0x1d0] sm:$0xff]
    %v1650 = vld [vmem:[%s4 + $0x1d8] sm:$0xff]
    %v1651 = vld [vmem:[%s4 + $0x1e0] sm:$0xff]
    %v1652 = vld [vmem:[%s4 + $0x1e8] sm:$0xff]
    %v1653 = vld [vmem:[%s4 + $0x1f0] sm:$0xff]
    %v1654 = vld [vmem:[%s4 + $0x1f8] sm:$0xff]
    %v1655 = vld [vmem:[%s5] sm:$0x3]
    %v1657 = vlaneseq
    %v1658 = vshrl.u32 %v1657, 7
    %v1659 = vsub.s32 0, %v1658
    %v1660 = vrot.slane %v1655, %v1659
    %v1661 = vlaneseq
    %v1662 = vshrl.u32 %v1661, 7
    %v1663 = vsub.s32 1, %v1662
    %v1664 = vrot.slane %v1655, %v1663
    %v1731 = vunpack.c.l.b16 %v1591
    %v1732 = vunpack.c.h.b16 %v1591
    %v1733 = vunpack.c.l.b16 %v1592
    %v1734 = vunpack.c.h.b16 %v1592
    %v1735 = vunpack.c.l.b16 %v1593
    %v1736 = vunpack.c.h.b16 %v1593
    %v1737 = vunpack.c.l.b16 %v1594
    %v1738 = vunpack.c.h.b16 %v1594
    %v1739 = vunpack.c.l.b16 %v1595
    %v1740 = vunpack.c.h.b16 %v1595
    %v1741 = vunpack.c.l.b16 %v1596
    %v1742 = vunpack.c.h.b16 %v1596
    %v1743 = vunpack.c.l.b16 %v1597
    %v1744 = vunpack.c.h.b16 %v1597
    %v1745 = vunpack.c.l.b16 %v1598
    %v1746 = vunpack.c.h.b16 %v1598
    %v1747 = vunpack.c.l.b16 %v1599
    %v1748 = vunpack.c.h.b16 %v1599
    %v1749 = vunpack.c.l.b16 %v1600
    %v1750 = vunpack.c.h.b16 %v1600
    %v1751 = vunpack.c.l.b16 %v1601
    %v1752 = vunpack.c.h.b16 %v1601
    %v1753 = vunpack.c.l.b16 %v1602
    %v1754 = vunpack.c.h.b16 %v1602
    %v1755 = vunpack.c.l.b16 %v1603
    %v1756 = vunpack.c.h.b16 %v1603
    %v1757 = vunpack.c.l.b16 %v1604
    %v1758 = vunpack.c.h.b16 %v1604
    %v1759 = vunpack.c.l.b16 %v1605
    %v1760 = vunpack.c.h.b16 %v1605
    %v1761 = vunpack.c.l.b16 %v1606
    %v1762 = vunpack.c.h.b16 %v1606
    %v1763 = vunpack.c.l.b16 %v1607
    %v1764 = vunpack.c.h.b16 %v1607
    %v1765 = vunpack.c.l.b16 %v1608
    %v1766 = vunpack.c.h.b16 %v1608
    %v1767 = vunpack.c.l.b16 %v1609
    %v1768 = vunpack.c.h.b16 %v1609
    %v1769 = vunpack.c.l.b16 %v1610
    %v1770 = vunpack.c.h.b16 %v1610
    %v1771 = vunpack.c.l.b16 %v1611
    %v1772 = vunpack.c.h.b16 %v1611
    %v1773 = vunpack.c.l.b16 %v1612
    %v1774 = vunpack.c.h.b16 %v1612
    %v1775 = vunpack.c.l.b16 %v1613
    %v1776 = vunpack.c.h.b16 %v1613
    %v1777 = vunpack.c.l.b16 %v1614
    %v1778 = vunpack.c.h.b16 %v1614
    %v1779 = vunpack.c.l.b16 %v1615
    %v1780 = vunpack.c.h.b16 %v1615
    %v1781 = vunpack.c.l.b16 %v1616
    %v1782 = vunpack.c.h.b16 %v1616
    %v1783 = vunpack.c.l.b16 %v1617
    %v1784 = vunpack.c.h.b16 %v1617
    %v1785 = vunpack.c.l.b16 %v1618
    %v1786 = vunpack.c.h.b16 %v1618
    %v1787 = vunpack.c.l.b16 %v1619
    %v1788 = vunpack.c.h.b16 %v1619
    %v1789 = vunpack.c.l.b16 %v1620
    %v1790 = vunpack.c.h.b16 %v1620
    %v1791 = vunpack.c.l.b16 %v1621
    %v1792 = vunpack.c.h.b16 %v1621
    %v1793 = vunpack.c.l.b16 %v1622
    %v1794 = vunpack.c.h.b16 %v1622
    %v1795 = vunpack.c.l.b16 %v1623
    %v1796 = vunpack.c.h.b16 %v1623
    %v1797 = vunpack.c.l.b16 %v1624
    %v1798 = vunpack.c.h.b16 %v1624
    %v1799 = vunpack.c.l.b16 %v1625
    %v1800 = vunpack.c.h.b16 %v1625
    %v1801 = vunpack.c.l.b16 %v1626
    %v1802 = vunpack.c.h.b16 %v1626
    %v1803 = vunpack.c.l.b16 %v1627
    %v1804 = vunpack.c.h.b16 %v1627
    %v1805 = vunpack.c.l.b16 %v1628
    %v1806 = vunpack.c.h.b16 %v1628
    %v1807 = vunpack.c.l.b16 %v1629
    %v1808 = vunpack.c.h.b16 %v1629
    %v1809 = vunpack.c.l.b16 %v1630
    %v1810 = vunpack.c.h.b16 %v1630
    %v1811 = vunpack.c.l.b16 %v1631
    %v1812 = vunpack.c.h.b16 %v1631
    %v1813 = vunpack.c.l.b16 %v1632
    %v1814 = vunpack.c.h.b16 %v1632
    %v1815 = vunpack.c.l.b16 %v1633
    %v1816 = vunpack.c.h.b16 %v1633
    %v1817 = vunpack.c.l.b16 %v1634
    %v1818 = vunpack.c.h.b16 %v1634
    %v1819 = vunpack.c.l.b16 %v1635
    %v1820 = vunpack.c.h.b16 %v1635
    %v1821 = vunpack.c.l.b16 %v1636
    %v1822 = vunpack.c.h.b16 %v1636
    %v1823 = vunpack.c.l.b16 %v1637
    %v1824 = vunpack.c.h.b16 %v1637
    %v1825 = vunpack.c.l.b16 %v1638
    %v1826 = vunpack.c.h.b16 %v1638
    %v1827 = vunpack.c.l.b16 %v1639
    %v1828 = vunpack.c.h.b16 %v1639
    %v1829 = vunpack.c.l.b16 %v1640
    %v1830 = vunpack.c.h.b16 %v1640
    %v1831 = vunpack.c.l.b16 %v1641
    %v1832 = vunpack.c.h.b16 %v1641
    %v1833 = vunpack.c.l.b16 %v1642
    %v1834 = vunpack.c.h.b16 %v1642
    %v1835 = vunpack.c.l.b16 %v1643
    %v1836 = vunpack.c.h.b16 %v1643
    %v1837 = vunpack.c.l.b16 %v1644
    %v1838 = vunpack.c.h.b16 %v1644
    %v1839 = vunpack.c.l.b16 %v1645
    %v1840 = vunpack.c.h.b16 %v1645
    %v1841 = vunpack.c.l.b16 %v1646
    %v1842 = vunpack.c.h.b16 %v1646
    %v1843 = vunpack.c.l.b16 %v1647
    %v1844 = vunpack.c.h.b16 %v1647
    %v1845 = vunpack.c.l.b16 %v1648
    %v1846 = vunpack.c.h.b16 %v1648
    %v1847 = vunpack.c.l.b16 %v1649
    %v1848 = vunpack.c.h.b16 %v1649
    %v1849 = vunpack.c.l.b16 %v1650
    %v1850 = vunpack.c.h.b16 %v1650
    %v1851 = vunpack.c.l.b16 %v1651
    %v1852 = vunpack.c.h.b16 %v1651
    %v1853 = vunpack.c.l.b16 %v1652
    %v1854 = vunpack.c.h.b16 %v1652
    %v1855 = vunpack.c.l.b16 %v1653
    %v1856 = vunpack.c.h.b16 %v1653
    %v1857 = vunpack.c.l.b16 %v1654
    %v1858 = vunpack.c.h.b16 %v1654
    %v1859 = vpack.c.b16 %v1733, %v1731
    %v1860 = vpack.c.b16 %v1734, %v1732
    %v1861 = vpack.c.b16 %v1737, %v1735
    %v1862 = vpack.c.b16 %v1738, %v1736
    %v1863 = vpack.c.b16 %v1741, %v1739
    %v1864 = vpack.c.b16 %v1742, %v1740
    %v1865 = vpack.c.b16 %v1745, %v1743
    %v1866 = vpack.c.b16 %v1746, %v1744
    %v1867 = vpack.c.b16 %v1749, %v1747
    %v1868 = vpack.c.b16 %v1750, %v1748
    %v1869 = vpack.c.b16 %v1753, %v1751
    %v1870 = vpack.c.b16 %v1754, %v1752
    %v1871 = vpack.c.b16 %v1757, %v1755
    %v1872 = vpack.c.b16 %v1758, %v1756
    %v1873 = vpack.c.b16 %v1761, %v1759
    %v1874 = vpack.c.b16 %v1762, %v1760
    %v1875 = vpack.c.b16 %v1765, %v1763
    %v1876 = vpack.c.b16 %v1766, %v1764
    %v1877 = vpack.c.b16 %v1769, %v1767
    %v1878 = vpack.c.b16 %v1770, %v1768
    %v1879 = vpack.c.b16 %v1773, %v1771
    %v1880 = vpack.c.b16 %v1774, %v1772
    %v1881 = vpack.c.b16 %v1777, %v1775
    %v1882 = vpack.c.b16 %v1778, %v1776
    %v1883 = vpack.c.b16 %v1781, %v1779
    %v1884 = vpack.c.b16 %v1782, %v1780
    %v1885 = vpack.c.b16 %v1785, %v1783
    %v1886 = vpack.c.b16 %v1786, %v1784
    %v1887 = vpack.c.b16 %v1789, %v1787
    %v1888 = vpack.c.b16 %v1790, %v1788
    %v1889 = vpack.c.b16 %v1793, %v1791
    %v1890 = vpack.c.b16 %v1794, %v1792
    %v1891 = vpack.c.b16 %v1797, %v1795
    %v1892 = vpack.c.b16 %v1798, %v1796
    %v1893 = vpack.c.b16 %v1801, %v1799
    %v1894 = vpack.c.b16 %v1802, %v1800
    %v1895 = vpack.c.b16 %v1805, %v1803
    %v1896 = vpack.c.b16 %v1806, %v1804
    %v1897 = vpack.c.b16 %v1809, %v1807
    %v1898 = vpack.c.b16 %v1810, %v1808
    %v1899 = vpack.c.b16 %v1813, %v1811
    %v1900 = vpack.c.b16 %v1814, %v1812
    %v1901 = vpack.c.b16 %v1817, %v1815
    %v1902 = vpack.c.b16 %v1818, %v1816
    %v1903 = vpack.c.b16 %v1821, %v1819
    %v1904 = vpack.c.b16 %v1822, %v1820
    %v1905 = vpack.c.b16 %v1825, %v1823
    %v1906 = vpack.c.b16 %v1826, %v1824
    %v1907 = vpack.c.b16 %v1829, %v1827
    %v1908 = vpack.c.b16 %v1830, %v1828
    %v1909 = vpack.c.b16 %v1833, %v1831
    %v1910 = vpack.c.b16 %v1834, %v1832
    %v1911 = vpack.c.b16 %v1837, %v1835
    %v1912 = vpack.c.b16 %v1838, %v1836
    %v1913 = vpack.c.b16 %v1841, %v1839
    %v1914 = vpack.c.b16 %v1842, %v1840
    %v1915 = vpack.c.b16 %v1845, %v1843
    %v1916 = vpack.c.b16 %v1846, %v1844
    %v1917 = vpack.c.b16 %v1849, %v1847
    %v1918 = vpack.c.b16 %v1850, %v1848
    %v1919 = vpack.c.b16 %v1853, %v1851
    %v1920 = vpack.c.b16 %v1854, %v1852
    %v1921 = vpack.c.b16 %v1857, %v1855
    %v1922 = vpack.c.b16 %v1858, %v1856
    %1987 = vmatprep.subr.bf16.mxu0 %v1874
    %1988 = vmatpush1.bf16.msra.mxu0 %v1873
    %1989 = vmatprep.subr.bf16.mxu0 %v1872
    %1990 = vmatpush1.bf16.msra.mxu0 %v1871
    %1991 = vmatprep.subr.bf16.mxu0 %v1870
    %1992 = vmatpush1.bf16.msra.mxu0 %v1869
    %1993 = vmatprep.subr.bf16.mxu0 %v1868
    %1994 = vmatpush1.bf16.msra.mxu0 %v1867
    %1995 = vmatprep.subr.bf16.mxu0 %v1866
    %1996 = vmatpush1.bf16.msra.mxu0 %v1865
    %1997 = vmatprep.subr.bf16.mxu0 %v1864
    %1998 = vmatpush1.bf16.msra.mxu0 %v1863
    %1999 = vmatprep.subr.bf16.mxu0 %v1862
    %2000 = vmatpush1.bf16.msra.mxu0 %v1861
    %2001 = vmatprep.subr.bf16.mxu0 %v1860
    %2002 = vmatpush1.bf16.msra.mxu0 %v1859
    %2003 = vmatprep.subr.bf16.mxu0 %v1890
    %2004 = vmatpush2.bf16.msra.mxu0 %v1889
    %2005 = vmatprep.subr.bf16.mxu0 %v1888
    %2006 = vmatpush2.bf16.msra.mxu0 %v1887
    %2007 = vmatprep.subr.bf16.mxu0 %v1886
    %2008 = vmatpush2.bf16.msra.mxu0 %v1885
    %2009 = vmatprep.subr.bf16.mxu0 %v1884
    %2010 = vmatpush2.bf16.msra.mxu0 %v1883
    %2011 = vmatprep.subr.bf16.mxu0 %v1882
    %2012 = vmatpush2.bf16.msra.mxu0 %v1881
    %2013 = vmatprep.subr.bf16.mxu0 %v1880
    %2014 = vmatpush2.bf16.msra.mxu0 %v1879
    %2015 = vmatprep.subr.bf16.mxu0 %v1878
    %2016 = vmatpush2.bf16.msra.mxu0 %v1877
    %2017 = vmatprep.subr.bf16.mxu0 %v1876
    %2018 = vmatpush2.bf16.msra.mxu0 %v1875
    %2019 = vmatprep.mubr.bf16.mxu0 %v1588
    %2020 = vmatmul.mubr.bf16.gmra.mxu0 %v1587
    %v2021 = vpop.f32.mrf.mxu0
    %v2022 = vadd.f32 %v1660, %v2021
    %v2023 = vpop.f32.mrf.mxu0
    %v2024 = vadd.f32 %v1664, %v2023
    %v2025 = vpop.f32.mrf.mxu0
    %v2026 = vpop.f32.mrf.mxu0
    %2027 = vdwg.mxu0
    %2028 = vmatprep.subr.bf16.mxu0 %v1906
    %2029 = vmatpush1.bf16.msra.mxu0 %v1905
    %2030 = vmatprep.subr.bf16.mxu0 %v1904
    %2031 = vmatpush1.bf16.msra.mxu0 %v1903
    %2032 = vmatprep.subr.bf16.mxu0 %v1902
    %2033 = vmatpush1.bf16.msra.mxu0 %v1901
    %2034 = vmatprep.subr.bf16.mxu0 %v1900
    %2035 = vmatpush1.bf16.msra.mxu0 %v1899
    %2036 = vmatprep.subr.bf16.mxu0 %v1898
    %2037 = vmatpush1.bf16.msra.mxu0 %v1897
    %2038 = vmatprep.subr.bf16.mxu0 %v1896
    %2039 = vmatpush1.bf16.msra.mxu0 %v1895
    %2040 = vmatprep.subr.bf16.mxu0 %v1894
    %2041 = vmatpush1.bf16.msra.mxu0 %v1893
    %2042 = vmatprep.subr.bf16.mxu0 %v1892
    %2043 = vmatpush1.bf16.msra.mxu0 %v1891
    %2044 = vmatprep.subr.bf16.mxu0 %v1922
    %2045 = vmatpush2.bf16.msra.mxu0 %v1921
    %2046 = vmatprep.subr.bf16.mxu0 %v1920
    %2047 = vmatpush2.bf16.msra.mxu0 %v1919
    %2048 = vmatprep.subr.bf16.mxu0 %v1918
    %2049 = vmatpush2.bf16.msra.mxu0 %v1917
    %2050 = vmatprep.subr.bf16.mxu0 %v1916
    %2051 = vmatpush2.bf16.msra.mxu0 %v1915
    %2052 = vmatprep.subr.bf16.mxu0 %v1914
    %2053 = vmatpush2.bf16.msra.mxu0 %v1913
    %2054 = vmatprep.subr.bf16.mxu0 %v1912
    %2055 = vmatpush2.bf16.msra.mxu0 %v1911
    %2056 = vmatprep.subr.bf16.mxu0 %v1910
    %2057 = vmatpush2.bf16.msra.mxu0 %v1909
    %2058 = vmatprep.subr.bf16.mxu0 %v1908
    %2059 = vmatpush2.bf16.msra.mxu0 %v1907
    %2060 = vmatprep.mubr.bf16.mxu0 %v1590
    %2061 = vmatmul.mubr.bf16.gmra.mxu0 %v1589
    %v2062 = vpop.f32.mrf.mxu0
    %v2063 = vadd.f32 %v2022, %v2062
    %v2064 = vpop.f32.mrf.mxu0
    %v2065 = vadd.f32 %v2024, %v2064
    %v2066 = vpop.f32.mrf.mxu0
    %v2067 = vpop.f32.mrf.mxu0
    %2068 = vdwg.mxu0
    %2069 = vst [vmem:[%s11] sm:$0xff] %v2063
    %2070 = vst [vmem:[%s11 + $0x8] sm:$0xff] %v2065
    %v2071 = vld [vmem:[%s1] sm:$0xff]
    %v2072 = vmul.f32 %v2071, %v2065
    %v2073 = vadd.f32 %v2072, %v2063
    %v2074 = vpack.c.bf16 %v2073, %v2073
    %v2075 = vld [vmem:[%s6] sm:$0xff]
    %v2076 = vld [vmem:[%s6 + $0x8] sm:$0xff]
    %v2077 = vld [vmem:[%s6 + $0x10] sm:$0xff]
    %v2078 = vld [vmem:[%s6 + $0x18] sm:$0xff]
    %v2079 = vld [vmem:[%s6 + $0x20] sm:$0xff]
    %v2080 = vld [vmem:[%s6 + $0x28] sm:$0xff]
    %v2081 = vld [vmem:[%s6 + $0x30] sm:$0xff]
    %v2082 = vld [vmem:[%s6 + $0x38] sm:$0xff]
    %v2083 = vld [vmem:[%s6 + $0x40] sm:$0xff]
    %v2084 = vld [vmem:[%s6 + $0x48] sm:$0xff]
    %v2085 = vld [vmem:[%s6 + $0x50] sm:$0xff]
    %v2086 = vld [vmem:[%s6 + $0x58] sm:$0xff]
    %v2087 = vld [vmem:[%s6 + $0x60] sm:$0xff]
    %v2088 = vld [vmem:[%s6 + $0x68] sm:$0xff]
    %v2089 = vld [vmem:[%s6 + $0x70] sm:$0xff]
    %v2090 = vld [vmem:[%s6 + $0x78] sm:$0xff]
    %v2091 = vld [vmem:[%s6 + $0x80] sm:$0xff]
    %v2092 = vld [vmem:[%s6 + $0x88] sm:$0xff]
    %v2093 = vld [vmem:[%s6 + $0x90] sm:$0xff]
    %v2094 = vld [vmem:[%s6 + $0x98] sm:$0xff]
    %v2095 = vld [vmem:[%s6 + $0xa0] sm:$0xff]
    %v2096 = vld [vmem:[%s6 + $0xa8] sm:$0xff]
    %v2097 = vld [vmem:[%s6 + $0xb0] sm:$0xff]
    %v2098 = vld [vmem:[%s6 + $0xb8] sm:$0xff]
    %v2099 = vld [vmem:[%s6 + $0xc0] sm:$0xff]
    %v2100 = vld [vmem:[%s6 + $0xc8] sm:$0xff]
    %v2101 = vld [vmem:[%s6 + $0xd0] sm:$0xff]
    %v2102 = vld [vmem:[%s6 + $0xd8] sm:$0xff]
    %v2103 = vld [vmem:[%s6 + $0xe0] sm:$0xff]
    %v2104 = vld [vmem:[%s6 + $0xe8] sm:$0xff]
    %v2105 = vld [vmem:[%s6 + $0xf0] sm:$0xff]
    %v2106 = vld [vmem:[%s6 + $0xf8] sm:$0xff]
    %v2107 = vld [vmem:[%s7] sm:$0xf]
    %v2109 = vlaneseq
    %v2110 = vshrl.u32 %v2109, 7
    %v2111 = vsub.s32 0, %v2110
    %v2112 = vrot.slane %v2107, %v2111
    %v2113 = vlaneseq
    %v2114 = vshrl.u32 %v2113, 7
    %v2115 = vsub.s32 1, %v2114
    %v2116 = vrot.slane %v2107, %v2115
    %v2117 = vlaneseq
    %v2118 = vshrl.u32 %v2117, 7
    %v2119 = vsub.s32 2, %v2118
    %v2120 = vrot.slane %v2107, %v2119
    %v2121 = vlaneseq
    %v2122 = vshrl.u32 %v2121, 7
    %v2123 = vsub.s32 3, %v2122
    %v2124 = vrot.slane %v2107, %v2123
    %v2161 = vunpack.c.l.b16 %v2075
    %v2162 = vunpack.c.h.b16 %v2075
    %v2163 = vunpack.c.l.b16 %v2076
    %v2164 = vunpack.c.h.b16 %v2076
    %v2165 = vunpack.c.l.b16 %v2077
    %v2166 = vunpack.c.h.b16 %v2077
    %v2167 = vunpack.c.l.b16 %v2078
    %v2168 = vunpack.c.h.b16 %v2078
    %v2169 = vunpack.c.l.b16 %v2079
    %v2170 = vunpack.c.h.b16 %v2079
    %v2171 = vunpack.c.l.b16 %v2080
    %v2172 = vunpack.c.h.b16 %v2080
    %v2173 = vunpack.c.l.b16 %v2081
    %v2174 = vunpack.c.h.b16 %v2081
    %v2175 = vunpack.c.l.b16 %v2082
    %v2176 = vunpack.c.h.b16 %v2082
    %v2177 = vunpack.c.l.b16 %v2083
    %v2178 = vunpack.c.h.b16 %v2083
    %v2179 = vunpack.c.l.b16 %v2084
    %v2180 = vunpack.c.h.b16 %v2084
    %v2181 = vunpack.c.l.b16 %v2085
    %v2182 = vunpack.c.h.b16 %v2085
    %v2183 = vunpack.c.l.b16 %v2086
    %v2184 = vunpack.c.h.b16 %v2086
    %v2185 = vunpack.c.l.b16 %v2087
    %v2186 = vunpack.c.h.b16 %v2087
    %v2187 = vunpack.c.l.b16 %v2088
    %v2188 = vunpack.c.h.b16 %v2088
    %v2189 = vunpack.c.l.b16 %v2089
    %v2190 = vunpack.c.h.b16 %v2089
    %v2191 = vunpack.c.l.b16 %v2090
    %v2192 = vunpack.c.h.b16 %v2090
    %v2193 = vunpack.c.l.b16 %v2091
    %v2194 = vunpack.c.h.b16 %v2091
    %v2195 = vunpack.c.l.b16 %v2092
    %v2196 = vunpack.c.h.b16 %v2092
    %v2197 = vunpack.c.l.b16 %v2093
    %v2198 = vunpack.c.h.b16 %v2093
    %v2199 = vunpack.c.l.b16 %v2094
    %v2200 = vunpack.c.h.b16 %v2094
    %v2201 = vunpack.c.l.b16 %v2095
    %v2202 = vunpack.c.h.b16 %v2095
    %v2203 = vunpack.c.l.b16 %v2096
    %v2204 = vunpack.c.h.b16 %v2096
    %v2205 = vunpack.c.l.b16 %v2097
    %v2206 = vunpack.c.h.b16 %v2097
    %v2207 = vunpack.c.l.b16 %v2098
    %v2208 = vunpack.c.h.b16 %v2098
    %v2209 = vunpack.c.l.b16 %v2099
    %v2210 = vunpack.c.h.b16 %v2099
    %v2211 = vunpack.c.l.b16 %v2100
    %v2212 = vunpack.c.h.b16 %v2100
    %v2213 = vunpack.c.l.b16 %v2101
    %v2214 = vunpack.c.h.b16 %v2101
    %v2215 = vunpack.c.l.b16 %v2102
    %v2216 = vunpack.c.h.b16 %v2102
    %v2217 = vunpack.c.l.b16 %v2103
    %v2218 = vunpack.c.h.b16 %v2103
    %v2219 = vunpack.c.l.b16 %v2104
    %v2220 = vunpack.c.h.b16 %v2104
    %v2221 = vunpack.c.l.b16 %v2105
    %v2222 = vunpack.c.h.b16 %v2105
    %v2223 = vunpack.c.l.b16 %v2106
    %v2224 = vunpack.c.h.b16 %v2106
    %v2225 = vpack.c.b16 %v2165, %v2161
    %v2226 = vpack.c.b16 %v2166, %v2162
    %v2227 = vpack.c.b16 %v2167, %v2163
    %v2228 = vpack.c.b16 %v2168, %v2164
    %v2229 = vpack.c.b16 %v2173, %v2169
    %v2230 = vpack.c.b16 %v2174, %v2170
    %v2231 = vpack.c.b16 %v2175, %v2171
    %v2232 = vpack.c.b16 %v2176, %v2172
    %v2233 = vpack.c.b16 %v2181, %v2177
    %v2234 = vpack.c.b16 %v2182, %v2178
    %v2235 = vpack.c.b16 %v2183, %v2179
    %v2236 = vpack.c.b16 %v2184, %v2180
    %v2237 = vpack.c.b16 %v2189, %v2185
    %v2238 = vpack.c.b16 %v2190, %v2186
    %v2239 = vpack.c.b16 %v2191, %v2187
    %v2240 = vpack.c.b16 %v2192, %v2188
    %v2241 = vpack.c.b16 %v2197, %v2193
    %v2242 = vpack.c.b16 %v2198, %v2194
    %v2243 = vpack.c.b16 %v2199, %v2195
    %v2244 = vpack.c.b16 %v2200, %v2196
    %v2245 = vpack.c.b16 %v2205, %v2201
    %v2246 = vpack.c.b16 %v2206, %v2202
    %v2247 = vpack.c.b16 %v2207, %v2203
    %v2248 = vpack.c.b16 %v2208, %v2204
    %v2249 = vpack.c.b16 %v2213, %v2209
    %v2250 = vpack.c.b16 %v2214, %v2210
    %v2251 = vpack.c.b16 %v2215, %v2211
    %v2252 = vpack.c.b16 %v2216, %v2212
    %v2253 = vpack.c.b16 %v2221, %v2217
    %v2254 = vpack.c.b16 %v2222, %v2218
    %v2255 = vpack.c.b16 %v2223, %v2219
    %v2256 = vpack.c.b16 %v2224, %v2220
    %2289 = vmatprep.subr.bf16.mxu0 %v2254
    %2290 = vmatpush1.bf16.msra.mxu0 %v2253
    %2291 = vmatprep.subr.bf16.mxu0 %v2250
    %2292 = vmatpush1.bf16.msra.mxu0 %v2249
    %2293 = vmatprep.subr.bf16.mxu0 %v2246
    %2294 = vmatpush1.bf16.msra.mxu0 %v2245
    %2295 = vmatprep.subr.bf16.mxu0 %v2242
    %2296 = vmatpush1.bf16.msra.mxu0 %v2241
    %2297 = vmatprep.subr.bf16.mxu0 %v2238
    %2298 = vmatpush1.bf16.msra.mxu0 %v2237
    %2299 = vmatprep.subr.bf16.mxu0 %v2234
    %2300 = vmatpush1.bf16.msra.mxu0 %v2233
    %2301 = vmatprep.subr.bf16.mxu0 %v2230
    %2302 = vmatpush1.bf16.msra.mxu0 %v2229
    %2303 = vmatprep.subr.bf16.mxu0 %v2226
    %2304 = vmatpush1.bf16.msra.mxu0 %v2225
    %2305 = vmatprep.subr.bf16.mxu0 0
    %2306 = vmatpush2.bf16.msra.mxu0 0
    %2307 = vmatprep.subr.bf16.mxu0 0
    %2308 = vmatpush2.bf16.msra.mxu0 0
    %2309 = vmatprep.subr.bf16.mxu0 0
    %2310 = vmatpush2.bf16.msra.mxu0 0
    %2311 = vmatprep.subr.bf16.mxu0 0
    %2312 = vmatpush2.bf16.msra.mxu0 0
    %2313 = vmatprep.subr.bf16.mxu0 0
    %2314 = vmatpush2.bf16.msra.mxu0 0
    %2315 = vmatprep.subr.bf16.mxu0 0
    %2316 = vmatpush2.bf16.msra.mxu0 0
    %2317 = vmatprep.subr.bf16.mxu0 0
    %2318 = vmatpush2.bf16.msra.mxu0 0
    %2319 = vmatprep.subr.bf16.mxu0 0
    %2320 = vmatpush2.bf16.msra.mxu0 0
    %2321 = vmatprep.mubr.bf16.mxu0 0
    %2322 = vmatmul.mubr.bf16.gmra.mxu0 %v2074
    %v2323 = vpop.f32.mrf.mxu0
    %v2324 = vadd.f32 %v2112, %v2323
    %v2325 = vpop.f32.mrf.mxu0
    %v2326 = vadd.f32 %v2116, %v2325
    %v2327 = vpop.f32.mrf.mxu0
    %v2328 = vpop.f32.mrf.mxu0
    %2329 = vdwg.mxu0
    %2330 = vmatprep.subr.bf16.mxu0 %v2256
    %2331 = vmatpush1.bf16.msra.mxu0 %v2255
    %2332 = vmatprep.subr.bf16.mxu0 %v2252
    %2333 = vmatpush1.bf16.msra.mxu0 %v2251
    %2334 = vmatprep.subr.bf16.mxu0 %v2248
    %2335 = vmatpush1.bf16.msra.mxu0 %v2247
    %2336 = vmatprep.subr.bf16.mxu0 %v2244
    %2337 = vmatpush1.bf16.msra.mxu0 %v2243
    %2338 = vmatprep.subr.bf16.mxu0 %v2240
    %2339 = vmatpush1.bf16.msra.mxu0 %v2239
    %2340 = vmatprep.subr.bf16.mxu0 %v2236
    %2341 = vmatpush1.bf16.msra.mxu0 %v2235
    %2342 = vmatprep.subr.bf16.mxu0 %v2232
    %2343 = vmatpush1.bf16.msra.mxu0 %v2231
    %2344 = vmatprep.subr.bf16.mxu0 %v2228
    %2345 = vmatpush1.bf16.msra.mxu0 %v2227
    %2346 = vmatprep.subr.bf16.mxu0 0
    %2347 = vmatpush2.bf16.msra.mxu0 0
    %2348 = vmatprep.subr.bf16.mxu0 0
    %2349 = vmatpush2.bf16.msra.mxu0 0
    %2350 = vmatprep.subr.bf16.mxu0 0
    %2351 = vmatpush2.bf16.msra.mxu0 0
    %2352 = vmatprep.subr.bf16.mxu0 0
    %2353 = vmatpush2.bf16.msra.mxu0 0
    %2354 = vmatprep.subr.bf16.mxu0 0
    %2355 = vmatpush2.bf16.msra.mxu0 0
    %2356 = vmatprep.subr.bf16.mxu0 0
    %2357 = vmatpush2.bf16.msra.mxu0 0
    %2358 = vmatprep.subr.bf16.mxu0 0
    %2359 = vmatpush2.bf16.msra.mxu0 0
    %2360 = vmatprep.subr.bf16.mxu0 0
    %2361 = vmatpush2.bf16.msra.mxu0 0
    %2362 = vmatprep.mubr.bf16.mxu0 0
    %2363 = vmatmul.mubr.bf16.gmra.mxu0 %v2074
    %v2364 = vpop.f32.mrf.mxu0
    %v2365 = vadd.f32 %v2120, %v2364
    %v2366 = vpop.f32.mrf.mxu0
    %v2367 = vadd.f32 %v2124, %v2366
    %v2368 = vpop.f32.mrf.mxu0
    %v2369 = vpop.f32.mrf.mxu0
    %2370 = vdwg.mxu0
    %v2371 = vmax.f32 %v2324, 0.0
    %v2372 = vmax.f32 %v2326, 0.0
    %v2373 = vmax.f32 %v2365, 0.0
    %v2374 = vmax.f32 %v2367, 0.0
    %v2375 = vpack.c.bf16 %v2371, %v2371
    %v2376 = vpack.c.bf16 %v2372, %v2372
    %v2377 = vpack.c.bf16 %v2373, %v2373
    %v2378 = vpack.c.bf16 %v2374, %v2374
    %v2379 = vld [vmem:[%s8] sm:$0xff]
    %v2380 = vld [vmem:[%s8 + $0x8] sm:$0xff]
    %v2381 = vld [vmem:[%s8 + $0x10] sm:$0xff]
    %v2382 = vld [vmem:[%s8 + $0x18] sm:$0xf]
    %v2383 = vld [vmem:[%s8 + $0x1c] sm:$0xff]
    %v2384 = vld [vmem:[%s8 + $0x24] sm:$0xff]
    %v2385 = vld [vmem:[%s8 + $0x2c] sm:$0xff]
    %v2386 = vld [vmem:[%s8 + $0x34] sm:$0xf]
    %v2387 = vld [vmem:[%s8 + $0x38] sm:$0xff]
    %v2388 = vld [vmem:[%s8 + $0x40] sm:$0xff]
    %v2389 = vld [vmem:[%s8 + $0x48] sm:$0xff]
    %v2390 = vld [vmem:[%s8 + $0x50] sm:$0xf]
    %v2391 = vld [vmem:[%s8 + $0x54] sm:$0xff]
    %v2392 = vld [vmem:[%s8 + $0x5c] sm:$0xff]
    %v2393 = vld [vmem:[%s8 + $0x64] sm:$0xff]
    %v2394 = vld [vmem:[%s8 + $0x6c] sm:$0xf]
    %v2395 = vld [vmem:[%s8 + $0x70] sm:$0xff]
    %v2396 = vld [vmem:[%s8 + $0x78] sm:$0xff]
    %v2397 = vld [vmem:[%s8 + $0x80] sm:$0xff]
    %v2398 = vld [vmem:[%s8 + $0x88] sm:$0xf]
    %v2399 = vld [vmem:[%s8 + $0x8c] sm:$0xff]
    %v2400 = vld [vmem:[%s8 + $0x94] sm:$0xff]
    %v2401 = vld [vmem:[%s8 + $0x9c] sm:$0xff]
    %v2402 = vld [vmem:[%s8 + $0xa4] sm:$0xf]
    %v2403 = vld [vmem:[%s8 + $0xa8] sm:$0xff]
    %v2404 = vld [vmem:[%s8 + $0xb0] sm:$0xff]
    %v2405 = vld [vmem:[%s8 + $0xb8] sm:$0xff]
    %v2406 = vld [vmem:[%s8 + $0xc0] sm:$0xf]
    %v2407 = vld [vmem:[%s8 + $0xc4] sm:$0xff]
    %v2408 = vld [vmem:[%s8 + $0xcc] sm:$0xff]
    %v2409 = vld [vmem:[%s8 + $0xd4] sm:$0xff]
    %v2410 = vld [vmem:[%s8 + $0xdc] sm:$0xf]
    %v2411 = vld [vmem:[%s8 + $0xe0] sm:$0xff]
    %v2412 = vld [vmem:[%s8 + $0xe8] sm:$0xff]
    %v2413 = vld [vmem:[%s8 + $0xf0] sm:$0xff]
    %v2414 = vld [vmem:[%s8 + $0xf8] sm:$0xf]
    %v2415 = vld [vmem:[%s8 + $0xfc] sm:$0xff]
    %v2416 = vld [vmem:[%s8 + $0x104] sm:$0xff]
    %v2417 = vld [vmem:[%s8 + $0x10c] sm:$0xff]
    %v2418 = vld [vmem:[%s8 + $0x114] sm:$0xf]
    %v2419 = vld [vmem:[%s8 + $0x118] sm:$0xff]
    %v2420 = vld [vmem:[%s8 + $0x120] sm:$0xff]
    %v2421 = vld [vmem:[%s8 + $0x128] sm:$0xff]
    %v2422 = vld [vmem:[%s8 + $0x130] sm:$0xf]
    %v2423 = vld [vmem:[%s8 + $0x134] sm:$0xff]
    %v2424 = vld [vmem:[%s8 + $0x13c] sm:$0xff]
    %v2425 = vld [vmem:[%s8 + $0x144] sm:$0xff]
    %v2426 = vld [vmem:[%s8 + $0x14c] sm:$0xf]
    %v2427 = vld [vmem:[%s8 + $0x150] sm:$0xff]
    %v2428 = vld [vmem:[%s8 + $0x158] sm:$0xff]
    %v2429 = vld [vmem:[%s8 + $0x160] sm:$0xff]
    %v2430 = vld [vmem:[%s8 + $0x168] sm:$0xf]
    %v2431 = vld [vmem:[%s8 + $0x16c] sm:$0xff]
    %v2432 = vld [vmem:[%s8 + $0x174] sm:$0xff]
    %v2433 = vld [vmem:[%s8 + $0x17c] sm:$0xff]
    %v2434 = vld [vmem:[%s8 + $0x184] sm:$0xf]
    %v2435 = vld [vmem:[%s8 + $0x188] sm:$0xff]
    %v2436 = vld [vmem:[%s8 + $0x190] sm:$0xff]
    %v2437 = vld [vmem:[%s8 + $0x198] sm:$0xff]
    %v2438 = vld [vmem:[%s8 + $0x1a0] sm:$0xf]
    %v2439 = vld [vmem:[%s8 + $0x1a4] sm:$0xff]
    %v2440 = vld [vmem:[%s8 + $0x1ac] sm:$0xff]
    %v2441 = vld [vmem:[%s8 + $0x1b4] sm:$0xff]
    %v2442 = vld [vmem:[%s8 + $0x1bc] sm:$0xf]
    %v2443 = vld [vmem:[%s8 + $0x1c0] sm:$0xff]
    %v2444 = vld [vmem:[%s8 + $0x1c8] sm:$0xff]
    %v2445 = vld [vmem:[%s8 + $0x1d0] sm:$0xff]
    %v2446 = vld [vmem:[%s8 + $0x1d8] sm:$0xf]
    %v2447 = vld [vmem:[%s8 + $0x1dc] sm:$0xff]
    %v2448 = vld [vmem:[%s8 + $0x1e4] sm:$0xff]
    %v2449 = vld [vmem:[%s8 + $0x1ec] sm:$0xff]
    %v2450 = vld [vmem:[%s8 + $0x1f4] sm:$0xf]
    %v2451 = vld [vmem:[%s8 + $0x1f8] sm:$0xff]
    %v2452 = vld [vmem:[%s8 + $0x200] sm:$0xff]
    %v2453 = vld [vmem:[%s8 + $0x208] sm:$0xff]
    %v2454 = vld [vmem:[%s8 + $0x210] sm:$0xf]
    %v2455 = vld [vmem:[%s8 + $0x214] sm:$0xff]
    %v2456 = vld [vmem:[%s8 + $0x21c] sm:$0xff]
    %v2457 = vld [vmem:[%s8 + $0x224] sm:$0xff]
    %v2458 = vld [vmem:[%s8 + $0x22c] sm:$0xf]
    %v2459 = vld [vmem:[%s8 + $0x230] sm:$0xff]
    %v2460 = vld [vmem:[%s8 + $0x238] sm:$0xff]
    %v2461 = vld [vmem:[%s8 + $0x240] sm:$0xff]
    %v2462 = vld [vmem:[%s8 + $0x248] sm:$0xf]
    %v2463 = vld [vmem:[%s8 + $0x24c] sm:$0xff]
    %v2464 = vld [vmem:[%s8 + $0x254] sm:$0xff]
    %v2465 = vld [vmem:[%s8 + $0x25c] sm:$0xff]
    %v2466 = vld [vmem:[%s8 + $0x264] sm:$0xf]
    %v2467 = vld [vmem:[%s8 + $0x268] sm:$0xff]
    %v2468 = vld [vmem:[%s8 + $0x270] sm:$0xff]
    %v2469 = vld [vmem:[%s8 + $0x278] sm:$0xff]
    %v2470 = vld [vmem:[%s8 + $0x280] sm:$0xf]
    %v2471 = vld [vmem:[%s8 + $0x284] sm:$0xff]
    %v2472 = vld [vmem:[%s8 + $0x28c] sm:$0xff]
    %v2473 = vld [vmem:[%s8 + $0x294] sm:$0xff]
    %v2474 = vld [vmem:[%s8 + $0x29c] sm:$0xf]
    %v2475 = vld [vmem:[%s8 + $0x2a0] sm:$0xff]
    %v2476 = vld [vmem:[%s8 + $0x2a8] sm:$0xff]
    %v2477 = vld [vmem:[%s8 + $0x2b0] sm:$0xff]
    %v2478 = vld [vmem:[%s8 + $0x2b8] sm:$0xf]
    %v2479 = vld [vmem:[%s8 + $0x2bc] sm:$0xff]
    %v2480 = vld [vmem:[%s8 + $0x2c4] sm:$0xff]
    %v2481 = vld [vmem:[%s8 + $0x2cc] sm:$0xff]
    %v2482 = vld [vmem:[%s8 + $0x2d4] sm:$0xf]
    %v2483 = vld [vmem:[%s8 + $0x2d8] sm:$0xff]
    %v2484 = vld [vmem:[%s8 + $0x2e0] sm:$0xff]
    %v2485 = vld [vmem:[%s8 + $0x2e8] sm:$0xff]
    %v2486 = vld [vmem:[%s8 + $0x2f0] sm:$0xf]
    %v2487 = vld [vmem:[%s8 + $0x2f4] sm:$0xff]
    %v2488 = vld [vmem:[%s8 + $0x2fc] sm:$0xff]
    %v2489 = vld [vmem:[%s8 + $0x304] sm:$0xff]
    %v2490 = vld [vmem:[%s8 + $0x30c] sm:$0xf]
    %v2491 = vld [vmem:[%s8 + $0x310] sm:$0xff]
    %v2492 = vld [vmem:[%s8 + $0x318] sm:$0xff]
    %v2493 = vld [vmem:[%s8 + $0x320] sm:$0xff]
    %v2494 = vld [vmem:[%s8 + $0x328] sm:$0xf]
    %v2495 = vld [vmem:[%s8 + $0x32c] sm:$0xff]
    %v2496 = vld [vmem:[%s8 + $0x334] sm:$0xff]
    %v2497 = vld [vmem:[%s8 + $0x33c] sm:$0xff]
    %v2498 = vld [vmem:[%s8 + $0x344] sm:$0xf]
    %v2499 = vld [vmem:[%s8 + $0x348] sm:$0xff]
    %v2500 = vld [vmem:[%s8 + $0x350] sm:$0xff]
    %v2501 = vld [vmem:[%s8 + $0x358] sm:$0xff]
    %v2502 = vld [vmem:[%s8 + $0x360] sm:$0xf]
    %v2503 = vld [vmem:[%s8 + $0x364] sm:$0xff]
    %v2504 = vld [vmem:[%s8 + $0x36c] sm:$0xff]
    %v2505 = vld [vmem:[%s8 + $0x374] sm:$0xff]
    %v2506 = vld [vmem:[%s8 + $0x37c] sm:$0xf]
    %v2507 = vld [vmem:[%s8 + $0x380] sm:$0xff]
    %v2508 = vld [vmem:[%s8 + $0x388] sm:$0xff]
    %v2509 = vld [vmem:[%s8 + $0x390] sm:$0xff]
    %v2510 = vld [vmem:[%s8 + $0x398] sm:$0xf]
    %v2511 = vld [vmem:[%s8 + $0x39c] sm:$0xff]
    %v2512 = vld [vmem:[%s8 + $0x3a4] sm:$0xff]
    %v2513 = vld [vmem:[%s8 + $0x3ac] sm:$0xff]
    %v2514 = vld [vmem:[%s8 + $0x3b4] sm:$0xf]
    %v2515 = vld [vmem:[%s8 + $0x3b8] sm:$0xff]
    %v2516 = vld [vmem:[%s8 + $0x3c0] sm:$0xff]
    %v2517 = vld [vmem:[%s8 + $0x3c8] sm:$0xff]
    %v2518 = vld [vmem:[%s8 + $0x3d0] sm:$0xf]
    %v2519 = vld [vmem:[%s8 + $0x3d4] sm:$0xff]
    %v2520 = vld [vmem:[%s8 + $0x3dc] sm:$0xff]
    %v2521 = vld [vmem:[%s8 + $0x3e4] sm:$0xff]
    %v2522 = vld [vmem:[%s8 + $0x3ec] sm:$0xf]
    %v2523 = vld [vmem:[%s8 + $0x3f0] sm:$0xff]
    %v2524 = vld [vmem:[%s8 + $0x3f8] sm:$0xff]
    %v2525 = vld [vmem:[%s8 + $0x400] sm:$0xff]
    %v2526 = vld [vmem:[%s8 + $0x408] sm:$0xf]
    %v2527 = vld [vmem:[%s8 + $0x40c] sm:$0xff]
    %v2528 = vld [vmem:[%s8 + $0x414] sm:$0xff]
    %v2529 = vld [vmem:[%s8 + $0x41c] sm:$0xff]
    %v2530 = vld [vmem:[%s8 + $0x424] sm:$0xf]
    %v2531 = vld [vmem:[%s8 + $0x428] sm:$0xff]
    %v2532 = vld [vmem:[%s8 + $0x430] sm:$0xff]
    %v2533 = vld [vmem:[%s8 + $0x438] sm:$0xff]
    %v2534 = vld [vmem:[%s8 + $0x440] sm:$0xf]
    %v2535 = vld [vmem:[%s8 + $0x444] sm:$0xff]
    %v2536 = vld [vmem:[%s8 + $0x44c] sm:$0xff]
    %v2537 = vld [vmem:[%s8 + $0x454] sm:$0xff]
    %v2538 = vld [vmem:[%s8 + $0x45c] sm:$0xf]
    %v2539 = vld [vmem:[%s8 + $0x460] sm:$0xff]
    %v2540 = vld [vmem:[%s8 + $0x468] sm:$0xff]
    %v2541 = vld [vmem:[%s8 + $0x470] sm:$0xff]
    %v2542 = vld [vmem:[%s8 + $0x478] sm:$0xf]
    %v2543 = vld [vmem:[%s8 + $0x47c] sm:$0xff]
    %v2544 = vld [vmem:[%s8 + $0x484] sm:$0xff]
    %v2545 = vld [vmem:[%s8 + $0x48c] sm:$0xff]
    %v2546 = vld [vmem:[%s8 + $0x494] sm:$0xf]
    %v2547 = vld [vmem:[%s8 + $0x498] sm:$0xff]
    %v2548 = vld [vmem:[%s8 + $0x4a0] sm:$0xff]
    %v2549 = vld [vmem:[%s8 + $0x4a8] sm:$0xff]
    %v2550 = vld [vmem:[%s8 + $0x4b0] sm:$0xf]
    %v2551 = vld [vmem:[%s8 + $0x4b4] sm:$0xff]
    %v2552 = vld [vmem:[%s8 + $0x4bc] sm:$0xff]
    %v2553 = vld [vmem:[%s8 + $0x4c4] sm:$0xff]
    %v2554 = vld [vmem:[%s8 + $0x4cc] sm:$0xf]
    %v2555 = vld [vmem:[%s8 + $0x4d0] sm:$0xff]
    %v2556 = vld [vmem:[%s8 + $0x4d8] sm:$0xff]
    %v2557 = vld [vmem:[%s8 + $0x4e0] sm:$0xff]
    %v2558 = vld [vmem:[%s8 + $0x4e8] sm:$0xf]
    %v2559 = vld [vmem:[%s8 + $0x4ec] sm:$0xff]
    %v2560 = vld [vmem:[%s8 + $0x4f4] sm:$0xff]
    %v2561 = vld [vmem:[%s8 + $0x4fc] sm:$0xff]
    %v2562 = vld [vmem:[%s8 + $0x504] sm:$0xf]
    %v2563 = vld [vmem:[%s8 + $0x508] sm:$0xff]
    %v2564 = vld [vmem:[%s8 + $0x510] sm:$0xff]
    %v2565 = vld [vmem:[%s8 + $0x518] sm:$0xff]
    %v2566 = vld [vmem:[%s8 + $0x520] sm:$0xf]
    %v2567 = vld [vmem:[%s8 + $0x524] sm:$0xff]
    %v2568 = vld [vmem:[%s8 + $0x52c] sm:$0xff]
    %v2569 = vld [vmem:[%s8 + $0x534] sm:$0xff]
    %v2570 = vld [vmem:[%s8 + $0x53c] sm:$0xf]
    %v2571 = vld [vmem:[%s8 + $0x540] sm:$0xff]
    %v2572 = vld [vmem:[%s8 + $0x548] sm:$0xff]
    %v2573 = vld [vmem:[%s8 + $0x550] sm:$0xff]
    %v2574 = vld [vmem:[%s8 + $0x558] sm:$0xf]
    %v2575 = vld [vmem:[%s8 + $0x55c] sm:$0xff]
    %v2576 = vld [vmem:[%s8 + $0x564] sm:$0xff]
    %v2577 = vld [vmem:[%s8 + $0x56c] sm:$0xff]
    %v2578 = vld [vmem:[%s8 + $0x574] sm:$0xf]
    %v2579 = vld [vmem:[%s8 + $0x578] sm:$0xff]
    %v2580 = vld [vmem:[%s8 + $0x580] sm:$0xff]
    %v2581 = vld [vmem:[%s8 + $0x588] sm:$0xff]
    %v2582 = vld [vmem:[%s8 + $0x590] sm:$0xf]
    %v2583 = vld [vmem:[%s8 + $0x594] sm:$0xff]
    %v2584 = vld [vmem:[%s8 + $0x59c] sm:$0xff]
    %v2585 = vld [vmem:[%s8 + $0x5a4] sm:$0xff]
    %v2586 = vld [vmem:[%s8 + $0x5ac] sm:$0xf]
    %v2587 = vld [vmem:[%s8 + $0x5b0] sm:$0xff]
    %v2588 = vld [vmem:[%s8 + $0x5b8] sm:$0xff]
    %v2589 = vld [vmem:[%s8 + $0x5c0] sm:$0xff]
    %v2590 = vld [vmem:[%s8 + $0x5c8] sm:$0xf]
    %v2591 = vld [vmem:[%s8 + $0x5cc] sm:$0xff]
    %v2592 = vld [vmem:[%s8 + $0x5d4] sm:$0xff]
    %v2593 = vld [vmem:[%s8 + $0x5dc] sm:$0xff]
    %v2594 = vld [vmem:[%s8 + $0x5e4] sm:$0xf]
    %v2595 = vld [vmem:[%s8 + $0x5e8] sm:$0xff]
    %v2596 = vld [vmem:[%s8 + $0x5f0] sm:$0xff]
    %v2597 = vld [vmem:[%s8 + $0x5f8] sm:$0xff]
    %v2598 = vld [vmem:[%s8 + $0x600] sm:$0xf]
    %v2599 = vld [vmem:[%s8 + $0x604] sm:$0xff]
    %v2600 = vld [vmem:[%s8 + $0x60c] sm:$0xff]
    %v2601 = vld [vmem:[%s8 + $0x614] sm:$0xff]
    %v2602 = vld [vmem:[%s8 + $0x61c] sm:$0xf]
    %v2603 = vld [vmem:[%s8 + $0x620] sm:$0xff]
    %v2604 = vld [vmem:[%s8 + $0x628] sm:$0xff]
    %v2605 = vld [vmem:[%s8 + $0x630] sm:$0xff]
    %v2606 = vld [vmem:[%s8 + $0x638] sm:$0xf]
    %v2607 = vld [vmem:[%s8 + $0x63c] sm:$0xff]
    %v2608 = vld [vmem:[%s8 + $0x644] sm:$0xff]
    %v2609 = vld [vmem:[%s8 + $0x64c] sm:$0xff]
    %v2610 = vld [vmem:[%s8 + $0x654] sm:$0xf]
    %v2611 = vld [vmem:[%s8 + $0x658] sm:$0xff]
    %v2612 = vld [vmem:[%s8 + $0x660] sm:$0xff]
    %v2613 = vld [vmem:[%s8 + $0x668] sm:$0xff]
    %v2614 = vld [vmem:[%s8 + $0x670] sm:$0xf]
    %v2615 = vld [vmem:[%s8 + $0x674] sm:$0xff]
    %v2616 = vld [vmem:[%s8 + $0x67c] sm:$0xff]
    %v2617 = vld [vmem:[%s8 + $0x684] sm:$0xff]
    %v2618 = vld [vmem:[%s8 + $0x68c] sm:$0xf]
    %v2619 = vld [vmem:[%s8 + $0x690] sm:$0xff]
    %v2620 = vld [vmem:[%s8 + $0x698] sm:$0xff]
    %v2621 = vld [vmem:[%s8 + $0x6a0] sm:$0xff]
    %v2622 = vld [vmem:[%s8 + $0x6a8] sm:$0xf]
    %v2623 = vld [vmem:[%s8 + $0x6ac] sm:$0xff]
    %v2624 = vld [vmem:[%s8 + $0x6b4] sm:$0xff]
    %v2625 = vld [vmem:[%s8 + $0x6bc] sm:$0xff]
    %v2626 = vld [vmem:[%s8 + $0x6c4] sm:$0xf]
    %v2627 = vld [vmem:[%s8 + $0x6c8] sm:$0xff]
    %v2628 = vld [vmem:[%s8 + $0x6d0] sm:$0xff]
    %v2629 = vld [vmem:[%s8 + $0x6d8] sm:$0xff]
    %v2630 = vld [vmem:[%s8 + $0x6e0] sm:$0xf]
    %v2631 = vld [vmem:[%s8 + $0x6e4] sm:$0xff]
    %v2632 = vld [vmem:[%s8 + $0x6ec] sm:$0xff]
    %v2633 = vld [vmem:[%s8 + $0x6f4] sm:$0xff]
    %v2634 = vld [vmem:[%s8 + $0x6fc] sm:$0xf]
    %v2635 = vld [vmem:[%s9] sm:$0x7f]
    %v2637 = vlaneseq
    %v2638 = vshrl.u32 %v2637, 7
    %v2639 = vsub.s32 0, %v2638
    %v2640 = vrot.slane %v2635, %v2639
    %v2641 = vlaneseq
    %v2642 = vshrl.u32 %v2641, 7
    %v2643 = vsub.s32 1, %v2642
    %v2644 = vrot.slane %v2635, %v2643
    %v2645 = vlaneseq
    %v2646 = vshrl.u32 %v2645, 7
    %v2647 = vsub.s32 2, %v2646
    %v2648 = vrot.slane %v2635, %v2647
    %v2649 = vlaneseq
    %v2650 = vshrl.u32 %v2649, 7
    %v2651 = vsub.s32 3, %v2650
    %v2652 = vrot.slane %v2635, %v2651
    %v2653 = vlaneseq
    %v2654 = vshrl.u32 %v2653, 7
    %v2655 = vsub.s32 4, %v2654
    %v2656 = vrot.slane %v2635, %v2655
    %v2657 = vlaneseq
    %v2658 = vshrl.u32 %v2657, 7
    %v2659 = vsub.s32 5, %v2658
    %v2660 = vrot.slane %v2635, %v2659
    %v2661 = vlaneseq
    %v2662 = vshrl.u32 %v2661, 7
    %v2663 = vsub.s32 6, %v2662
    %v2664 = vrot.slane %v2635, %v2663
    %v2928 = vunpack.c.l.b16 %v2379
    %v2929 = vunpack.c.h.b16 %v2379
    %v2930 = vunpack.c.l.b16 %v2380
    %v2931 = vunpack.c.h.b16 %v2380
    %v2932 = vunpack.c.l.b16 %v2381
    %v2933 = vunpack.c.h.b16 %v2381
    %v2934 = vunpack.c.l.b16 %v2382
    %v2935 = vunpack.c.l.b16 %v2383
    %v2936 = vunpack.c.h.b16 %v2383
    %v2937 = vunpack.c.l.b16 %v2384
    %v2938 = vunpack.c.h.b16 %v2384
    %v2939 = vunpack.c.l.b16 %v2385
    %v2940 = vunpack.c.h.b16 %v2385
    %v2941 = vunpack.c.l.b16 %v2386
    %v2942 = vunpack.c.l.b16 %v2387
    %v2943 = vunpack.c.h.b16 %v2387
    %v2944 = vunpack.c.l.b16 %v2388
    %v2945 = vunpack.c.h.b16 %v2388
    %v2946 = vunpack.c.l.b16 %v2389
    %v2947 = vunpack.c.h.b16 %v2389
    %v2948 = vunpack.c.l.b16 %v2390
    %v2949 = vunpack.c.l.b16 %v2391
    %v2950 = vunpack.c.h.b16 %v2391
    %v2951 = vunpack.c.l.b16 %v2392
    %v2952 = vunpack.c.h.b16 %v2392
    %v2953 = vunpack.c.l.b16 %v2393
    %v2954 = vunpack.c.h.b16 %v2393
    %v2955 = vunpack.c.l.b16 %v2394
    %v2956 = vunpack.c.l.b16 %v2395
    %v2957 = vunpack.c.h.b16 %v2395
    %v2958 = vunpack.c.l.b16 %v2396
    %v2959 = vunpack.c.h.b16 %v2396
    %v2960 = vunpack.c.l.b16 %v2397
    %v2961 = vunpack.c.h.b16 %v2397
    %v2962 = vunpack.c.l.b16 %v2398
    %v2963 = vunpack.c.l.b16 %v2399
    %v2964 = vunpack.c.h.b16 %v2399
    %v2965 = vunpack.c.l.b16 %v2400
    %v2966 = vunpack.c.h.b16 %v2400
    %v2967 = vunpack.c.l.b16 %v2401
    %v2968 = vunpack.c.h.b16 %v2401
    %v2969 = vunpack.c.l.b16 %v2402
    %v2970 = vunpack.c.l.b16 %v2403
    %v2971 = vunpack.c.h.b16 %v2403
    %v2972 = vunpack.c.l.b16 %v2404
    %v2973 = vunpack.c.h.b16 %v2404
    %v2974 = vunpack.c.l.b16 %v2405
    %v2975 = vunpack.c.h.b16 %v2405
    %v2976 = vunpack.c.l.b16 %v2406
    %v2977 = vunpack.c.l.b16 %v2407
    %v2978 = vunpack.c.h.b16 %v2407
    %v2979 = vunpack.c.l.b16 %v2408
    %v2980 = vunpack.c.h.b16 %v2408
    %v2981 = vunpack.c.l.b16 %v2409
    %v2982 = vunpack.c.h.b16 %v2409
    %v2983 = vunpack.c.l.b16 %v2410
    %v2984 = vunpack.c.l.b16 %v2411
    %v2985 = vunpack.c.h.b16 %v2411
    %v2986 = vunpack.c.l.b16 %v2412
    %v2987 = vunpack.c.h.b16 %v2412
    %v2988 = vunpack.c.l.b16 %v2413
    %v2989 = vunpack.c.h.b16 %v2413
    %v2990 = vunpack.c.l.b16 %v2414
    %v2991 = vunpack.c.l.b16 %v2415
    %v2992 = vunpack.c.h.b16 %v2415
    %v2993 = vunpack.c.l.b16 %v2416
    %v2994 = vunpack.c.h.b16 %v2416
    %v2995 = vunpack.c.l.b16 %v2417
    %v2996 = vunpack.c.h.b16 %v2417
    %v2997 = vunpack.c.l.b16 %v2418
    %v2998 = vunpack.c.l.b16 %v2419
    %v2999 = vunpack.c.h.b16 %v2419
    %v3000 = vunpack.c.l.b16 %v2420
    %v3001 = vunpack.c.h.b16 %v2420
    %v3002 = vunpack.c.l.b16 %v2421
    %v3003 = vunpack.c.h.b16 %v2421
    %v3004 = vunpack.c.l.b16 %v2422
    %v3005 = vunpack.c.l.b16 %v2423
    %v3006 = vunpack.c.h.b16 %v2423
    %v3007 = vunpack.c.l.b16 %v2424
    %v3008 = vunpack.c.h.b16 %v2424
    %v3009 = vunpack.c.l.b16 %v2425
    %v3010 = vunpack.c.h.b16 %v2425
    %v3011 = vunpack.c.l.b16 %v2426
    %v3012 = vunpack.c.l.b16 %v2427
    %v3013 = vunpack.c.h.b16 %v2427
    %v3014 = vunpack.c.l.b16 %v2428
    %v3015 = vunpack.c.h.b16 %v2428
    %v3016 = vunpack.c.l.b16 %v2429
    %v3017 = vunpack.c.h.b16 %v2429
    %v3018 = vunpack.c.l.b16 %v2430
    %v3019 = vunpack.c.l.b16 %v2431
    %v3020 = vunpack.c.h.b16 %v2431
    %v3021 = vunpack.c.l.b16 %v2432
    %v3022 = vunpack.c.h.b16 %v2432
    %v3023 = vunpack.c.l.b16 %v2433
    %v3024 = vunpack.c.h.b16 %v2433
    %v3025 = vunpack.c.l.b16 %v2434
    %v3026 = vunpack.c.l.b16 %v2435
    %v3027 = vunpack.c.h.b16 %v2435
    %v3028 = vunpack.c.l.b16 %v2436
    %v3029 = vunpack.c.h.b16 %v2436
    %v3030 = vunpack.c.l.b16 %v2437
    %v3031 = vunpack.c.h.b16 %v2437
    %v3032 = vunpack.c.l.b16 %v2438
    %v3033 = vunpack.c.l.b16 %v2439
    %v3034 = vunpack.c.h.b16 %v2439
    %v3035 = vunpack.c.l.b16 %v2440
    %v3036 = vunpack.c.h.b16 %v2440
    %v3037 = vunpack.c.l.b16 %v2441
    %v3038 = vunpack.c.h.b16 %v2441
    %v3039 = vunpack.c.l.b16 %v2442
    %v3040 = vunpack.c.l.b16 %v2443
    %v3041 = vunpack.c.h.b16 %v2443
    %v3042 = vunpack.c.l.b16 %v2444
    %v3043 = vunpack.c.h.b16 %v2444
    %v3044 = vunpack.c.l.b16 %v2445
    %v3045 = vunpack.c.h.b16 %v2445
    %v3046 = vunpack.c.l.b16 %v2446
    %v3047 = vunpack.c.l.b16 %v2447
    %v3048 = vunpack.c.h.b16 %v2447
    %v3049 = vunpack.c.l.b16 %v2448
    %v3050 = vunpack.c.h.b16 %v2448
    %v3051 = vunpack.c.l.b16 %v2449
    %v3052 = vunpack.c.h.b16 %v2449
    %v3053 = vunpack.c.l.b16 %v2450
    %v3054 = vunpack.c.l.b16 %v2451
    %v3055 = vunpack.c.h.b16 %v2451
    %v3056 = vunpack.c.l.b16 %v2452
    %v3057 = vunpack.c.h.b16 %v2452
    %v3058 = vunpack.c.l.b16 %v2453
    %v3059 = vunpack.c.h.b16 %v2453
    %v3060 = vunpack.c.l.b16 %v2454
    %v3061 = vunpack.c.l.b16 %v2455
    %v3062 = vunpack.c.h.b16 %v2455
    %v3063 = vunpack.c.l.b16 %v2456
    %v3064 = vunpack.c.h.b16 %v2456
    %v3065 = vunpack.c.l.b16 %v2457
    %v3066 = vunpack.c.h.b16 %v2457
    %v3067 = vunpack.c.l.b16 %v2458
    %v3068 = vunpack.c.l.b16 %v2459
    %v3069 = vunpack.c.h.b16 %v2459
    %v3070 = vunpack.c.l.b16 %v2460
    %v3071 = vunpack.c.h.b16 %v2460
    %v3072 = vunpack.c.l.b16 %v2461
    %v3073 = vunpack.c.h.b16 %v2461
    %v3074 = vunpack.c.l.b16 %v2462
    %v3075 = vunpack.c.l.b16 %v2463
    %v3076 = vunpack.c.h.b16 %v2463
    %v3077 = vunpack.c.l.b16 %v2464
    %v3078 = vunpack.c.h.b16 %v2464
    %v3079 = vunpack.c.l.b16 %v2465
    %v3080 = vunpack.c.h.b16 %v2465
    %v3081 = vunpack.c.l.b16 %v2466
    %v3082 = vunpack.c.l.b16 %v2467
    %v3083 = vunpack.c.h.b16 %v2467
    %v3084 = vunpack.c.l.b16 %v2468
    %v3085 = vunpack.c.h.b16 %v2468
    %v3086 = vunpack.c.l.b16 %v2469
    %v3087 = vunpack.c.h.b16 %v2469
    %v3088 = vunpack.c.l.b16 %v2470
    %v3089 = vunpack.c.l.b16 %v2471
    %v3090 = vunpack.c.h.b16 %v2471
    %v3091 = vunpack.c.l.b16 %v2472
    %v3092 = vunpack.c.h.b16 %v2472
    %v3093 = vunpack.c.l.b16 %v2473
    %v3094 = vunpack.c.h.b16 %v2473
    %v3095 = vunpack.c.l.b16 %v2474
    %v3096 = vunpack.c.l.b16 %v2475
    %v3097 = vunpack.c.h.b16 %v2475
    %v3098 = vunpack.c.l.b16 %v2476
    %v3099 = vunpack.c.h.b16 %v2476
    %v3100 = vunpack.c.l.b16 %v2477
    %v3101 = vunpack.c.h.b16 %v2477
    %v3102 = vunpack.c.l.b16 %v2478
    %v3103 = vunpack.c.l.b16 %v2479
    %v3104 = vunpack.c.h.b16 %v2479
    %v3105 = vunpack.c.l.b16 %v2480
    %v3106 = vunpack.c.h.b16 %v2480
    %v3107 = vunpack.c.l.b16 %v2481
    %v3108 = vunpack.c.h.b16 %v2481
    %v3109 = vunpack.c.l.b16 %v2482
    %v3110 = vunpack.c.l.b16 %v2483
    %v3111 = vunpack.c.h.b16 %v2483
    %v3112 = vunpack.c.l.b16 %v2484
    %v3113 = vunpack.c.h.b16 %v2484
    %v3114 = vunpack.c.l.b16 %v2485
    %v3115 = vunpack.c.h.b16 %v2485
    %v3116 = vunpack.c.l.b16 %v2486
    %v3117 = vunpack.c.l.b16 %v2487
    %v3118 = vunpack.c.h.b16 %v2487
    %v3119 = vunpack.c.l.b16 %v2488
    %v3120 = vunpack.c.h.b16 %v2488
    %v3121 = vunpack.c.l.b16 %v2489
    %v3122 = vunpack.c.h.b16 %v2489
    %v3123 = vunpack.c.l.b16 %v2490
    %v3124 = vunpack.c.l.b16 %v2491
    %v3125 = vunpack.c.h.b16 %v2491
    %v3126 = vunpack.c.l.b16 %v2492
    %v3127 = vunpack.c.h.b16 %v2492
    %v3128 = vunpack.c.l.b16 %v2493
    %v3129 = vunpack.c.h.b16 %v2493
    %v3130 = vunpack.c.l.b16 %v2494
    %v3131 = vunpack.c.l.b16 %v2495
    %v3132 = vunpack.c.h.b16 %v2495
    %v3133 = vunpack.c.l.b16 %v2496
    %v3134 = vunpack.c.h.b16 %v2496
    %v3135 = vunpack.c.l.b16 %v2497
    %v3136 = vunpack.c.h.b16 %v2497
    %v3137 = vunpack.c.l.b16 %v2498
    %v3138 = vunpack.c.l.b16 %v2499
    %v3139 = vunpack.c.h.b16 %v2499
    %v3140 = vunpack.c.l.b16 %v2500
    %v3141 = vunpack.c.h.b16 %v2500
    %v3142 = vunpack.c.l.b16 %v2501
    %v3143 = vunpack.c.h.b16 %v2501
    %v3144 = vunpack.c.l.b16 %v2502
    %v3145 = vunpack.c.l.b16 %v2503
    %v3146 = vunpack.c.h.b16 %v2503
    %v3147 = vunpack.c.l.b16 %v2504
    %v3148 = vunpack.c.h.b16 %v2504
    %v3149 = vunpack.c.l.b16 %v2505
    %v3150 = vunpack.c.h.b16 %v2505
    %v3151 = vunpack.c.l.b16 %v2506
    %v3152 = vunpack.c.l.b16 %v2507
    %v3153 = vunpack.c.h.b16 %v2507
    %v3154 = vunpack.c.l.b16 %v2508
    %v3155 = vunpack.c.h.b16 %v2508
    %v3156 = vunpack.c.l.b16 %v2509
    %v3157 = vunpack.c.h.b16 %v2509
    %v3158 = vunpack.c.l.b16 %v2510
    %v3159 = vunpack.c.l.b16 %v2511
    %v3160 = vunpack.c.h.b16 %v2511
    %v3161 = vunpack.c.l.b16 %v2512
    %v3162 = vunpack.c.h.b16 %v2512
    %v3163 = vunpack.c.l.b16 %v2513
    %v3164 = vunpack.c.h.b16 %v2513
    %v3165 = vunpack.c.l.b16 %v2514
    %v3166 = vunpack.c.l.b16 %v2515
    %v3167 = vunpack.c.h.b16 %v2515
    %v3168 = vunpack.c.l.b16 %v2516
    %v3169 = vunpack.c.h.b16 %v2516
    %v3170 = vunpack.c.l.b16 %v2517
    %v3171 = vunpack.c.h.b16 %v2517
    %v3172 = vunpack.c.l.b16 %v2518
    %v3173 = vunpack.c.l.b16 %v2519
    %v3174 = vunpack.c.h.b16 %v2519
    %v3175 = vunpack.c.l.b16 %v2520
    %v3176 = vunpack.c.h.b16 %v2520
    %v3177 = vunpack.c.l.b16 %v2521
    %v3178 = vunpack.c.h.b16 %v2521
    %v3179 = vunpack.c.l.b16 %v2522
    %v3180 = vunpack.c.l.b16 %v2523
    %v3181 = vunpack.c.h.b16 %v2523
    %v3182 = vunpack.c.l.b16 %v2524
    %v3183 = vunpack.c.h.b16 %v2524
    %v3184 = vunpack.c.l.b16 %v2525
    %v3185 = vunpack.c.h.b16 %v2525
    %v3186 = vunpack.c.l.b16 %v2526
    %v3187 = vunpack.c.l.b16 %v2527
    %v3188 = vunpack.c.h.b16 %v2527
    %v3189 = vunpack.c.l.b16 %v2528
    %v3190 = vunpack.c.h.b16 %v2528
    %v3191 = vunpack.c.l.b16 %v2529
    %v3192 = vunpack.c.h.b16 %v2529
    %v3193 = vunpack.c.l.b16 %v2530
    %v3194 = vunpack.c.l.b16 %v2531
    %v3195 = vunpack.c.h.b16 %v2531
    %v3196 = vunpack.c.l.b16 %v2532
    %v3197 = vunpack.c.h.b16 %v2532
    %v3198 = vunpack.c.l.b16 %v2533
    %v3199 = vunpack.c.h.b16 %v2533
    %v3200 = vunpack.c.l.b16 %v2534
    %v3201 = vunpack.c.l.b16 %v2535
    %v3202 = vunpack.c.h.b16 %v2535
    %v3203 = vunpack.c.l.b16 %v2536
    %v3204 = vunpack.c.h.b16 %v2536
    %v3205 = vunpack.c.l.b16 %v2537
    %v3206 = vunpack.c.h.b16 %v2537
    %v3207 = vunpack.c.l.b16 %v2538
    %v3208 = vunpack.c.l.b16 %v2539
    %v3209 = vunpack.c.h.b16 %v2539
    %v3210 = vunpack.c.l.b16 %v2540
    %v3211 = vunpack.c.h.b16 %v2540
    %v3212 = vunpack.c.l.b16 %v2541
    %v3213 = vunpack.c.h.b16 %v2541
    %v3214 = vunpack.c.l.b16 %v2542
    %v3215 = vunpack.c.l.b16 %v2543
    %v3216 = vunpack.c.h.b16 %v2543
    %v3217 = vunpack.c.l.b16 %v2544
    %v3218 = vunpack.c.h.b16 %v2544
    %v3219 = vunpack.c.l.b16 %v2545
    %v3220 = vunpack.c.h.b16 %v2545
    %v3221 = vunpack.c.l.b16 %v2546
    %v3222 = vunpack.c.l.b16 %v2547
    %v3223 = vunpack.c.h.b16 %v2547
    %v3224 = vunpack.c.l.b16 %v2548
    %v3225 = vunpack.c.h.b16 %v2548
    %v3226 = vunpack.c.l.b16 %v2549
    %v3227 = vunpack.c.h.b16 %v2549
    %v3228 = vunpack.c.l.b16 %v2550
    %v3229 = vunpack.c.l.b16 %v2551
    %v3230 = vunpack.c.h.b16 %v2551
    %v3231 = vunpack.c.l.b16 %v2552
    %v3232 = vunpack.c.h.b16 %v2552
    %v3233 = vunpack.c.l.b16 %v2553
    %v3234 = vunpack.c.h.b16 %v2553
    %v3235 = vunpack.c.l.b16 %v2554
    %v3236 = vunpack.c.l.b16 %v2555
    %v3237 = vunpack.c.h.b16 %v2555
    %v3238 = vunpack.c.l.b16 %v2556
    %v3239 = vunpack.c.h.b16 %v2556
    %v3240 = vunpack.c.l.b16 %v2557
    %v3241 = vunpack.c.h.b16 %v2557
    %v3242 = vunpack.c.l.b16 %v2558
    %v3243 = vunpack.c.l.b16 %v2559
    %v3244 = vunpack.c.h.b16 %v2559
    %v3245 = vunpack.c.l.b16 %v2560
    %v3246 = vunpack.c.h.b16 %v2560
    %v3247 = vunpack.c.l.b16 %v2561
    %v3248 = vunpack.c.h.b16 %v2561
    %v3249 = vunpack.c.l.b16 %v2562
    %v3250 = vunpack.c.l.b16 %v2563
    %v3251 = vunpack.c.h.b16 %v2563
    %v3252 = vunpack.c.l.b16 %v2564
    %v3253 = vunpack.c.h.b16 %v2564
    %v3254 = vunpack.c.l.b16 %v2565
    %v3255 = vunpack.c.h.b16 %v2565
    %v3256 = vunpack.c.l.b16 %v2566
    %v3257 = vunpack.c.l.b16 %v2567
    %v3258 = vunpack.c.h.b16 %v2567
    %v3259 = vunpack.c.l.b16 %v2568
    %v3260 = vunpack.c.h.b16 %v2568
    %v3261 = vunpack.c.l.b16 %v2569
    %v3262 = vunpack.c.h.b16 %v2569
    %v3263 = vunpack.c.l.b16 %v2570
    %v3264 = vunpack.c.l.b16 %v2571
    %v3265 = vunpack.c.h.b16 %v2571
    %v3266 = vunpack.c.l.b16 %v2572
    %v3267 = vunpack.c.h.b16 %v2572
    %v3268 = vunpack.c.l.b16 %v2573
    %v3269 = vunpack.c.h.b16 %v2573
    %v3270 = vunpack.c.l.b16 %v2574
    %v3271 = vunpack.c.l.b16 %v2575
    %v3272 = vunpack.c.h.b16 %v2575
    %v3273 = vunpack.c.l.b16 %v2576
    %v3274 = vunpack.c.h.b16 %v2576
    %v3275 = vunpack.c.l.b16 %v2577
    %v3276 = vunpack.c.h.b16 %v2577
    %v3277 = vunpack.c.l.b16 %v2578
    %v3278 = vunpack.c.l.b16 %v2579
    %v3279 = vunpack.c.h.b16 %v2579
    %v3280 = vunpack.c.l.b16 %v2580
    %v3281 = vunpack.c.h.b16 %v2580
    %v3282 = vunpack.c.l.b16 %v2581
    %v3283 = vunpack.c.h.b16 %v2581
    %v3284 = vunpack.c.l.b16 %v2582
    %v3285 = vunpack.c.l.b16 %v2583
    %v3286 = vunpack.c.h.b16 %v2583
    %v3287 = vunpack.c.l.b16 %v2584
    %v3288 = vunpack.c.h.b16 %v2584
    %v3289 = vunpack.c.l.b16 %v2585
    %v3290 = vunpack.c.h.b16 %v2585
    %v3291 = vunpack.c.l.b16 %v2586
    %v3292 = vunpack.c.l.b16 %v2587
    %v3293 = vunpack.c.h.b16 %v2587
    %v3294 = vunpack.c.l.b16 %v2588
    %v3295 = vunpack.c.h.b16 %v2588
    %v3296 = vunpack.c.l.b16 %v2589
    %v3297 = vunpack.c.h.b16 %v2589
    %v3298 = vunpack.c.l.b16 %v2590
    %v3299 = vunpack.c.l.b16 %v2591
    %v3300 = vunpack.c.h.b16 %v2591
    %v3301 = vunpack.c.l.b16 %v2592
    %v3302 = vunpack.c.h.b16 %v2592
    %v3303 = vunpack.c.l.b16 %v2593
    %v3304 = vunpack.c.h.b16 %v2593
    %v3305 = vunpack.c.l.b16 %v2594
    %v3306 = vunpack.c.l.b16 %v2595
    %v3307 = vunpack.c.h.b16 %v2595
    %v3308 = vunpack.c.l.b16 %v2596
    %v3309 = vunpack.c.h.b16 %v2596
    %v3310 = vunpack.c.l.b16 %v2597
    %v3311 = vunpack.c.h.b16 %v2597
    %v3312 = vunpack.c.l.b16 %v2598
    %v3313 = vunpack.c.l.b16 %v2599
    %v3314 = vunpack.c.h.b16 %v2599
    %v3315 = vunpack.c.l.b16 %v2600
    %v3316 = vunpack.c.h.b16 %v2600
    %v3317 = vunpack.c.l.b16 %v2601
    %v3318 = vunpack.c.h.b16 %v2601
    %v3319 = vunpack.c.l.b16 %v2602
    %v3320 = vunpack.c.l.b16 %v2603
    %v3321 = vunpack.c.h.b16 %v2603
    %v3322 = vunpack.c.l.b16 %v2604
    %v3323 = vunpack.c.h.b16 %v2604
    %v3324 = vunpack.c.l.b16 %v2605
    %v3325 = vunpack.c.h.b16 %v2605
    %v3326 = vunpack.c.l.b16 %v2606
    %v3327 = vunpack.c.l.b16 %v2607
    %v3328 = vunpack.c.h.b16 %v2607
    %v3329 = vunpack.c.l.b16 %v2608
    %v3330 = vunpack.c.h.b16 %v2608
    %v3331 = vunpack.c.l.b16 %v2609
    %v3332 = vunpack.c.h.b16 %v2609
    %v3333 = vunpack.c.l.b16 %v2610
    %v3334 = vunpack.c.l.b16 %v2611
    %v3335 = vunpack.c.h.b16 %v2611
    %v3336 = vunpack.c.l.b16 %v2612
    %v3337 = vunpack.c.h.b16 %v2612
    %v3338 = vunpack.c.l.b16 %v2613
    %v3339 = vunpack.c.h.b16 %v2613
    %v3340 = vunpack.c.l.b16 %v2614
    %v3341 = vunpack.c.l.b16 %v2615
    %v3342 = vunpack.c.h.b16 %v2615
    %v3343 = vunpack.c.l.b16 %v2616
    %v3344 = vunpack.c.h.b16 %v2616
    %v3345 = vunpack.c.l.b16 %v2617
    %v3346 = vunpack.c.h.b16 %v2617
    %v3347 = vunpack.c.l.b16 %v2618
    %v3348 = vunpack.c.l.b16 %v2619
    %v3349 = vunpack.c.h.b16 %v2619
    %v3350 = vunpack.c.l.b16 %v2620
    %v3351 = vunpack.c.h.b16 %v2620
    %v3352 = vunpack.c.l.b16 %v2621
    %v3353 = vunpack.c.h.b16 %v2621
    %v3354 = vunpack.c.l.b16 %v2622
    %v3355 = vunpack.c.l.b16 %v2623
    %v3356 = vunpack.c.h.b16 %v2623
    %v3357 = vunpack.c.l.b16 %v2624
    %v3358 = vunpack.c.h.b16 %v2624
    %v3359 = vunpack.c.l.b16 %v2625
    %v3360 = vunpack.c.h.b16 %v2625
    %v3361 = vunpack.c.l.b16 %v2626
    %v3362 = vunpack.c.l.b16 %v2627
    %v3363 = vunpack.c.h.b16 %v2627
    %v3364 = vunpack.c.l.b16 %v2628
    %v3365 = vunpack.c.h.b16 %v2628
    %v3366 = vunpack.c.l.b16 %v2629
    %v3367 = vunpack.c.h.b16 %v2629
    %v3368 = vunpack.c.l.b16 %v2630
    %v3369 = vunpack.c.l.b16 %v2631
    %v3370 = vunpack.c.h.b16 %v2631
    %v3371 = vunpack.c.l.b16 %v2632
    %v3372 = vunpack.c.h.b16 %v2632
    %v3373 = vunpack.c.l.b16 %v2633
    %v3374 = vunpack.c.h.b16 %v2633
    %v3375 = vunpack.c.l.b16 %v2634
    %v3376 = vpack.c.b16 %v2935, %v2928
    %v3377 = vpack.c.b16 %v2936, %v2929
    %v3378 = vpack.c.b16 %v2937, %v2930
    %v3379 = vpack.c.b16 %v2938, %v2931
    %v3380 = vpack.c.b16 %v2939, %v2932
    %v3381 = vpack.c.b16 %v2940, %v2933
    %v3382 = vpack.c.b16 %v2941, %v2934
    %v3383 = vpack.c.b16 %v2949, %v2942
    %v3384 = vpack.c.b16 %v2950, %v2943
    %v3385 = vpack.c.b16 %v2951, %v2944
    %v3386 = vpack.c.b16 %v2952, %v2945
    %v3387 = vpack.c.b16 %v2953, %v2946
    %v3388 = vpack.c.b16 %v2954, %v2947
    %v3389 = vpack.c.b16 %v2955, %v2948
    %v3390 = vpack.c.b16 %v2963, %v2956
    %v3391 = vpack.c.b16 %v2964, %v2957
    %v3392 = vpack.c.b16 %v2965, %v2958
    %v3393 = vpack.c.b16 %v2966, %v2959
    %v3394 = vpack.c.b16 %v2967, %v2960
    %v3395 = vpack.c.b16 %v2968, %v2961
    %v3396 = vpack.c.b16 %v2969, %v2962
    %v3397 = vpack.c.b16 %v2977, %v2970
    %v3398 = vpack.c.b16 %v2978, %v2971
    %v3399 = vpack.c.b16 %v2979, %v2972
    %v3400 = vpack.c.b16 %v2980, %v2973
    %v3401 = vpack.c.b16 %v2981, %v2974
    %v3402 = vpack.c.b16 %v2982, %v2975
    %v3403 = vpack.c.b16 %v2983, %v2976
    %v3404 = vpack.c.b16 %v2991, %v2984
    %v3405 = vpack.c.b16 %v2992, %v2985
    %v3406 = vpack.c.b16 %v2993, %v2986
    %v3407 = vpack.c.b16 %v2994, %v2987
    %v3408 = vpack.c.b16 %v2995, %v2988
    %v3409 = vpack.c.b16 %v2996, %v2989
    %v3410 = vpack.c.b16 %v2997, %v2990
    %v3411 = vpack.c.b16 %v3005, %v2998
    %v3412 = vpack.c.b16 %v3006, %v2999
    %v3413 = vpack.c.b16 %v3007, %v3000
    %v3414 = vpack.c.b16 %v3008, %v3001
    %v3415 = vpack.c.b16 %v3009, %v3002
    %v3416 = vpack.c.b16 %v3010, %v3003
    %v3417 = vpack.c.b16 %v3011, %v3004
    %v3418 = vpack.c.b16 %v3019, %v3012
    %v3419 = vpack.c.b16 %v3020, %v3013
    %v3420 = vpack.c.b16 %v3021, %v3014
    %v3421 = vpack.c.b16 %v3022, %v3015
    %v3422 = vpack.c.b16 %v3023, %v3016
    %v3423 = vpack.c.b16 %v3024, %v3017
    %v3424 = vpack.c.b16 %v3025, %v3018
    %v3425 = vpack.c.b16 %v3033, %v3026
    %v3426 = vpack.c.b16 %v3034, %v3027
    %v3427 = vpack.c.b16 %v3035, %v3028
    %v3428 = vpack.c.b16 %v3036, %v3029
    %v3429 = vpack.c.b16 %v3037, %v3030
    %v3430 = vpack.c.b16 %v3038, %v3031
    %v3431 = vpack.c.b16 %v3039, %v3032
    %v3432 = vpack.c.b16 %v3047, %v3040
    %v3433 = vpack.c.b16 %v3048, %v3041
    %v3434 = vpack.c.b16 %v3049, %v3042
    %v3435 = vpack.c.b16 %v3050, %v3043
    %v3436 = vpack.c.b16 %v3051, %v3044
    %v3437 = vpack.c.b16 %v3052, %v3045
    %v3438 = vpack.c.b16 %v3053, %v3046
    %v3439 = vpack.c.b16 %v3061, %v3054
    %v3440 = vpack.c.b16 %v3062, %v3055
    %v3441 = vpack.c.b16 %v3063, %v3056
    %v3442 = vpack.c.b16 %v3064, %v3057
    %v3443 = vpack.c.b16 %v3065, %v3058
    %v3444 = vpack.c.b16 %v3066, %v3059
    %v3445 = vpack.c.b16 %v3067, %v3060
    %v3446 = vpack.c.b16 %v3075, %v3068
    %v3447 = vpack.c.b16 %v3076, %v3069
    %v3448 = vpack.c.b16 %v3077, %v3070
    %v3449 = vpack.c.b16 %v3078, %v3071
    %v3450 = vpack.c.b16 %v3079, %v3072
    %v3451 = vpack.c.b16 %v3080, %v3073
    %v3452 = vpack.c.b16 %v3081, %v3074
    %v3453 = vpack.c.b16 %v3089, %v3082
    %v3454 = vpack.c.b16 %v3090, %v3083
    %v3455 = vpack.c.b16 %v3091, %v3084
    %v3456 = vpack.c.b16 %v3092, %v3085
    %v3457 = vpack.c.b16 %v3093, %v3086
    %v3458 = vpack.c.b16 %v3094, %v3087
    %v3459 = vpack.c.b16 %v3095, %v3088
    %v3460 = vpack.c.b16 %v3103, %v3096
    %v3461 = vpack.c.b16 %v3104, %v3097
    %v3462 = vpack.c.b16 %v3105, %v3098
    %v3463 = vpack.c.b16 %v3106, %v3099
    %v3464 = vpack.c.b16 %v3107, %v3100
    %v3465 = vpack.c.b16 %v3108, %v3101
    %v3466 = vpack.c.b16 %v3109, %v3102
    %v3467 = vpack.c.b16 %v3117, %v3110
    %v3468 = vpack.c.b16 %v3118, %v3111
    %v3469 = vpack.c.b16 %v3119, %v3112
    %v3470 = vpack.c.b16 %v3120, %v3113
    %v3471 = vpack.c.b16 %v3121, %v3114
    %v3472 = vpack.c.b16 %v3122, %v3115
    %v3473 = vpack.c.b16 %v3123, %v3116
    %v3474 = vpack.c.b16 %v3131, %v3124
    %v3475 = vpack.c.b16 %v3132, %v3125
    %v3476 = vpack.c.b16 %v3133, %v3126
    %v3477 = vpack.c.b16 %v3134, %v3127
    %v3478 = vpack.c.b16 %v3135, %v3128
    %v3479 = vpack.c.b16 %v3136, %v3129
    %v3480 = vpack.c.b16 %v3137, %v3130
    %v3481 = vpack.c.b16 %v3145, %v3138
    %v3482 = vpack.c.b16 %v3146, %v3139
    %v3483 = vpack.c.b16 %v3147, %v3140
    %v3484 = vpack.c.b16 %v3148, %v3141
    %v3485 = vpack.c.b16 %v3149, %v3142
    %v3486 = vpack.c.b16 %v3150, %v3143
    %v3487 = vpack.c.b16 %v3151, %v3144
    %v3488 = vpack.c.b16 %v3159, %v3152
    %v3489 = vpack.c.b16 %v3160, %v3153
    %v3490 = vpack.c.b16 %v3161, %v3154
    %v3491 = vpack.c.b16 %v3162, %v3155
    %v3492 = vpack.c.b16 %v3163, %v3156
    %v3493 = vpack.c.b16 %v3164, %v3157
    %v3494 = vpack.c.b16 %v3165, %v3158
    %v3495 = vpack.c.b16 %v3173, %v3166
    %v3496 = vpack.c.b16 %v3174, %v3167
    %v3497 = vpack.c.b16 %v3175, %v3168
    %v3498 = vpack.c.b16 %v3176, %v3169
    %v3499 = vpack.c.b16 %v3177, %v3170
    %v3500 = vpack.c.b16 %v3178, %v3171
    %v3501 = vpack.c.b16 %v3179, %v3172
    %v3502 = vpack.c.b16 %v3187, %v3180
    %v3503 = vpack.c.b16 %v3188, %v3181
    %v3504 = vpack.c.b16 %v3189, %v3182
    %v3505 = vpack.c.b16 %v3190, %v3183
    %v3506 = vpack.c.b16 %v3191, %v3184
    %v3507 = vpack.c.b16 %v3192, %v3185
    %v3508 = vpack.c.b16 %v3193, %v3186
    %v3509 = vpack.c.b16 %v3201, %v3194
    %v3510 = vpack.c.b16 %v3202, %v3195
    %v3511 = vpack.c.b16 %v3203, %v3196
    %v3512 = vpack.c.b16 %v3204, %v3197
    %v3513 = vpack.c.b16 %v3205, %v3198
    %v3514 = vpack.c.b16 %v3206, %v3199
    %v3515 = vpack.c.b16 %v3207, %v3200
    %v3516 = vpack.c.b16 %v3215, %v3208
    %v3517 = vpack.c.b16 %v3216, %v3209
    %v3518 = vpack.c.b16 %v3217, %v3210
    %v3519 = vpack.c.b16 %v3218, %v3211
    %v3520 = vpack.c.b16 %v3219, %v3212
    %v3521 = vpack.c.b16 %v3220, %v3213
    %v3522 = vpack.c.b16 %v3221, %v3214
    %v3523 = vpack.c.b16 %v3229, %v3222
    %v3524 = vpack.c.b16 %v3230, %v3223
    %v3525 = vpack.c.b16 %v3231, %v3224
    %v3526 = vpack.c.b16 %v3232, %v3225
    %v3527 = vpack.c.b16 %v3233, %v3226
    %v3528 = vpack.c.b16 %v3234, %v3227
    %v3529 = vpack.c.b16 %v3235, %v3228
    %v3530 = vpack.c.b16 %v3243, %v3236
    %v3531 = vpack.c.b16 %v3244, %v3237
    %v3532 = vpack.c.b16 %v3245, %v3238
    %v3533 = vpack.c.b16 %v3246, %v3239
    %v3534 = vpack.c.b16 %v3247, %v3240
    %v3535 = vpack.c.b16 %v3248, %v3241
    %v3536 = vpack.c.b16 %v3249, %v3242
    %v3537 = vpack.c.b16 %v3257, %v3250
    %v3538 = vpack.c.b16 %v3258, %v3251
    %v3539 = vpack.c.b16 %v3259, %v3252
    %v3540 = vpack.c.b16 %v3260, %v3253
    %v3541 = vpack.c.b16 %v3261, %v3254
    %v3542 = vpack.c.b16 %v3262, %v3255
    %v3543 = vpack.c.b16 %v3263, %v3256
    %v3544 = vpack.c.b16 %v3271, %v3264
    %v3545 = vpack.c.b16 %v3272, %v3265
    %v3546 = vpack.c.b16 %v3273, %v3266
    %v3547 = vpack.c.b16 %v3274, %v3267
    %v3548 = vpack.c.b16 %v3275, %v3268
    %v3549 = vpack.c.b16 %v3276, %v3269
    %v3550 = vpack.c.b16 %v3277, %v3270
    %v3551 = vpack.c.b16 %v3285, %v3278
    %v3552 = vpack.c.b16 %v3286, %v3279
    %v3553 = vpack.c.b16 %v3287, %v3280
    %v3554 = vpack.c.b16 %v3288, %v3281
    %v3555 = vpack.c.b16 %v3289, %v3282
    %v3556 = vpack.c.b16 %v3290, %v3283
    %v3557 = vpack.c.b16 %v3291, %v3284
    %v3558 = vpack.c.b16 %v3299, %v3292
    %v3559 = vpack.c.b16 %v3300, %v3293
    %v3560 = vpack.c.b16 %v3301, %v3294
    %v3561 = vpack.c.b16 %v3302, %v3295
    %v3562 = vpack.c.b16 %v3303, %v3296
    %v3563 = vpack.c.b16 %v3304, %v3297
    %v3564 = vpack.c.b16 %v3305, %v3298
    %v3565 = vpack.c.b16 %v3313, %v3306
    %v3566 = vpack.c.b16 %v3314, %v3307
    %v3567 = vpack.c.b16 %v3315, %v3308
    %v3568 = vpack.c.b16 %v3316, %v3309
    %v3569 = vpack.c.b16 %v3317, %v3310
    %v3570 = vpack.c.b16 %v3318, %v3311
    %v3571 = vpack.c.b16 %v3319, %v3312
    %v3572 = vpack.c.b16 %v3327, %v3320
    %v3573 = vpack.c.b16 %v3328, %v3321
    %v3574 = vpack.c.b16 %v3329, %v3322
    %v3575 = vpack.c.b16 %v3330, %v3323
    %v3576 = vpack.c.b16 %v3331, %v3324
    %v3577 = vpack.c.b16 %v3332, %v3325
    %v3578 = vpack.c.b16 %v3333, %v3326
    %v3579 = vpack.c.b16 %v3341, %v3334
    %v3580 = vpack.c.b16 %v3342, %v3335
    %v3581 = vpack.c.b16 %v3343, %v3336
    %v3582 = vpack.c.b16 %v3344, %v3337
    %v3583 = vpack.c.b16 %v3345, %v3338
    %v3584 = vpack.c.b16 %v3346, %v3339
    %v3585 = vpack.c.b16 %v3347, %v3340
    %v3586 = vpack.c.b16 %v3355, %v3348
    %v3587 = vpack.c.b16 %v3356, %v3349
    %v3588 = vpack.c.b16 %v3357, %v3350
    %v3589 = vpack.c.b16 %v3358, %v3351
    %v3590 = vpack.c.b16 %v3359, %v3352
    %v3591 = vpack.c.b16 %v3360, %v3353
    %v3592 = vpack.c.b16 %v3361, %v3354
    %v3593 = vpack.c.b16 %v3369, %v3362
    %v3594 = vpack.c.b16 %v3370, %v3363
    %v3595 = vpack.c.b16 %v3371, %v3364
    %v3596 = vpack.c.b16 %v3372, %v3365
    %v3597 = vpack.c.b16 %v3373, %v3366
    %v3598 = vpack.c.b16 %v3374, %v3367
    %v3599 = vpack.c.b16 %v3375, %v3368
    %3824 = vmatprep.subr.bf16.mxu0 %v3426
    %3825 = vmatpush1.bf16.msra.mxu0 %v3425
    %3826 = vmatprep.subr.bf16.mxu0 %v3419
    %3827 = vmatpush1.bf16.msra.mxu0 %v3418
    %3828 = vmatprep.subr.bf16.mxu0 %v3412
    %3829 = vmatpush1.bf16.msra.mxu0 %v3411
    %3830 = vmatprep.subr.bf16.mxu0 %v3405
    %3831 = vmatpush1.bf16.msra.mxu0 %v3404
    %3832 = vmatprep.subr.bf16.mxu0 %v3398
    %3833 = vmatpush1.bf16.msra.mxu0 %v3397
    %3834 = vmatprep.subr.bf16.mxu0 %v3391
    %3835 = vmatpush1.bf16.msra.mxu0 %v3390
    %3836 = vmatprep.subr.bf16.mxu0 %v3384
    %3837 = vmatpush1.bf16.msra.mxu0 %v3383
    %3838 = vmatprep.subr.bf16.mxu0 %v3377
    %3839 = vmatpush1.bf16.msra.mxu0 %v3376
    %3840 = vmatprep.subr.bf16.mxu0 %v3482
    %3841 = vmatpush2.bf16.msra.mxu0 %v3481
    %3842 = vmatprep.subr.bf16.mxu0 %v3475
    %3843 = vmatpush2.bf16.msra.mxu0 %v3474
    %3844 = vmatprep.subr.bf16.mxu0 %v3468
    %3845 = vmatpush2.bf16.msra.mxu0 %v3467
    %3846 = vmatprep.subr.bf16.mxu0 %v3461
    %3847 = vmatpush2.bf16.msra.mxu0 %v3460
    %3848 = vmatprep.subr.bf16.mxu0 %v3454
    %3849 = vmatpush2.bf16.msra.mxu0 %v3453
    %3850 = vmatprep.subr.bf16.mxu0 %v3447
    %3851 = vmatpush2.bf16.msra.mxu0 %v3446
    %3852 = vmatprep.subr.bf16.mxu0 %v3440
    %3853 = vmatpush2.bf16.msra.mxu0 %v3439
    %3854 = vmatprep.subr.bf16.mxu0 %v3433
    %3855 = vmatpush2.bf16.msra.mxu0 %v3432
    %3856 = vmatprep.mubr.bf16.mxu0 %v2376
    %3857 = vmatmul.mubr.bf16.gmra.mxu0 %v2375
    %v3858 = vpop.f32.mrf.mxu0
    %v3859 = vadd.f32 %v2640, %v3858
    %v3860 = vpop.f32.mrf.mxu0
    %v3861 = vadd.f32 %v2644, %v3860
    %v3862 = vpop.f32.mrf.mxu0
    %v3863 = vpop.f32.mrf.mxu0
    %3864 = vdwg.mxu0
    %3865 = vmatprep.subr.bf16.mxu0 %v3538
    %3866 = vmatpush1.bf16.msra.mxu0 %v3537
    %3867 = vmatprep.subr.bf16.mxu0 %v3531
    %3868 = vmatpush1.bf16.msra.mxu0 %v3530
    %3869 = vmatprep.subr.bf16.mxu0 %v3524
    %3870 = vmatpush1.bf16.msra.mxu0 %v3523
    %3871 = vmatprep.subr.bf16.mxu0 %v3517
    %3872 = vmatpush1.bf16.msra.mxu0 %v3516
    %3873 = vmatprep.subr.bf16.mxu0 %v3510
    %3874 = vmatpush1.bf16.msra.mxu0 %v3509
    %3875 = vmatprep.subr.bf16.mxu0 %v3503
    %3876 = vmatpush1.bf16.msra.mxu0 %v3502
    %3877 = vmatprep.subr.bf16.mxu0 %v3496
    %3878 = vmatpush1.bf16.msra.mxu0 %v3495
    %3879 = vmatprep.subr.bf16.mxu0 %v3489
    %3880 = vmatpush1.bf16.msra.mxu0 %v3488
    %3881 = vmatprep.subr.bf16.mxu0 %v3594
    %3882 = vmatpush2.bf16.msra.mxu0 %v3593
    %3883 = vmatprep.subr.bf16.mxu0 %v3587
    %3884 = vmatpush2.bf16.msra.mxu0 %v3586
    %3885 = vmatprep.subr.bf16.mxu0 %v3580
    %3886 = vmatpush2.bf16.msra.mxu0 %v3579
    %3887 = vmatprep.subr.bf16.mxu0 %v3573
    %3888 = vmatpush2.bf16.msra.mxu0 %v3572
    %3889 = vmatprep.subr.bf16.mxu0 %v3566
    %3890 = vmatpush2.bf16.msra.mxu0 %v3565
    %3891 = vmatprep.subr.bf16.mxu0 %v3559
    %3892 = vmatpush2.bf16.msra.mxu0 %v3558
    %3893 = vmatprep.subr.bf16.mxu0 %v3552
    %3894 = vmatpush2.bf16.msra.mxu0 %v3551
    %3895 = vmatprep.subr.bf16.mxu0 %v3545
    %3896 = vmatpush2.bf16.msra.mxu0 %v3544
    %3897 = vmatprep.mubr.bf16.mxu0 %v2378
    %3898 = vmatmul.mubr.bf16.gmra.mxu0 %v2377
    %v3899 = vpop.f32.mrf.mxu0
    %v3900 = vadd.f32 %v3859, %v3899
    %v3901 = vpop.f32.mrf.mxu0
    %v3902 = vadd.f32 %v3861, %v3901
    %v3903 = vpop.f32.mrf.mxu0
    %v3904 = vpop.f32.mrf.mxu0
    %3905 = vdwg.mxu0
    %3906 = vmatprep.subr.bf16.mxu0 %v3428
    %3907 = vmatpush1.bf16.msra.mxu0 %v3427
    %3908 = vmatprep.subr.bf16.mxu0 %v3421
    %3909 = vmatpush1.bf16.msra.mxu0 %v3420
    %3910 = vmatprep.subr.bf16.mxu0 %v3414
    %3911 = vmatpush1.bf16.msra.mxu0 %v3413
    %3912 = vmatprep.subr.bf16.mxu0 %v3407
    %3913 = vmatpush1.bf16.msra.mxu0 %v3406
    %3914 = vmatprep.subr.bf16.mxu0 %v3400
    %3915 = vmatpush1.bf16.msra.mxu0 %v3399
    %3916 = vmatprep.subr.bf16.mxu0 %v3393
    %3917 = vmatpush1.bf16.msra.mxu0 %v3392
    %3918 = vmatprep.subr.bf16.mxu0 %v3386
    %3919 = vmatpush1.bf16.msra.mxu0 %v3385
    %3920 = vmatprep.subr.bf16.mxu0 %v3379
    %3921 = vmatpush1.bf16.msra.mxu0 %v3378
    %3922 = vmatprep.subr.bf16.mxu0 %v3484
    %3923 = vmatpush2.bf16.msra.mxu0 %v3483
    %3924 = vmatprep.subr.bf16.mxu0 %v3477
    %3925 = vmatpush2.bf16.msra.mxu0 %v3476
    %3926 = vmatprep.subr.bf16.mxu0 %v3470
    %3927 = vmatpush2.bf16.msra.mxu0 %v3469
    %3928 = vmatprep.subr.bf16.mxu0 %v3463
    %3929 = vmatpush2.bf16.msra.mxu0 %v3462
    %3930 = vmatprep.subr.bf16.mxu0 %v3456
    %3931 = vmatpush2.bf16.msra.mxu0 %v3455
    %3932 = vmatprep.subr.bf16.mxu0 %v3449
    %3933 = vmatpush2.bf16.msra.mxu0 %v3448
    %3934 = vmatprep.subr.bf16.mxu0 %v3442
    %3935 = vmatpush2.bf16.msra.mxu0 %v3441
    %3936 = vmatprep.subr.bf16.mxu0 %v3435
    %3937 = vmatpush2.bf16.msra.mxu0 %v3434
    %3938 = vmatprep.mubr.bf16.mxu0 %v2376
    %3939 = vmatmul.mubr.bf16.gmra.mxu0 %v2375
    %v3940 = vpop.f32.mrf.mxu0
    %v3941 = vadd.f32 %v2648, %v3940
    %v3942 = vpop.f32.mrf.mxu0
    %v3943 = vadd.f32 %v2652, %v3942
    %v3944 = vpop.f32.mrf.mxu0
    %v3945 = vpop.f32.mrf.mxu0
    %3946 = vdwg.mxu0
    %3947 = vmatprep.subr.bf16.mxu0 %v3540
    %3948 = vmatpush1.bf16.msra.mxu0 %v3539
    %3949 = vmatprep.subr.bf16.mxu0 %v3533
    %3950 = vmatpush1.bf16.msra.mxu0 %v3532
    %3951 = vmatprep.subr.bf16.mxu0 %v3526
    %3952 = vmatpush1.bf16.msra.mxu0 %v3525
    %3953 = vmatprep.subr.bf16.mxu0 %v3519
    %3954 = vmatpush1.bf16.msra.mxu0 %v3518
    %3955 = vmatprep.subr.bf16.mxu0 %v3512
    %3956 = vmatpush1.bf16.msra.mxu0 %v3511
    %3957 = vmatprep.subr.bf16.mxu0 %v3505
    %3958 = vmatpush1.bf16.msra.mxu0 %v3504
    %3959 = vmatprep.subr.bf16.mxu0 %v3498
    %3960 = vmatpush1.bf16.msra.mxu0 %v3497
    %3961 = vmatprep.subr.bf16.mxu0 %v3491
    %3962 = vmatpush1.bf16.msra.mxu0 %v3490
    %3963 = vmatprep.subr.bf16.mxu0 %v3596
    %3964 = vmatpush2.bf16.msra.mxu0 %v3595
    %3965 = vmatprep.subr.bf16.mxu0 %v3589
    %3966 = vmatpush2.bf16.msra.mxu0 %v3588
    %3967 = vmatprep.subr.bf16.mxu0 %v3582
    %3968 = vmatpush2.bf16.msra.mxu0 %v3581
    %3969 = vmatprep.subr.bf16.mxu0 %v3575
    %3970 = vmatpush2.bf16.msra.mxu0 %v3574
    %3971 = vmatprep.subr.bf16.mxu0 %v3568
    %3972 = vmatpush2.bf16.msra.mxu0 %v3567
    %3973 = vmatprep.subr.bf16.mxu0 %v3561
    %3974 = vmatpush2.bf16.msra.mxu0 %v3560
    %3975 = vmatprep.subr.bf16.mxu0 %v3554
    %3976 = vmatpush2.bf16.msra.mxu0 %v3553
    %3977 = vmatprep.subr.bf16.mxu0 %v3547
    %3978 = vmatpush2.bf16.msra.mxu0 %v3546
    %3979 = vmatprep.mubr.bf16.mxu0 %v2378
    %3980 = vmatmul.mubr.bf16.gmra.mxu0 %v2377
    %v3981 = vpop.f32.mrf.mxu0
    %v3982 = vadd.f32 %v3941, %v3981
    %v3983 = vpop.f32.mrf.mxu0
    %v3984 = vadd.f32 %v3943, %v3983
    %v3985 = vpop.f32.mrf.mxu0
    %v3986 = vpop.f32.mrf.mxu0
    %3987 = vdwg.mxu0
    %3988 = vmatprep.subr.bf16.mxu0 %v3430
    %3989 = vmatpush1.bf16.msra.mxu0 %v3429
    %3990 = vmatprep.subr.bf16.mxu0 %v3423
    %3991 = vmatpush1.bf16.msra.mxu0 %v3422
    %3992 = vmatprep.subr.bf16.mxu0 %v3416
    %3993 = vmatpush1.bf16.msra.mxu0 %v3415
    %3994 = vmatprep.subr.bf16.mxu0 %v3409
    %3995 = vmatpush1.bf16.msra.mxu0 %v3408
    %3996 = vmatprep.subr.bf16.mxu0 %v3402
    %3997 = vmatpush1.bf16.msra.mxu0 %v3401
    %3998 = vmatprep.subr.bf16.mxu0 %v3395
    %3999 = vmatpush1.bf16.msra.mxu0 %v3394
    %4000 = vmatprep.subr.bf16.mxu0 %v3388
    %4001 = vmatpush1.bf16.msra.mxu0 %v3387
    %4002 = vmatprep.subr.bf16.mxu0 %v3381
    %4003 = vmatpush1.bf16.msra.mxu0 %v3380
    %4004 = vmatprep.subr.bf16.mxu0 %v3486
    %4005 = vmatpush2.bf16.msra.mxu0 %v3485
    %4006 = vmatprep.subr.bf16.mxu0 %v3479
    %4007 = vmatpush2.bf16.msra.mxu0 %v3478
    %4008 = vmatprep.subr.bf16.mxu0 %v3472
    %4009 = vmatpush2.bf16.msra.mxu0 %v3471
    %4010 = vmatprep.subr.bf16.mxu0 %v3465
    %4011 = vmatpush2.bf16.msra.mxu0 %v3464
    %4012 = vmatprep.subr.bf16.mxu0 %v3458
    %4013 = vmatpush2.bf16.msra.mxu0 %v3457
    %4014 = vmatprep.subr.bf16.mxu0 %v3451
    %4015 = vmatpush2.bf16.msra.mxu0 %v3450
    %4016 = vmatprep.subr.bf16.mxu0 %v3444
    %4017 = vmatpush2.bf16.msra.mxu0 %v3443
    %4018 = vmatprep.subr.bf16.mxu0 %v3437
    %4019 = vmatpush2.bf16.msra.mxu0 %v3436
    %4020 = vmatprep.mubr.bf16.mxu0 %v2376
    %4021 = vmatmul.mubr.bf16.gmra.mxu0 %v2375
    %v4022 = vpop.f32.mrf.mxu0
    %v4023 = vadd.f32 %v2656, %v4022
    %v4024 = vpop.f32.mrf.mxu0
    %v4025 = vadd.f32 %v2660, %v4024
    %v4026 = vpop.f32.mrf.mxu0
    %v4027 = vpop.f32.mrf.mxu0
    %4028 = vdwg.mxu0
    %4029 = vmatprep.subr.bf16.mxu0 %v3542
    %4030 = vmatpush1.bf16.msra.mxu0 %v3541
    %4031 = vmatprep.subr.bf16.mxu0 %v3535
    %4032 = vmatpush1.bf16.msra.mxu0 %v3534
    %4033 = vmatprep.subr.bf16.mxu0 %v3528
    %4034 = vmatpush1.bf16.msra.mxu0 %v3527
    %4035 = vmatprep.subr.bf16.mxu0 %v3521
    %4036 = vmatpush1.bf16.msra.mxu0 %v3520
    %4037 = vmatprep.subr.bf16.mxu0 %v3514
    %4038 = vmatpush1.bf16.msra.mxu0 %v3513
    %4039 = vmatprep.subr.bf16.mxu0 %v3507
    %4040 = vmatpush1.bf16.msra.mxu0 %v3506
    %4041 = vmatprep.subr.bf16.mxu0 %v3500
    %4042 = vmatpush1.bf16.msra.mxu0 %v3499
    %4043 = vmatprep.subr.bf16.mxu0 %v3493
    %4044 = vmatpush1.bf16.msra.mxu0 %v3492
    %4045 = vmatprep.subr.bf16.mxu0 %v3598
    %4046 = vmatpush2.bf16.msra.mxu0 %v3597
    %4047 = vmatprep.subr.bf16.mxu0 %v3591
    %4048 = vmatpush2.bf16.msra.mxu0 %v3590
    %4049 = vmatprep.subr.bf16.mxu0 %v3584
    %4050 = vmatpush2.bf16.msra.mxu0 %v3583
    %4051 = vmatprep.subr.bf16.mxu0 %v3577
    %4052 = vmatpush2.bf16.msra.mxu0 %v3576
    %4053 = vmatprep.subr.bf16.mxu0 %v3570
    %4054 = vmatpush2.bf16.msra.mxu0 %v3569
    %4055 = vmatprep.subr.bf16.mxu0 %v3563
    %4056 = vmatpush2.bf16.msra.mxu0 %v3562
    %4057 = vmatprep.subr.bf16.mxu0 %v3556
    %4058 = vmatpush2.bf16.msra.mxu0 %v3555
    %4059 = vmatprep.subr.bf16.mxu0 %v3549
    %4060 = vmatpush2.bf16.msra.mxu0 %v3548
    %4061 = vmatprep.mubr.bf16.mxu0 %v2378
    %4062 = vmatmul.mubr.bf16.gmra.mxu0 %v2377
    %v4063 = vpop.f32.mrf.mxu0
    %v4064 = vadd.f32 %v4023, %v4063
    %v4065 = vpop.f32.mrf.mxu0
    %v4066 = vadd.f32 %v4025, %v4065
    %v4067 = vpop.f32.mrf.mxu0
    %v4068 = vpop.f32.mrf.mxu0
    %4069 = vdwg.mxu0
    %4070 = vmatprep.subr.bf16.mxu0 0
    %4071 = vmatpush1.bf16.msra.mxu0 %v3431
    %4072 = vmatprep.subr.bf16.mxu0 0
    %4073 = vmatpush1.bf16.msra.mxu0 %v3424
    %4074 = vmatprep.subr.bf16.mxu0 0
    %4075 = vmatpush1.bf16.msra.mxu0 %v3417
    %4076 = vmatprep.subr.bf16.mxu0 0
    %4077 = vmatpush1.bf16.msra.mxu0 %v3410
    %4078 = vmatprep.subr.bf16.mxu0 0
    %4079 = vmatpush1.bf16.msra.mxu0 %v3403
    %4080 = vmatprep.subr.bf16.mxu0 0
    %4081 = vmatpush1.bf16.msra.mxu0 %v3396
    %4082 = vmatprep.subr.bf16.mxu0 0
    %4083 = vmatpush1.bf16.msra.mxu0 %v3389
    %4084 = vmatprep.subr.bf16.mxu0 0
    %4085 = vmatpush1.bf16.msra.mxu0 %v3382
    %4086 = vmatprep.subr.bf16.mxu0 0
    %4087 = vmatpush2.bf16.msra.mxu0 %v3487
    %4088 = vmatprep.subr.bf16.mxu0 0
    %4089 = vmatpush2.bf16.msra.mxu0 %v3480
    %4090 = vmatprep.subr.bf16.mxu0 0
    %4091 = vmatpush2.bf16.msra.mxu0 %v3473
    %4092 = vmatprep.subr.bf16.mxu0 0
    %4093 = vmatpush2.bf16.msra.mxu0 %v3466
    %4094 = vmatprep.subr.bf16.mxu0 0
    %4095 = vmatpush2.bf16.msra.mxu0 %v3459
    %4096 = vmatprep.subr.bf16.mxu0 0
    %4097 = vmatpush2.bf16.msra.mxu0 %v3452
    %4098 = vmatprep.subr.bf16.mxu0 0
    %4099 = vmatpush2.bf16.msra.mxu0 %v3445
    %4100 = vmatprep.subr.bf16.mxu0 0
    %4101 = vmatpush2.bf16.msra.mxu0 %v3438
    %4102 = vmatprep.mubr.bf16.mxu0 %v2376
    %4103 = vmatmul.mubr.bf16.gmra.mxu0 %v2375
    %v4104 = vpop.f32.mrf.mxu0
    %v4105 = vadd.f32 %v2664, %v4104
    %v4106 = vpop.f32.mrf.mxu0
    %v4107 = vpop.f32.mrf.mxu0
    %v4108 = vpop.f32.mrf.mxu0
    %4109 = vdwg.mxu0
    %4110 = vmatprep.subr.bf16.mxu0 0
    %4111 = vmatpush1.bf16.msra.mxu0 %v3543
    %4112 = vmatprep.subr.bf16.mxu0 0
    %4113 = vmatpush1.bf16.msra.mxu0 %v3536
    %4114 = vmatprep.subr.bf16.mxu0 0
    %4115 = vmatpush1.bf16.msra.mxu0 %v3529
    %4116 = vmatprep.subr.bf16.mxu0 0
    %4117 = vmatpush1.bf16.msra.mxu0 %v3522
    %4118 = vmatprep.subr.bf16.mxu0 0
    %4119 = vmatpush1.bf16.msra.mxu0 %v3515
    %4120 = vmatprep.subr.bf16.mxu0 0
    %4121 = vmatpush1.bf16.msra.mxu0 %v3508
    %4122 = vmatprep.subr.bf16.mxu0 0
    %4123 = vmatpush1.bf16.msra.mxu0 %v3501
    %4124 = vmatprep.subr.bf16.mxu0 0
    %4125 = vmatpush1.bf16.msra.mxu0 %v3494
    %4126 = vmatprep.subr.bf16.mxu0 0
    %4127 = vmatpush2.bf16.msra.mxu0 %v3599
    %4128 = vmatprep.subr.bf16.mxu0 0
    %4129 = vmatpush2.bf16.msra.mxu0 %v3592
    %4130 = vmatprep.subr.bf16.mxu0 0
    %4131 = vmatpush2.bf16.msra.mxu0 %v3585
    %4132 = vmatprep.subr.bf16.mxu0 0
    %4133 = vmatpush2.bf16.msra.mxu0 %v3578
    %4134 = vmatprep.subr.bf16.mxu0 0
    %4135 = vmatpush2.bf16.msra.mxu0 %v3571
    %4136 = vmatprep.subr.bf16.mxu0 0
    %4137 = vmatpush2.bf16.msra.mxu0 %v3564
    %4138 = vmatprep.subr.bf16.mxu0 0
    %4139 = vmatpush2.bf16.msra.mxu0 %v3557
    %4140 = vmatprep.subr.bf16.mxu0 0
    %4141 = vmatpush2.bf16.msra.mxu0 %v3550
    %4142 = vmatprep.mubr.bf16.mxu0 %v2378
    %4143 = vmatmul.mubr.bf16.gmra.mxu0 %v2377
    %v4144 = vpop.f32.mrf.mxu0
    %v4145 = vadd.f32 %v4105, %v4144
    %v4146 = vpop.f32.mrf.mxu0
    %v4147 = vpop.f32.mrf.mxu0
    %v4148 = vpop.f32.mrf.mxu0
    %4149 = vdwg.mxu0
    %v4150 = vtanh.pop %v3900
    %v4151 = vtanh.pop %v3902
    %v4152 = vtanh.pop %v3982
    %v4153 = vtanh.pop %v3984
    %v4154 = vtanh.pop %v4064
    %v4155 = vtanh.pop %v4066
    %v4156 = vtanh.pop %v4145
    %4157 = vst [vmem:[#allocation2] sm:$0xff] %v4150
    %4158 = vst [vmem:[#allocation2 + $0x8] sm:$0xff] %v4151
    %4159 = vst [vmem:[#allocation2 + $0x10] sm:$0xff] %v4152
    %4160 = vst [vmem:[#allocation2 + $0x18] sm:$0xff] %v4153
    %4161 = vst [vmem:[#allocation2 + $0x20] sm:$0xff] %v4154
    %4162 = vst [vmem:[#allocation2 + $0x28] sm:$0xff] %v4155
    %4163 = vst.msk [vmem:[#allocation2 + $0x30] sm:$0xff] %vm1251, %v4156
    // Predicated region
    $region42: #{generator_forward.1} parent=1 // pred_check
      _
    $region43: #{generator_forward.1} parent=1 // pred_check_branch
      %4165 = sbr.rel (0) target = $region45
    $region44: #{generator_forward.1} parent=1 // pred_region
      %s4167 = ssub.s32 896, 896
      %4168 = vsyncadd [#allocation3], %s4167
      %s4170 = sshll.u32 [#allocation2], 4
      %s4171 = int_to_ptr.vmem [resolvable:$true] %s4170
      %4173 = dma.vmem_to_hbm [thread:$0]  %s4171, 896, %s10, [#allocation3]
    $region45: #{generator_forward.1} parent=1 // pred_fallthru
      _
    // Predicated region
    $region46: #{generator_forward.1} parent=1 // pred_check
      _
    $region47: #{generator_forward.1} parent=1 // pred_check_branch
      %4175 = sbr.rel (0) target = $region49
    $region48: #{generator_forward.1} parent=1 // pred_region
      _
    $region49: #{generator_forward.1} parent=1 // pred_fallthru
      _
    // Predicated region
    $region50: #{generator_forward.1} parent=1 // pred_check
      _
    $region51: #{generator_forward.1} parent=1 // pred_check_branch
      %4177 = sbr.rel (0) target = $region53
    $region52: #{generator_forward.1} parent=1 // pred_region
      %4178 = dma.done [#allocation3], 896
    $region53: #{generator_forward.1} parent=1 // pred_fallthru
      _
    // Predicated region
    $region54: #{generator_forward.1} parent=1 // pred_check
      _
    $region55: #{generator_forward.1} parent=1 // pred_check_branch
      %4180 = sbr.rel (0) target = $region57
    $region56: #{generator_forward.1} parent=1 // pred_region
      _
    $region57: #{generator_forward.1} parent=1 // pred_fallthru
      _
    %4181 = vsyncpa [#allocation3], 1

</llo_original>
